<compile_context>
chip_gen: v7x
topology: tpu7x:2x2x1
jax: 0.10.0
libtpu: 0.0.40
codegen_flags: <defaults>
</compile_context>

<pallas_src>
import functools

import jax
import jax.numpy as jnp
from jax.experimental import pallas as pl
from jax.experimental.pallas import tpu as pltpu

LANE = 128


def _round_up(x, m):
    return ((x + m - 1) // m) * m


def _pad_channels(x, cp):
    c = x.shape[-1]
    if c == cp:
        return x
    return jnp.pad(x, ((0, 0),) * (x.ndim - 1) + ((0, cp - c),))


def _pick_row_tile(ho, wo, target_rows=512):
    """Largest divisor of Ho such that TH*Wo ~<= target matmul M rows."""
    t = max(1, min(ho, target_rows // max(wo, 1)))
    for th in range(t, 0, -1):
        if ho % th == 0:
            return th
    return 1


def _split_phases(xp):
    """(N, Hp, Wp, C) -> (N, 4, ceil(Hp/2), ceil(Wp/2), C) even/odd phases.

    phase[p*2+q][t, u] == xp[2*t + p, 2*u + q]; short phases are zero padded
    (padded rows/cols are never read by the kernel)."""
    n, hp, wp, c = xp.shape
    hph = (hp + 1) // 2
    wph = (wp + 1) // 2
    phases = []
    for p in range(2):
        for q in range(2):
            ph = xp[:, p::2, q::2, :]
            ph = jnp.pad(ph, ((0, 0), (0, hph - ph.shape[1]),
                              (0, wph - ph.shape[2]), (0, 0)))
            phases.append(ph)
    return jnp.stack(phases, axis=1)


def _conv3x3_bn_kernel(*refs, TH, Wo, stride, relu, pad_out, res_mode):
    """One (batch, row-tile) step of 3x3 conv (+BN) (+residual/shortcut) (+ReLU).

    refs (in order):
      x_ref : stride==1 -> (1, Hp, Wp, Cin) spatially pre-padded input
              stride==2 -> (1, 4, Hph, Wph, Cin) even/odd phases of it
      w_ref : (9, Cin, Cout)  conv weight with BN scale folded, bf16
      b_ref : (1, Cout)       folded BN bias, f32
      res_mode == "identity": res_ref (1, TH, Wo, Cout)
      res_mode == "conv"    : xs_ref (1, TH, Wo, Cin_s), wsc_ref (Cin_s, Cout),
                              bsc_ref (1, Cout)   (fused 1x1 shortcut)
      o_ref : (1, TH, Wo, Cout), or (1, Ho+2, Wo+2, Cout) when pad_out.
    """
    if res_mode == "identity":
        x_ref, w_ref, b_ref, res_ref, o_ref = refs
    elif res_mode == "conv":
        x_ref, w_ref, b_ref, xs_ref, wsc_ref, bsc_ref, o_ref = refs
    else:
        x_ref, w_ref, b_ref, o_ref = refs

    cin = w_ref.shape[1]
    cout = w_ref.shape[2]
    r = pl.program_id(1)
    oh0 = r * TH                       # first output row of this tile

    # 3x3 conv as 9 per-tap MXU matmuls accumulated in f32 — no im2col patch
    # materialisation, no strided reads.
    # TODO(synk): on v7x accumulate the taps in the MXU result buffer, and
    # contract the 3-D tap with lax.dot_general to skip the flatten when
    # Wo % 8 != 0 (test shapes have Wo % 8 == 0, so the reshape is free here).
    acc = None
    for i in range(3):
        for j in range(3):
            if stride == 1:
                tap = x_ref[0, pl.ds(oh0 + i, TH), pl.ds(j, Wo), :]
            else:                       # stride 2 via pre-split phases
                ph = (i % 2) * 2 + (j % 2)
                tap = x_ref[0, ph, pl.ds(oh0 + i // 2, TH),
                            pl.ds(j // 2, Wo), :]
            d = jnp.dot(tap.reshape(TH * Wo, cin), w_ref[i * 3 + j],
                        preferred_element_type=jnp.float32)
            acc = d if acc is None else acc + d

    out = acc + b_ref[...]                                   # folded BN bias

    if res_mode == "identity":
        out = out + res_ref[0].reshape(TH * Wo, cout).astype(jnp.float32)
    elif res_mode == "conv":
        xs2 = xs_ref[0].reshape(TH * Wo, wsc_ref.shape[0])
        out = out + (jnp.dot(xs2, wsc_ref[...],
                             preferred_element_type=jnp.float32)
                     + bsc_ref[...])
    if relu:
        out = jnp.maximum(out, 0.0)
    out = out.reshape(TH, Wo, cout).astype(o_ref.dtype)

    if pad_out:
        # Output buffer is the whole spatially padded image (resident across
        # the row-tile axis).  Zero only the top/bottom border rows once; the
        # left/right zero columns are written as part of the full-width,
        # sublane-aligned interior store (interior written exactly once).
        hp2 = o_ref.shape[1]
        wp2 = o_ref.shape[2]

        @pl.when(r == 0)
        def _():
            zrow = jnp.zeros((wp2, cout), o_ref.dtype)
            o_ref[0, 0, :, :] = zrow
            o_ref[0, hp2 - 1, :, :] = zrow

        zcol = jnp.zeros((TH, 1, cout), o_ref.dtype)
        o_ref[0, pl.ds(oh0 + 1, TH), :, :] = jnp.concatenate(
            [zcol, out, zcol], axis=1)
    else:
        o_ref[0] = out


def conv3x3_bn(x_in, w, b, *, stride, out_hw, relu, pad_out,
               residual=None, shortcut=None, out_dtype=jnp.bfloat16,
               row_tile=None):
    """3x3 conv (+folded BN) (+residual or fused 1x1 shortcut) (+ReLU).

    x_in: stride==1 -> (N, Ho+2, Wo+2, Cin) spatially pre-padded bf16
          stride==2 -> (N, 4, Hph, Wph, Cin) phases (see _split_phases).
    w: (9, Cin, Cout) bf16.  b: (1, Cout) f32.
    residual: (N, Ho, Wo, Cout) identity shortcut added before ReLU.
    shortcut: (xs, wsc, bsc), xs (N, Ho, Wo, Cin_s): fused 1x1-conv+BN shortcut.
    Returns (N, Ho, Wo, Cout); if pad_out, (N, Ho+2, Wo+2, Cout) zero-bordered.
    """
    assert residual is None or shortcut is None
    ho, wo = out_hw
    TH = row_tile if row_tile is not None else _pick_row_tile(ho, wo)
    assert ho % TH == 0
    n_rt = ho // TH
    N = x_in.shape[0]
    _, cin, cout = w.shape

    res_mode = ("identity" if residual is not None else
                "conv" if shortcut is not None else "none")
    kernel = functools.partial(
        _conv3x3_bn_kernel, TH=TH, Wo=wo, stride=stride, relu=relu,
        pad_out=pad_out, res_mode=res_mode)

    n_trail = x_in.ndim - 1
    in_specs = [
        pl.BlockSpec((1,) + x_in.shape[1:],
                     lambda n, r, _t=n_trail: (n,) + (0,) * _t),
        pl.BlockSpec(w.shape, lambda n, r: (0, 0, 0)),
        pl.BlockSpec(b.shape, lambda n, r: (0, 0)),
    ]
    args = [x_in, w, b]
    if residual is not None:
        in_specs.append(pl.BlockSpec((1, TH, wo, cout),
                                     lambda n, r: (n, r, 0, 0)))
        args.append(residual)
    elif shortcut is not None:
        xs, wsc, bsc = shortcut
        in_specs += [
            pl.BlockSpec((1, TH, wo, xs.shape[-1]),
                         lambda n, r: (n, r, 0, 0)),
            pl.BlockSpec(wsc.shape, lambda n, r: (0, 0)),
            pl.BlockSpec(bsc.shape, lambda n, r: (0, 0)),
        ]
        args += [xs, wsc, bsc]

    if pad_out:
        out_shape = jax.ShapeDtypeStruct((N, ho + 2, wo + 2, cout), out_dtype)
        out_spec = pl.BlockSpec((1, ho + 2, wo + 2, cout),
                                lambda n, r: (n, 0, 0, 0))
        dims = ("parallel", "arbitrary")    # output resident across row tiles
    else:
        out_shape = jax.ShapeDtypeStruct((N, ho, wo, cout), out_dtype)
        out_spec = pl.BlockSpec((1, TH, wo, cout), lambda n, r: (n, r, 0, 0))
        dims = ("parallel", "parallel")     # disjoint blocks -> both TCs

    return pl.pallas_call(
        kernel,
        out_shape=out_shape,
        grid=(N, n_rt),
        in_specs=in_specs,
        out_specs=out_spec,
        compiler_params=pltpu.CompilerParams(dimension_semantics=dims),
    )(*args)


def fold_conv_bn(w_pt, bn, cin_p, cout_p, eps=1e-5):
    """PyTorch (Cout,Cin,K,K) conv weight + eval-mode BN -> padded bf16
    (K*K, Cin_p, Cout_p) weight with BN scale folded, and f32 (1, Cout_p) bias."""
    gamma, beta, mean, var = bn
    scale = gamma * jax.lax.rsqrt(var + eps)
    bias = beta - mean * scale
    cout, cin, K, _ = w_pt.shape
    w = jnp.transpose(w_pt, (2, 3, 1, 0)) * scale[None, None, None, :]
    w = jnp.pad(w, ((0, 0), (0, 0), (0, cin_p - cin), (0, cout_p - cout)))
    w = w.reshape(K * K, cin_p, cout_p).astype(jnp.bfloat16)
    bias_p = jnp.pad(bias, (0, cout_p - cout)).astype(jnp.float32)
    return w, bias_p.reshape(1, cout_p)


def basic_block_forward(x, params, stride, eps=1e-5):
    """BasicBlock forward.  x: (N, H, W, Cin) NHWC float32."""
    assert stride in (1, 2)
    N, H, W, cin = x.shape
    planes = params["w1_pt"].shape[0]
    cin_p = _round_up(cin, LANE)
    cp = _round_up(planes, LANE)

    w1, b1 = fold_conv_bn(params["w1_pt"], params["bn1"], cin_p, cp, eps)
    w2, b2 = fold_conv_bn(params["w2_pt"], params["bn2"], cp, cp, eps)

    x_b = _pad_channels(x, cin_p).astype(jnp.bfloat16)
    xpad = jnp.pad(x_b, ((0, 0), (1, 1), (1, 1), (0, 0)))
    # TODO(synk): fold this spatial pad into conv1 (masked edge taps) to drop
    # one full-image HBM pass.

    ho = (H + 2 - 3) // stride + 1
    wo = (W + 2 - 3) // stride + 1

    # conv1 (3x3, stride, pad 1) + bn1 + relu; output written directly into a
    # zero-bordered padded buffer for conv2 (no jnp.pad between the convs).
    if stride == 1:
        out1p = conv3x3_bn(xpad, w1, b1, stride=1, out_hw=(ho, wo),
                           relu=True, pad_out=True)
    else:
        xph = _split_phases(xpad)       # striding handled in-kernel via phases
        out1p = conv3x3_bn(xph, w1, b1, stride=stride, out_hw=(ho, wo),
                           relu=True, pad_out=True)

    # conv2 (3x3, stride 1, pad 1) + bn2 + shortcut + relu, fully fused.
    if params["shortcut_pt"] is None:
        assert stride == 1 and cin_p == cp
        out = conv3x3_bn(out1p, w2, b2, stride=1, out_hw=(ho, wo), relu=True,
                         pad_out=False, residual=x_b, out_dtype=jnp.bfloat16)
    else:
        wsc_pt, bnsc = params["shortcut_pt"]
        wsc3, bsc = fold_conv_bn(wsc_pt, bnsc, cin_p, cp, eps)
        wsc = wsc3[0]                                   # (Cin_p, Cp)
        xs = x_b[:, ::stride, ::stride, :]              # 1x1 stride-s == 1x1 on subsample
        out = conv3x3_bn(out1p, w2, b2, stride=1, out_hw=(ho, wo), relu=True,
                         pad_out=False, shortcut=(xs, wsc, bsc),
                         out_dtype=jnp.bfloat16)

    return out[..., :planes].astype(jnp.float32)


# ----------------------------- test harness ---------------------------------

def _bn_params(key, c):
    kg, kb, km, kv = jax.random.split(key, 4)
    gamma = 1.0 + 0.2 * jax.random.normal(kg, (c,), jnp.float32)
    beta = 0.1 * jax.random.normal(kb, (c,), jnp.float32)
    mean = 0.1 * jax.random.normal(km, (c,), jnp.float32)
    var = 1.0 + 0.2 * jax.random.uniform(kv, (c,), jnp.float32)
    return gamma, beta, mean, var


def init_basic_block(key, in_planes, planes, stride):
    k1, k2, k3, kb1, kb2, kb3 = jax.random.split(key, 6)
    params = {
        "w1_pt": 0.1 * jax.random.normal(k1, (planes, in_planes, 3, 3), jnp.float32),
        "bn1": _bn_params(kb1, planes),
        "w2_pt": 0.1 * jax.random.normal(k2, (planes, planes, 3, 3), jnp.float32),
        "bn2": _bn_params(kb2, planes),
        "shortcut_pt": None,
    }
    if stride != 1 or in_planes != planes:
        params["shortcut_pt"] = (
            0.1 * jax.random.normal(k3, (planes, in_planes, 1, 1), jnp.float32),
            _bn_params(kb3, planes))
    return params


def ref_basic_block(x_nchw, params, stride, eps=1e-5):
    """Pure-JAX (f32) reference matching the PyTorch module (eval-mode BN)."""
    def conv(x, w, s, p):
        return jax.lax.conv_general_dilated(
            x, w, (s, s), [(p, p), (p, p)],
            dimension_numbers=("NCHW", "OIHW", "NCHW"),
            precision=jax.lax.Precision.HIGHEST)

    def bn(x, bp):
        gamma, beta, mean, var = bp
        inv = jax.lax.rsqrt(var + eps)
        return ((x - mean[None, :, None, None]) * (gamma * inv)[None, :, None, None]
                + beta[None, :, None, None])

    out = jax.nn.relu(bn(conv(x_nchw, params["w1_pt"], stride, 1), params["bn1"]))
    out = bn(conv(out, params["w2_pt"], 1, 1), params["bn2"])
    if params["shortcut_pt"] is None:
        sc = x_nchw
    else:
        wsc, bnsc = params["shortcut_pt"]
        sc = bn(conv(x_nchw, wsc, stride, 0), bnsc)
    return jax.nn.relu(out + sc)


if __name__ == "__main__":
    key = jax.random.PRNGKey(0)
    N, H, W = 2, 16, 16

    # (a) stride=2, channel change -> phase-split conv1 + fused 1x1 shortcut
    # (b) stride=1, same channels  -> identity shortcut path
    for (in_planes, planes, stride) in [(4, 8, 2), (8, 8, 1)]:
        kx, kp, key = jax.random.split(key, 3)
        x_nchw = jax.random.normal(kx, (N, in_planes, H, W), jnp.float32)
        params = init_basic_block(kp, in_planes, planes, stride)

        x_nhwc = jnp.transpose(x_nchw, (0, 2, 3, 1))
        fwd = jax.jit(functools.partial(basic_block_forward, stride=stride))
        out = jax.block_until_ready(fwd(x_nhwc, params))

        Ho = (H - 1) // stride + 1
        assert out.shape == (N, Ho, Ho, planes), out.shape
        assert bool(jnp.all(jnp.isfinite(out)))
        assert bool(jnp.all(out >= 0.0))          # final ReLU

        ref = jnp.transpose(ref_basic_block(x_nchw, params, stride),
                            (0, 2, 3, 1))
        err = float(jnp.max(jnp.abs(out - ref)))
        assert err < 0.1, f"max abs err {err} (bf16 tolerance exceeded)"

    print("KERNEL_OK")
</pallas_src>

<mosaic_0001>
module attributes {stable_mosaic.version = 11 : i64} {
  func.func @_conv3x3_bn_kernel(%arg0: i32, %arg1: i32, %arg2: memref<1x4x9x9x128xbf16, #tpu.memory_space<vmem>>, %arg3: memref<9x128x128xbf16, #tpu.memory_space<vmem>>, %arg4: memref<1x128xf32, #tpu.memory_space<vmem>>, %arg5: memref<1x10x10x128xbf16, #tpu.memory_space<vmem>>) attributes {dimension_semantics = [#tpu.dimension_semantics<parallel>, #tpu.dimension_semantics<arbitrary>], iteration_bounds = array<i64: 2, 1>, scalar_prefetch = 0 : i64, scratch_operands = 0 : i64, tpu.core_type = #tpu.core_type<tc>, window_params = [{transform_indices = @transform_0, window_bounds = array<i64: 1, 4, 9, 9, 128>}, {pipeline_mode = #tpu.pipeline_mode<synchronous>, transform_indices = @transform_1, window_bounds = array<i64: 9, 128, 128>}, {pipeline_mode = #tpu.pipeline_mode<synchronous>, transform_indices = @transform_2, window_bounds = array<i64: 1, 128>}, {transform_indices = @transform_3, window_bounds = array<i64: 1, 10, 10, 128>}]} {
    %c8_i32 = arith.constant 8 : i32
    %0 = arith.muli %arg1, %c8_i32 : i32
    %c0_i32 = arith.constant 0 : i32
    %1 = arith.addi %0, %c0_i32 : i32
    %c0 = arith.constant 0 : index
    %c0_0 = arith.constant 0 : index
    %2 = arith.index_cast %1 : i32 to index
    %c0_1 = arith.constant 0 : index
    %c0_2 = arith.constant 0 : index
    %3 = vector.load %arg2[%c0, %c0_0, %2, %c0_1, %c0_2] : memref<1x4x9x9x128xbf16, #tpu.memory_space<vmem>>, vector<1x1x8x8x128xbf16>
    %4 = vector.shape_cast %3 : vector<1x1x8x8x128xbf16> to vector<8x8x128xbf16>
    %5 = vector.shape_cast %4 : vector<8x8x128xbf16> to vector<64x128xbf16>
    %c0_3 = arith.constant 0 : index
    %c0_4 = arith.constant 0 : index
    %c0_5 = arith.constant 0 : index
    %6 = vector.load %arg3[%c0_3, %c0_4, %c0_5] : memref<9x128x128xbf16, #tpu.memory_space<vmem>>, vector<1x128x128xbf16>
    %7 = vector.shape_cast %6 : vector<1x128x128xbf16> to vector<128x128xbf16>
    %cst = arith.constant dense<0.000000e+00> : vector<64x128xf32>
    %8 = tpu.matmul %5, %7, %cst {dimension_numbers = #tpu.dot_dimension_numbers<[1], [0], [0], [1], [0, 0, 1, 1], [], []>} : vector<64x128xbf16>, vector<128x128xbf16>, vector<64x128xf32> -> vector<64x128xf32>
    %c0_i32_6 = arith.constant 0 : i32
    %9 = arith.addi %0, %c0_i32_6 : i32
    %c0_7 = arith.constant 0 : index
    %c1 = arith.constant 1 : index
    %10 = arith.index_cast %9 : i32 to index
    %c0_8 = arith.constant 0 : index
    %c0_9 = arith.constant 0 : index
    %11 = vector.load %arg2[%c0_7, %c1, %10, %c0_8, %c0_9] : memref<1x4x9x9x128xbf16, #tpu.memory_space<vmem>>, vector<1x1x8x8x128xbf16>
    %12 = vector.shape_cast %11 : vector<1x1x8x8x128xbf16> to vector<8x8x128xbf16>
    %13 = vector.shape_cast %12 : vector<8x8x128xbf16> to vector<64x128xbf16>
    %c1_10 = arith.constant 1 : index
    %c0_11 = arith.constant 0 : index
    %c0_12 = arith.constant 0 : index
    %14 = vector.load %arg3[%c1_10, %c0_11, %c0_12] : memref<9x128x128xbf16, #tpu.memory_space<vmem>>, vector<1x128x128xbf16>
    %15 = vector.shape_cast %14 : vector<1x128x128xbf16> to vector<128x128xbf16>
    %cst_13 = arith.constant dense<0.000000e+00> : vector<64x128xf32>
    %16 = tpu.matmul %13, %15, %cst_13 {dimension_numbers = #tpu.dot_dimension_numbers<[1], [0], [0], [1], [0, 0, 1, 1], [], []>} : vector<64x128xbf16>, vector<128x128xbf16>, vector<64x128xf32> -> vector<64x128xf32>
    %17 = arith.addf %8, %16 : vector<64x128xf32>
    %c0_i32_14 = arith.constant 0 : i32
    %18 = arith.addi %0, %c0_i32_14 : i32
    %c0_15 = arith.constant 0 : index
    %c0_16 = arith.constant 0 : index
    %19 = arith.index_cast %18 : i32 to index
    %c1_17 = arith.constant 1 : index
    %c0_18 = arith.constant 0 : index
    %20 = vector.load %arg2[%c0_15, %c0_16, %19, %c1_17, %c0_18] : memref<1x4x9x9x128xbf16, #tpu.memory_space<vmem>>, vector<1x1x8x8x128xbf16>
    %21 = vector.shape_cast %20 : vector<1x1x8x8x128xbf16> to vector<8x8x128xbf16>
    %22 = vector.shape_cast %21 : vector<8x8x128xbf16> to vector<64x128xbf16>
    %c2 = arith.constant 2 : index
    %c0_19 = arith.constant 0 : index
    %c0_20 = arith.constant 0 : index
    %23 = vector.load %arg3[%c2, %c0_19, %c0_20] : memref<9x128x128xbf16, #tpu.memory_space<vmem>>, vector<1x128x128xbf16>
    %24 = vector.shape_cast %23 : vector<1x128x128xbf16> to vector<128x128xbf16>
    %cst_21 = arith.constant dense<0.000000e+00> : vector<64x128xf32>
    %25 = tpu.matmul %22, %24, %cst_21 {dimension_numbers = #tpu.dot_dimension_numbers<[1], [0], [0], [1], [0, 0, 1, 1], [], []>} : vector<64x128xbf16>, vector<128x128xbf16>, vector<64x128xf32> -> vector<64x128xf32>
    %26 = arith.addf %17, %25 : vector<64x128xf32>
    %c0_i32_22 = arith.constant 0 : i32
    %27 = arith.addi %0, %c0_i32_22 : i32
    %c0_23 = arith.constant 0 : index
    %c2_24 = arith.constant 2 : index
    %28 = arith.index_cast %27 : i32 to index
    %c0_25 = arith.constant 0 : index
    %c0_26 = arith.constant 0 : index
    %29 = vector.load %arg2[%c0_23, %c2_24, %28, %c0_25, %c0_26] : memref<1x4x9x9x128xbf16, #tpu.memory_space<vmem>>, vector<1x1x8x8x128xbf16>
    %30 = vector.shape_cast %29 : vector<1x1x8x8x128xbf16> to vector<8x8x128xbf16>
    %31 = vector.shape_cast %30 : vector<8x8x128xbf16> to vector<64x128xbf16>
    %c3 = arith.constant 3 : index
    %c0_27 = arith.constant 0 : index
    %c0_28 = arith.constant 0 : index
    %32 = vector.load %arg3[%c3, %c0_27, %c0_28] : memref<9x128x128xbf16, #tpu.memory_space<vmem>>, vector<1x128x128xbf16>
    %33 = vector.shape_cast %32 : vector<1x128x128xbf16> to vector<128x128xbf16>
    %cst_29 = arith.constant dense<0.000000e+00> : vector<64x128xf32>
    %34 = tpu.matmul %31, %33, %cst_29 {dimension_numbers = #tpu.dot_dimension_numbers<[1], [0], [0], [1], [0, 0, 1, 1], [], []>} : vector<64x128xbf16>, vector<128x128xbf16>, vector<64x128xf32> -> vector<64x128xf32>
    %35 = arith.addf %26, %34 : vector<64x128xf32>
    %c0_i32_30 = arith.constant 0 : i32
    %36 = arith.addi %0, %c0_i32_30 : i32
    %c0_31 = arith.constant 0 : index
    %c3_32 = arith.constant 3 : index
    %37 = arith.index_cast %36 : i32 to index
    %c0_33 = arith.constant 0 : index
    %c0_34 = arith.constant 0 : index
    %38 = vector.load %arg2[%c0_31, %c3_32, %37, %c0_33, %c0_34] : memref<1x4x9x9x128xbf16, #tpu.memory_space<vmem>>, vector<1x1x8x8x128xbf16>
    %39 = vector.shape_cast %38 : vector<1x1x8x8x128xbf16> to vector<8x8x128xbf16>
    %40 = vector.shape_cast %39 : vector<8x8x128xbf16> to vector<64x128xbf16>
    %c4 = arith.constant 4 : index
    %c0_35 = arith.constant 0 : index
    %c0_36 = arith.constant 0 : index
    %41 = vector.load %arg3[%c4, %c0_35, %c0_36] : memref<9x128x128xbf16, #tpu.memory_space<vmem>>, vector<1x128x128xbf16>
    %42 = vector.shape_cast %41 : vector<1x128x128xbf16> to vector<128x128xbf16>
    %cst_37 = arith.constant dense<0.000000e+00> : vector<64x128xf32>
    %43 = tpu.matmul %40, %42, %cst_37 {dimension_numbers = #tpu.dot_dimension_numbers<[1], [0], [0], [1], [0, 0, 1, 1], [], []>} : vector<64x128xbf16>, vector<128x128xbf16>, vector<64x128xf32> -> vector<64x128xf32>
    %44 = arith.addf %35, %43 : vector<64x128xf32>
    %c0_i32_38 = arith.constant 0 : i32
    %45 = arith.addi %0, %c0_i32_38 : i32
    %c0_39 = arith.constant 0 : index
    %c2_40 = arith.constant 2 : index
    %46 = arith.index_cast %45 : i32 to index
    %c1_41 = arith.constant 1 : index
    %c0_42 = arith.constant 0 : index
    %47 = vector.load %arg2[%c0_39, %c2_40, %46, %c1_41, %c0_42] : memref<1x4x9x9x128xbf16, #tpu.memory_space<vmem>>, vector<1x1x8x8x128xbf16>
    %48 = vector.shape_cast %47 : vector<1x1x8x8x128xbf16> to vector<8x8x128xbf16>
    %49 = vector.shape_cast %48 : vector<8x8x128xbf16> to vector<64x128xbf16>
    %c5 = arith.constant 5 : index
    %c0_43 = arith.constant 0 : index
    %c0_44 = arith.constant 0 : index
    %50 = vector.load %arg3[%c5, %c0_43, %c0_44] : memref<9x128x128xbf16, #tpu.memory_space<vmem>>, vector<1x128x128xbf16>
    %51 = vector.shape_cast %50 : vector<1x128x128xbf16> to vector<128x128xbf16>
    %cst_45 = arith.constant dense<0.000000e+00> : vector<64x128xf32>
    %52 = tpu.matmul %49, %51, %cst_45 {dimension_numbers = #tpu.dot_dimension_numbers<[1], [0], [0], [1], [0, 0, 1, 1], [], []>} : vector<64x128xbf16>, vector<128x128xbf16>, vector<64x128xf32> -> vector<64x128xf32>
    %53 = arith.addf %44, %52 : vector<64x128xf32>
    %c1_i32 = arith.constant 1 : i32
    %54 = arith.addi %0, %c1_i32 : i32
    %c0_46 = arith.constant 0 : index
    %c0_47 = arith.constant 0 : index
    %55 = arith.index_cast %54 : i32 to index
    %c0_48 = arith.constant 0 : index
    %c0_49 = arith.constant 0 : index
    %56 = vector.load %arg2[%c0_46, %c0_47, %55, %c0_48, %c0_49] : memref<1x4x9x9x128xbf16, #tpu.memory_space<vmem>>, vector<1x1x8x8x128xbf16>
    %57 = vector.shape_cast %56 : vector<1x1x8x8x128xbf16> to vector<8x8x128xbf16>
    %58 = vector.shape_cast %57 : vector<8x8x128xbf16> to vector<64x128xbf16>
    %c6 = arith.constant 6 : index
    %c0_50 = arith.constant 0 : index
    %c0_51 = arith.constant 0 : index
    %59 = vector.load %arg3[%c6, %c0_50, %c0_51] : memref<9x128x128xbf16, #tpu.memory_space<vmem>>, vector<1x128x128xbf16>
    %60 = vector.shape_cast %59 : vector<1x128x128xbf16> to vector<128x128xbf16>
    %cst_52 = arith.constant dense<0.000000e+00> : vector<64x128xf32>
    %61 = tpu.matmul %58, %60, %cst_52 {dimension_numbers = #tpu.dot_dimension_numbers<[1], [0], [0], [1], [0, 0, 1, 1], [], []>} : vector<64x128xbf16>, vector<128x128xbf16>, vector<64x128xf32> -> vector<64x128xf32>
    %62 = arith.addf %53, %61 : vector<64x128xf32>
    %c1_i32_53 = arith.constant 1 : i32
    %63 = arith.addi %0, %c1_i32_53 : i32
    %c0_54 = arith.constant 0 : index
    %c1_55 = arith.constant 1 : index
    %64 = arith.index_cast %63 : i32 to index
    %c0_56 = arith.constant 0 : index
    %c0_57 = arith.constant 0 : index
    %65 = vector.load %arg2[%c0_54, %c1_55, %64, %c0_56, %c0_57] : memref<1x4x9x9x128xbf16, #tpu.memory_space<vmem>>, vector<1x1x8x8x128xbf16>
    %66 = vector.shape_cast %65 : vector<1x1x8x8x128xbf16> to vector<8x8x128xbf16>
    %67 = vector.shape_cast %66 : vector<8x8x128xbf16> to vector<64x128xbf16>
    %c7 = arith.constant 7 : index
    %c0_58 = arith.constant 0 : index
    %c0_59 = arith.constant 0 : index
    %68 = vector.load %arg3[%c7, %c0_58, %c0_59] : memref<9x128x128xbf16, #tpu.memory_space<vmem>>, vector<1x128x128xbf16>
    %69 = vector.shape_cast %68 : vector<1x128x128xbf16> to vector<128x128xbf16>
    %cst_60 = arith.constant dense<0.000000e+00> : vector<64x128xf32>
    %70 = tpu.matmul %67, %69, %cst_60 {dimension_numbers = #tpu.dot_dimension_numbers<[1], [0], [0], [1], [0, 0, 1, 1], [], []>} : vector<64x128xbf16>, vector<128x128xbf16>, vector<64x128xf32> -> vector<64x128xf32>
    %71 = arith.addf %62, %70 : vector<64x128xf32>
    %c1_i32_61 = arith.constant 1 : i32
    %72 = arith.addi %0, %c1_i32_61 : i32
    %c0_62 = arith.constant 0 : index
    %c0_63 = arith.constant 0 : index
    %73 = arith.index_cast %72 : i32 to index
    %c1_64 = arith.constant 1 : index
    %c0_65 = arith.constant 0 : index
    %74 = vector.load %arg2[%c0_62, %c0_63, %73, %c1_64, %c0_65] : memref<1x4x9x9x128xbf16, #tpu.memory_space<vmem>>, vector<1x1x8x8x128xbf16>
    %75 = vector.shape_cast %74 : vector<1x1x8x8x128xbf16> to vector<8x8x128xbf16>
    %76 = vector.shape_cast %75 : vector<8x8x128xbf16> to vector<64x128xbf16>
    %c8 = arith.constant 8 : index
    %c0_66 = arith.constant 0 : index
    %c0_67 = arith.constant 0 : index
    %77 = vector.load %arg3[%c8, %c0_66, %c0_67] : memref<9x128x128xbf16, #tpu.memory_space<vmem>>, vector<1x128x128xbf16>
    %78 = vector.shape_cast %77 : vector<1x128x128xbf16> to vector<128x128xbf16>
    %cst_68 = arith.constant dense<0.000000e+00> : vector<64x128xf32>
    %79 = tpu.matmul %76, %78, %cst_68 {dimension_numbers = #tpu.dot_dimension_numbers<[1], [0], [0], [1], [0, 0, 1, 1], [], []>} : vector<64x128xbf16>, vector<128x128xbf16>, vector<64x128xf32> -> vector<64x128xf32>
    %80 = arith.addf %71, %79 : vector<64x128xf32>
    %c0_69 = arith.constant 0 : index
    %c0_70 = arith.constant 0 : index
    %81 = vector.load %arg4[%c0_69, %c0_70] : memref<1x128xf32, #tpu.memory_space<vmem>>, vector<1x128xf32>
    %82 = vector.broadcast %81 : vector<1x128xf32> to vector<64x128xf32>
    %83 = arith.addf %80, %82 : vector<64x128xf32>
    %cst_71 = arith.constant 0.000000e+00 : f32
    %84 = vector.broadcast %cst_71 : f32 to vector<64x128xf32>
    %85 = arith.maximumf %83, %84 : vector<64x128xf32>
    %86 = vector.shape_cast %85 : vector<64x128xf32> to vector<8x8x128xf32>
    %87 = arith.truncf %86 : vector<8x8x128xf32> to vector<8x8x128xbf16>
    %c0_i32_72 = arith.constant 0 : i32
    %88 = arith.cmpi eq, %arg1, %c0_i32_72 : i32
    %89 = arith.extui %88 : i1 to i32
    %c0_i32_73 = arith.constant 0 : i32
    %90 = arith.cmpi ne, %89, %c0_i32_73 : i32
    scf.if %90 {
      %cst_79 = arith.constant 0.000000e+00 : bf16
      %98 = vector.broadcast %cst_79 : bf16 to vector<10x128xbf16>
      %c0_80 = arith.constant 0 : index
      %c0_81 = arith.constant 0 : index
      %c0_82 = arith.constant 0 : index
      %c0_83 = arith.constant 0 : index
      %99 = vector.load %arg5[%c0_80, %c0_81, %c0_82, %c0_83] : memref<1x10x10x128xbf16, #tpu.memory_space<vmem>>, vector<1x1x10x128xbf16>
      %100 = vector.shape_cast %99 : vector<1x1x10x128xbf16> to vector<10x128xbf16>
      %101 = vector.shape_cast %98 : vector<10x128xbf16> to vector<1x1x10x128xbf16>
      tpu.vector_store %arg5[%c0_80, %c0_81, %c0_82, %c0_83], %101 {strides = array<i32>} : memref<1x10x10x128xbf16, #tpu.memory_space<vmem>>, vector<1x1x10x128xbf16>,
      %c0_84 = arith.constant 0 : index
      %c9 = arith.constant 9 : index
      %c0_85 = arith.constant 0 : index
      %c0_86 = arith.constant 0 : index
      %102 = vector.load %arg5[%c0_84, %c9, %c0_85, %c0_86] : memref<1x10x10x128xbf16, #tpu.memory_space<vmem>>, vector<1x1x10x128xbf16>
      %103 = vector.shape_cast %102 : vector<1x1x10x128xbf16> to vector<10x128xbf16>
      %104 = vector.shape_cast %98 : vector<10x128xbf16> to vector<1x1x10x128xbf16>
      tpu.vector_store %arg5[%c0_84, %c9, %c0_85, %c0_86], %104 {strides = array<i32>} : memref<1x10x10x128xbf16, #tpu.memory_space<vmem>>, vector<1x1x10x128xbf16>,
    } else {
    }
    %cst_74 = arith.constant 0.000000e+00 : bf16
    %91 = vector.broadcast %cst_74 : bf16 to vector<8x1x128xbf16>
    %92 = tpu.concatenate %91, %87, %91 in 1 : vector<8x1x128xbf16>, vector<8x8x128xbf16>, vector<8x1x128xbf16> -> vector<8x10x128xbf16>
    %c1_i32_75 = arith.constant 1 : i32
    %93 = arith.addi %0, %c1_i32_75 : i32
    %c0_76 = arith.constant 0 : index
    %94 = arith.index_cast %93 : i32 to index
    %c0_77 = arith.constant 0 : index
    %c0_78 = arith.constant 0 : index
    %95 = vector.load %arg5[%c0_76, %94, %c0_77, %c0_78] : memref<1x10x10x128xbf16, #tpu.memory_space<vmem>>, vector<1x8x10x128xbf16>
    %96 = vector.shape_cast %95 : vector<1x8x10x128xbf16> to vector<8x10x128xbf16>
    %97 = vector.shape_cast %92 : vector<8x10x128xbf16> to vector<1x8x10x128xbf16>
    tpu.vector_store %arg5[%c0_76, %94, %c0_77, %c0_78], %97 {strides = array<i32>} : memref<1x10x10x128xbf16, #tpu.memory_space<vmem>>, vector<1x8x10x128xbf16>,
    return
  }
  func.func @transform_0(%arg0: i32, %arg1: i32) -> (i32, i32, i32, i32, i32) {
    %c0_i32 = arith.constant 0 : i32
    %c0_i32_0 = arith.constant 0 : i32
    %c0_i32_1 = arith.constant 0 : i32
    %c0_i32_2 = arith.constant 0 : i32
    %c0_i32_3 = arith.constant 0 : i32
    return %arg0, %c0_i32, %c0_i32_0, %c0_i32_1, %c0_i32_2 : i32, i32, i32, i32, i32
  }
  func.func @transform_1(%arg0: i32, %arg1: i32) -> (i32, i32, i32) {
    %c0_i32 = arith.constant 0 : i32
    %c0_i32_0 = arith.constant 0 : i32
    %c0_i32_1 = arith.constant 0 : i32
    %c0_i32_2 = arith.constant 0 : i32
    return %c0_i32, %c0_i32_0, %c0_i32_1 : i32, i32, i32
  }
  func.func @transform_2(%arg0: i32, %arg1: i32) -> (i32, i32) {
    %c0_i32 = arith.constant 0 : i32
    %c0_i32_0 = arith.constant 0 : i32
    %c0_i32_1 = arith.constant 0 : i32
    return %c0_i32, %c0_i32_0 : i32, i32
  }
  func.func @transform_3(%arg0: i32, %arg1: i32) -> (i32, i32, i32, i32) {
    %c0_i32 = arith.constant 0 : i32
    %c0_i32_0 = arith.constant 0 : i32
    %c0_i32_1 = arith.constant 0 : i32
    %c0_i32_2 = arith.constant 0 : i32
    return %arg0, %c0_i32, %c0_i32_0, %c0_i32_1 : i32, i32, i32, i32
  }
}

module attributes {stable_mosaic.version = 11 : i64} {
  func.func @_conv3x3_bn_kernel(%arg0: i32, %arg1: i32, %arg2: memref<1x10x10x128xbf16, #tpu.memory_space<vmem>>, %arg3: memref<9x128x128xbf16, #tpu.memory_space<vmem>>, %arg4: memref<1x128xf32, #tpu.memory_space<vmem>>, %arg5: memref<1x8x8x128xbf16, #tpu.memory_space<vmem>>, %arg6: memref<128x128xbf16, #tpu.memory_space<vmem>>, %arg7: memref<1x128xf32, #tpu.memory_space<vmem>>, %arg8: memref<1x8x8x128xbf16, #tpu.memory_space<vmem>>) attributes {dimension_semantics = [#tpu.dimension_semantics<parallel>, #tpu.dimension_semantics<parallel>], iteration_bounds = array<i64: 2, 1>, scalar_prefetch = 0 : i64, scratch_operands = 0 : i64, tpu.core_type = #tpu.core_type<tc>, window_params = [{transform_indices = @transform_0, window_bounds = array<i64: 1, 10, 10, 128>}, {pipeline_mode = #tpu.pipeline_mode<synchronous>, transform_indices = @transform_1, window_bounds = array<i64: 9, 128, 128>}, {pipeline_mode = #tpu.pipeline_mode<synchronous>, transform_indices = @transform_2, window_bounds = array<i64: 1, 128>}, {transform_indices = @transform_3, window_bounds = array<i64: 1, 8, 8, 128>}, {pipeline_mode = #tpu.pipeline_mode<synchronous>, transform_indices = @transform_4, window_bounds = array<i64: 128, 128>}, {pipeline_mode = #tpu.pipeline_mode<synchronous>, transform_indices = @transform_5, window_bounds = array<i64: 1, 128>}, {transform_indices = @transform_6, window_bounds = array<i64: 1, 8, 8, 128>}]} {
    %c8_i32 = arith.constant 8 : i32
    %0 = arith.muli %arg1, %c8_i32 : i32
    %c0_i32 = arith.constant 0 : i32
    %1 = arith.addi %0, %c0_i32 : i32
    %c0 = arith.constant 0 : index
    %2 = arith.index_cast %1 : i32 to index
    %c0_0 = arith.constant 0 : index
    %c0_1 = arith.constant 0 : index
    %3 = vector.load %arg2[%c0, %2, %c0_0, %c0_1] : memref<1x10x10x128xbf16, #tpu.memory_space<vmem>>, vector<1x8x8x128xbf16>
    %4 = vector.shape_cast %3 : vector<1x8x8x128xbf16> to vector<8x8x128xbf16>
    %5 = vector.shape_cast %4 : vector<8x8x128xbf16> to vector<64x128xbf16>
    %c0_2 = arith.constant 0 : index
    %c0_3 = arith.constant 0 : index
    %c0_4 = arith.constant 0 : index
    %6 = vector.load %arg3[%c0_2, %c0_3, %c0_4] : memref<9x128x128xbf16, #tpu.memory_space<vmem>>, vector<1x128x128xbf16>
    %7 = vector.shape_cast %6 : vector<1x128x128xbf16> to vector<128x128xbf16>
    %cst = arith.constant dense<0.000000e+00> : vector<64x128xf32>
    %8 = tpu.matmul %5, %7, %cst {dimension_numbers = #tpu.dot_dimension_numbers<[1], [0], [0], [1], [0, 0, 1, 1], [], []>} : vector<64x128xbf16>, vector<128x128xbf16>, vector<64x128xf32> -> vector<64x128xf32>
    %c0_i32_5 = arith.constant 0 : i32
    %9 = arith.addi %0, %c0_i32_5 : i32
    %c0_6 = arith.constant 0 : index
    %10 = arith.index_cast %9 : i32 to index
    %c1 = arith.constant 1 : index
    %c0_7 = arith.constant 0 : index
    %11 = vector.load %arg2[%c0_6, %10, %c1, %c0_7] : memref<1x10x10x128xbf16, #tpu.memory_space<vmem>>, vector<1x8x8x128xbf16>
    %12 = vector.shape_cast %11 : vector<1x8x8x128xbf16> to vector<8x8x128xbf16>
    %13 = vector.shape_cast %12 : vector<8x8x128xbf16> to vector<64x128xbf16>
    %c1_8 = arith.constant 1 : index
    %c0_9 = arith.constant 0 : index
    %c0_10 = arith.constant 0 : index
    %14 = vector.load %arg3[%c1_8, %c0_9, %c0_10] : memref<9x128x128xbf16, #tpu.memory_space<vmem>>, vector<1x128x128xbf16>
    %15 = vector.shape_cast %14 : vector<1x128x128xbf16> to vector<128x128xbf16>
    %cst_11 = arith.constant dense<0.000000e+00> : vector<64x128xf32>
    %16 = tpu.matmul %13, %15, %cst_11 {dimension_numbers = #tpu.dot_dimension_numbers<[1], [0], [0], [1], [0, 0, 1, 1], [], []>} : vector<64x128xbf16>, vector<128x128xbf16>, vector<64x128xf32> -> vector<64x128xf32>
    %17 = arith.addf %8, %16 : vector<64x128xf32>
    %c0_i32_12 = arith.constant 0 : i32
    %18 = arith.addi %0, %c0_i32_12 : i32
    %c0_13 = arith.constant 0 : index
    %19 = arith.index_cast %18 : i32 to index
    %c2 = arith.constant 2 : index
    %c0_14 = arith.constant 0 : index
    %20 = vector.load %arg2[%c0_13, %19, %c2, %c0_14] : memref<1x10x10x128xbf16, #tpu.memory_space<vmem>>, vector<1x8x8x128xbf16>
    %21 = vector.shape_cast %20 : vector<1x8x8x128xbf16> to vector<8x8x128xbf16>
    %22 = vector.shape_cast %21 : vector<8x8x128xbf16> to vector<64x128xbf16>
    %c2_15 = arith.constant 2 : index
    %c0_16 = arith.constant 0 : index
    %c0_17 = arith.constant 0 : index
    %23 = vector.load %arg3[%c2_15, %c0_16, %c0_17] : memref<9x128x128xbf16, #tpu.memory_space<vmem>>, vector<1x128x128xbf16>
    %24 = vector.shape_cast %23 : vector<1x128x128xbf16> to vector<128x128xbf16>
    %cst_18 = arith.constant dense<0.000000e+00> : vector<64x128xf32>
    %25 = tpu.matmul %22, %24, %cst_18 {dimension_numbers = #tpu.dot_dimension_numbers<[1], [0], [0], [1], [0, 0, 1, 1], [], []>} : vector<64x128xbf16>, vector<128x128xbf16>, vector<64x128xf32> -> vector<64x128xf32>
    %26 = arith.addf %17, %25 : vector<64x128xf32>
    %c1_i32 = arith.constant 1 : i32
    %27 = arith.addi %0, %c1_i32 : i32
    %c0_19 = arith.constant 0 : index
    %28 = arith.index_cast %27 : i32 to index
    %c0_20 = arith.constant 0 : index
    %c0_21 = arith.constant 0 : index
    %29 = vector.load %arg2[%c0_19, %28, %c0_20, %c0_21] : memref<1x10x10x128xbf16, #tpu.memory_space<vmem>>, vector<1x8x8x128xbf16>
    %30 = vector.shape_cast %29 : vector<1x8x8x128xbf16> to vector<8x8x128xbf16>
    %31 = vector.shape_cast %30 : vector<8x8x128xbf16> to vector<64x128xbf16>
    %c3 = arith.constant 3 : index
    %c0_22 = arith.constant 0 : index
    %c0_23 = arith.constant 0 : index
    %32 = vector.load %arg3[%c3, %c0_22, %c0_23] : memref<9x128x128xbf16, #tpu.memory_space<vmem>>, vector<1x128x128xbf16>
    %33 = vector.shape_cast %32 : vector<1x128x128xbf16> to vector<128x128xbf16>
    %cst_24 = arith.constant dense<0.000000e+00> : vector<64x128xf32>
    %34 = tpu.matmul %31, %33, %cst_24 {dimension_numbers = #tpu.dot_dimension_numbers<[1], [0], [0], [1], [0, 0, 1, 1], [], []>} : vector<64x128xbf16>, vector<128x128xbf16>, vector<64x128xf32> -> vector<64x128xf32>
    %35 = arith.addf %26, %34 : vector<64x128xf32>
    %c1_i32_25 = arith.constant 1 : i32
    %36 = arith.addi %0, %c1_i32_25 : i32
    %c0_26 = arith.constant 0 : index
    %37 = arith.index_cast %36 : i32 to index
    %c1_27 = arith.constant 1 : index
    %c0_28 = arith.constant 0 : index
    %38 = vector.load %arg2[%c0_26, %37, %c1_27, %c0_28] : memref<1x10x10x128xbf16, #tpu.memory_space<vmem>>, vector<1x8x8x128xbf16>
    %39 = vector.shape_cast %38 : vector<1x8x8x128xbf16> to vector<8x8x128xbf16>
    %40 = vector.shape_cast %39 : vector<8x8x128xbf16> to vector<64x128xbf16>
    %c4 = arith.constant 4 : index
    %c0_29 = arith.constant 0 : index
    %c0_30 = arith.constant 0 : index
    %41 = vector.load %arg3[%c4, %c0_29, %c0_30] : memref<9x128x128xbf16, #tpu.memory_space<vmem>>, vector<1x128x128xbf16>
    %42 = vector.shape_cast %41 : vector<1x128x128xbf16> to vector<128x128xbf16>
    %cst_31 = arith.constant dense<0.000000e+00> : vector<64x128xf32>
    %43 = tpu.matmul %40, %42, %cst_31 {dimension_numbers = #tpu.dot_dimension_numbers<[1], [0], [0], [1], [0, 0, 1, 1], [], []>} : vector<64x128xbf16>, vector<128x128xbf16>, vector<64x128xf32> -> vector<64x128xf32>
    %44 = arith.addf %35, %43 : vector<64x128xf32>
    %c1_i32_32 = arith.constant 1 : i32
    %45 = arith.addi %0, %c1_i32_32 : i32
    %c0_33 = arith.constant 0 : index
    %46 = arith.index_cast %45 : i32 to index
    %c2_34 = arith.constant 2 : index
    %c0_35 = arith.constant 0 : index
    %47 = vector.load %arg2[%c0_33, %46, %c2_34, %c0_35] : memref<1x10x10x128xbf16, #tpu.memory_space<vmem>>, vector<1x8x8x128xbf16>
    %48 = vector.shape_cast %47 : vector<1x8x8x128xbf16> to vector<8x8x128xbf16>
    %49 = vector.shape_cast %48 : vector<8x8x128xbf16> to vector<64x128xbf16>
    %c5 = arith.constant 5 : index
    %c0_36 = arith.constant 0 : index
    %c0_37 = arith.constant 0 : index
    %50 = vector.load %arg3[%c5, %c0_36, %c0_37] : memref<9x128x128xbf16, #tpu.memory_space<vmem>>, vector<1x128x128xbf16>
    %51 = vector.shape_cast %50 : vector<1x128x128xbf16> to vector<128x128xbf16>
    %cst_38 = arith.constant dense<0.000000e+00> : vector<64x128xf32>
    %52 = tpu.matmul %49, %51, %cst_38 {dimension_numbers = #tpu.dot_dimension_numbers<[1], [0], [0], [1], [0, 0, 1, 1], [], []>} : vector<64x128xbf16>, vector<128x128xbf16>, vector<64x128xf32> -> vector<64x128xf32>
    %53 = arith.addf %44, %52 : vector<64x128xf32>
    %c2_i32 = arith.constant 2 : i32
    %54 = arith.addi %0, %c2_i32 : i32
    %c0_39 = arith.constant 0 : index
    %55 = arith.index_cast %54 : i32 to index
    %c0_40 = arith.constant 0 : index
    %c0_41 = arith.constant 0 : index
    %56 = vector.load %arg2[%c0_39, %55, %c0_40, %c0_41] : memref<1x10x10x128xbf16, #tpu.memory_space<vmem>>, vector<1x8x8x128xbf16>
    %57 = vector.shape_cast %56 : vector<1x8x8x128xbf16> to vector<8x8x128xbf16>
    %58 = vector.shape_cast %57 : vector<8x8x128xbf16> to vector<64x128xbf16>
    %c6 = arith.constant 6 : index
    %c0_42 = arith.constant 0 : index
    %c0_43 = arith.constant 0 : index
    %59 = vector.load %arg3[%c6, %c0_42, %c0_43] : memref<9x128x128xbf16, #tpu.memory_space<vmem>>, vector<1x128x128xbf16>
    %60 = vector.shape_cast %59 : vector<1x128x128xbf16> to vector<128x128xbf16>
    %cst_44 = arith.constant dense<0.000000e+00> : vector<64x128xf32>
    %61 = tpu.matmul %58, %60, %cst_44 {dimension_numbers = #tpu.dot_dimension_numbers<[1], [0], [0], [1], [0, 0, 1, 1], [], []>} : vector<64x128xbf16>, vector<128x128xbf16>, vector<64x128xf32> -> vector<64x128xf32>
    %62 = arith.addf %53, %61 : vector<64x128xf32>
    %c2_i32_45 = arith.constant 2 : i32
    %63 = arith.addi %0, %c2_i32_45 : i32
    %c0_46 = arith.constant 0 : index
    %64 = arith.index_cast %63 : i32 to index
    %c1_47 = arith.constant 1 : index
    %c0_48 = arith.constant 0 : index
    %65 = vector.load %arg2[%c0_46, %64, %c1_47, %c0_48] : memref<1x10x10x128xbf16, #tpu.memory_space<vmem>>, vector<1x8x8x128xbf16>
    %66 = vector.shape_cast %65 : vector<1x8x8x128xbf16> to vector<8x8x128xbf16>
    %67 = vector.shape_cast %66 : vector<8x8x128xbf16> to vector<64x128xbf16>
    %c7 = arith.constant 7 : index
    %c0_49 = arith.constant 0 : index
    %c0_50 = arith.constant 0 : index
    %68 = vector.load %arg3[%c7, %c0_49, %c0_50] : memref<9x128x128xbf16, #tpu.memory_space<vmem>>, vector<1x128x128xbf16>
    %69 = vector.shape_cast %68 : vector<1x128x128xbf16> to vector<128x128xbf16>
    %cst_51 = arith.constant dense<0.000000e+00> : vector<64x128xf32>
    %70 = tpu.matmul %67, %69, %cst_51 {dimension_numbers = #tpu.dot_dimension_numbers<[1], [0], [0], [1], [0, 0, 1, 1], [], []>} : vector<64x128xbf16>, vector<128x128xbf16>, vector<64x128xf32> -> vector<64x128xf32>
    %71 = arith.addf %62, %70 : vector<64x128xf32>
    %c2_i32_52 = arith.constant 2 : i32
    %72 = arith.addi %0, %c2_i32_52 : i32
    %c0_53 = arith.constant 0 : index
    %73 = arith.index_cast %72 : i32 to index
    %c2_54 = arith.constant 2 : index
    %c0_55 = arith.constant 0 : index
    %74 = vector.load %arg2[%c0_53, %73, %c2_54, %c0_55] : memref<1x10x10x128xbf16, #tpu.memory_space<vmem>>, vector<1x8x8x128xbf16>
    %75 = vector.shape_cast %74 : vector<1x8x8x128xbf16> to vector<8x8x128xbf16>
    %76 = vector.shape_cast %75 : vector<8x8x128xbf16> to vector<64x128xbf16>
    %c8 = arith.constant 8 : index
    %c0_56 = arith.constant 0 : index
    %c0_57 = arith.constant 0 : index
    %77 = vector.load %arg3[%c8, %c0_56, %c0_57] : memref<9x128x128xbf16, #tpu.memory_space<vmem>>, vector<1x128x128xbf16>
    %78 = vector.shape_cast %77 : vector<1x128x128xbf16> to vector<128x128xbf16>
    %cst_58 = arith.constant dense<0.000000e+00> : vector<64x128xf32>
    %79 = tpu.matmul %76, %78, %cst_58 {dimension_numbers = #tpu.dot_dimension_numbers<[1], [0], [0], [1], [0, 0, 1, 1], [], []>} : vector<64x128xbf16>, vector<128x128xbf16>, vector<64x128xf32> -> vector<64x128xf32>
    %80 = arith.addf %71, %79 : vector<64x128xf32>
    %c0_59 = arith.constant 0 : index
    %c0_60 = arith.constant 0 : index
    %81 = vector.load %arg4[%c0_59, %c0_60] : memref<1x128xf32, #tpu.memory_space<vmem>>, vector<1x128xf32>
    %82 = vector.broadcast %81 : vector<1x128xf32> to vector<64x128xf32>
    %83 = arith.addf %80, %82 : vector<64x128xf32>
    %c0_61 = arith.constant 0 : index
    %c0_62 = arith.constant 0 : index
    %c0_63 = arith.constant 0 : index
    %c0_64 = arith.constant 0 : index
    %84 = vector.load %arg5[%c0_61, %c0_62, %c0_63, %c0_64] : memref<1x8x8x128xbf16, #tpu.memory_space<vmem>>, vector<1x8x8x128xbf16>
    %85 = vector.shape_cast %84 : vector<1x8x8x128xbf16> to vector<8x8x128xbf16>
    %86 = vector.shape_cast %85 : vector<8x8x128xbf16> to vector<64x128xbf16>
    %c0_65 = arith.constant 0 : index
    %c0_66 = arith.constant 0 : index
    %87 = vector.load %arg6[%c0_65, %c0_66] : memref<128x128xbf16, #tpu.memory_space<vmem>>, vector<128x128xbf16>
    %cst_67 = arith.constant dense<0.000000e+00> : vector<64x128xf32>
    %88 = tpu.matmul %86, %87, %cst_67 {dimension_numbers = #tpu.dot_dimension_numbers<[1], [0], [0], [1], [0, 0, 1, 1], [], []>} : vector<64x128xbf16>, vector<128x128xbf16>, vector<64x128xf32> -> vector<64x128xf32>
    %c0_68 = arith.constant 0 : index
    %c0_69 = arith.constant 0 : index
    %89 = vector.load %arg7[%c0_68, %c0_69] : memref<1x128xf32, #tpu.memory_space<vmem>>, vector<1x128xf32>
    %90 = vector.broadcast %89 : vector<1x128xf32> to vector<64x128xf32>
    %91 = arith.addf %88, %90 : vector<64x128xf32>
    %92 = arith.addf %83, %91 : vector<64x128xf32>
    %cst_70 = arith.constant 0.000000e+00 : f32
    %93 = vector.broadcast %cst_70 : f32 to vector<64x128xf32>
    %94 = arith.maximumf %92, %93 : vector<64x128xf32>
    %95 = vector.shape_cast %94 : vector<64x128xf32> to vector<8x8x128xf32>
    %96 = arith.truncf %95 : vector<8x8x128xf32> to vector<8x8x128xbf16>
    %c0_71 = arith.constant 0 : index
    %c0_72 = arith.constant 0 : index
    %c0_73 = arith.constant 0 : index
    %c0_74 = arith.constant 0 : index
    %97 = vector.load %arg8[%c0_71, %c0_72, %c0_73, %c0_74] : memref<1x8x8x128xbf16, #tpu.memory_space<vmem>>, vector<1x8x8x128xbf16>
    %98 = vector.shape_cast %97 : vector<1x8x8x128xbf16> to vector<8x8x128xbf16>
    %99 = vector.shape_cast %96 : vector<8x8x128xbf16> to vector<1x8x8x128xbf16>
    tpu.vector_store %arg8[%c0_71, %c0_72, %c0_73, %c0_74], %99 {strides = array<i32>} : memref<1x8x8x128xbf16, #tpu.memory_space<vmem>>, vector<1x8x8x128xbf16>,
    return
  }
  func.func @transform_0(%arg0: i32, %arg1: i32) -> (i32, i32, i32, i32) {
    %c0_i32 = arith.constant 0 : i32
    %c0_i32_0 = arith.constant 0 : i32
    %c0_i32_1 = arith.constant 0 : i32
    %c0_i32_2 = arith.constant 0 : i32
    return %arg0, %c0_i32, %c0_i32_0, %c0_i32_1 : i32, i32, i32, i32
  }
  func.func @transform_1(%arg0: i32, %arg1: i32) -> (i32, i32, i32) {
    %c0_i32 = arith.constant 0 : i32
    %c0_i32_0 = arith.constant 0 : i32
    %c0_i32_1 = arith.constant 0 : i32
    %c0_i32_2 = arith.constant 0 : i32
    return %c0_i32, %c0_i32_0, %c0_i32_1 : i32, i32, i32
  }
  func.func @transform_2(%arg0: i32, %arg1: i32) -> (i32, i32) {
    %c0_i32 = arith.constant 0 : i32
    %c0_i32_0 = arith.constant 0 : i32
    %c0_i32_1 = arith.constant 0 : i32
    return %c0_i32, %c0_i32_0 : i32, i32
  }
  func.func @transform_3(%arg0: i32, %arg1: i32) -> (i32, i32, i32, i32) {
    %c0_i32 = arith.constant 0 : i32
    %c0_i32_0 = arith.constant 0 : i32
    %c0_i32_1 = arith.constant 0 : i32
    return %arg0, %arg1, %c0_i32, %c0_i32_0 : i32, i32, i32, i32
  }
  func.func @transform_4(%arg0: i32, %arg1: i32) -> (i32, i32) {
    %c0_i32 = arith.constant 0 : i32
    %c0_i32_0 = arith.constant 0 : i32
    %c0_i32_1 = arith.constant 0 : i32
    return %c0_i32, %c0_i32_0 : i32, i32
  }
  func.func @transform_5(%arg0: i32, %arg1: i32) -> (i32, i32) {
    %c0_i32 = arith.constant 0 : i32
    %c0_i32_0 = arith.constant 0 : i32
    %c0_i32_1 = arith.constant 0 : i32
    return %c0_i32, %c0_i32_0 : i32, i32
  }
  func.func @transform_6(%arg0: i32, %arg1: i32) -> (i32, i32, i32, i32) {
    %c0_i32 = arith.constant 0 : i32
    %c0_i32_0 = arith.constant 0 : i32
    %c0_i32_1 = arith.constant 0 : i32
    return %arg0, %arg1, %c0_i32, %c0_i32_0 : i32, i32, i32, i32
  }
}

</mosaic_0001>

<llo_original>
// kernel: basic_block_forward.2
$region0: #{basic_block_forward.2}
  #allocation0 [shape = 'u32[]', space=smem, size = 0x4, offset = 0x4, fixed_abs, tag = 'smem constant byte address 0x4 - core index']
  #allocation1 [shape = 'u32[144,128]{1,0:T(1,128)}', space=vmem, size = 0x12000, scoped, tag = 'internal scratch']
  %s0 = inlined_call_operand.vmem [shape: bf16[2,4,9,9,128], index: 0, kind: input, shape index: {}]
  %s1 = inlined_call_operand.vmem [shape: bf16[9,128,128], index: 1, kind: input, shape index: {}]
  %s2 = inlined_call_operand.vmem [shape: f32[1,128], index: 2, kind: input, shape index: {}]
  %s3 = inlined_call_operand.vmem [shape: bf16[2,10,10,128], index: 3, kind: output, shape index: {}]
  %s4 = sld [smem:[#allocation0]]
  $region49: #{basic_block_forward.2} parent=0
    _
  %s6 = ssub.s32 1, %s4
  %s7 = scalar_select 0, %s6, %s4
  loop: start=0, step=1, limit=4
  $region2: #{basic_block_forward.2} parent=0 // loop_pre_header
    _
  $region3: #{basic_block_forward.2} parent=0 // loop_header
    %s9 = sphi 0, %s13
    %p10 = scmp.ge.s32.totalorder %s9, 4
    %s16 = sphi 0, %s28
    %s17 = sphi 0, %s24
    %s18 = sphi 0, %s16
    %s19 = sphi 0, %s17
    %s20 = sphi 0, %s18
    %s21 = sphi 0, %s19
    %s31 = sphi 0, %s33
    %s34 = sphi 0, %s31
    %s35 = sphi 0, %s34
    %s51 = sphi 0, %s35
    %s55 = sphi 0, %s55
    %s57 = sphi 0, %s55
    %s58 = sphi 0, %s57
    %s72 = sphi 0, %s58
    %s76 = sphi 0, %s76
    %s78 = sphi 0, %s76
    %s79 = sphi 0, %s78
    %s93 = sphi 0, %s79
    %s99 = sphi 0, %s101
    %s102 = sphi 0, %s99
    %s103 = sphi 0, %s102
    %s119 = sphi 0, %s103
  $region4: #{basic_block_forward.2} parent=0 // loop_header_branch
    %12 = sbr.rel (%p10) target = $region8
  $region5: #{basic_block_forward.2} parent=0 // loop_body
    %s14 = ssub.s32 %s9, 1
    %s15 = ssub.s32 %s9, 2
    %s22 = sadd.s32 1, %s17
    %p23 = scmp.ge.s32.totalorder %s22, 1
    %s24 = scalar_select %p23, 0, %s22
    %s25 = sadd.s32 1, %s16
    %s26 = scalar_select %p23, %s25, %s16
    %p27 = scmp.ge.s32.totalorder %s26, 2
    %s28 = scalar_select %p27, 0, %s26
    %s29 = ssub.s32 %s16, %s28
    %p30 = scmp.eq.s32.totalorder %s29, 0
    %s32 = sadd.s32 %s31, 1
    %s33 = scalar_select %p30, %s31, %s32
    %p36 = pneg %p30
    %p37 = scmp.eq.s32.totalorder %s9, 1
    %p38 = por %p36, %p37
    %p39 = scmp.ne.s32.totalorder %s31, %s34
    %p40 = scmp.eq.s32.totalorder %s9, 0
    %p41 = por %p39, %p40
    %p42 = scmp.ne.s32.totalorder %s31, %s34
    %p43 = scmp.eq.s32.totalorder %s14, 1
    %p44 = por %p42, %p43
    %p45 = scmp.ne.s32.totalorder %s34, %s35
    %p46 = scmp.eq.s32.totalorder %s14, 0
    %p47 = por %p45, %p46
    %p48 = scmp.ne.s32.totalorder %s34, %s35
    %p49 = scmp.eq.s32.totalorder %s15, 1
    %p50 = por %p48, %p49
    %p52 = scmp.ne.s32.totalorder %s35, %s51
    %p53 = scmp.eq.s32.totalorder %s15, 0
    %p54 = por %p52, %p53
    %s56 = sadd.s32 %s55, 1
    %p59 = scmp.eq.s32.totalorder %s9, 1
    %p60 = scmp.ne.s32.totalorder %s55, %s57
    %p61 = scmp.eq.s32.totalorder %s9, 0
    %p62 = por %p60, %p61
    %p63 = scmp.ne.s32.totalorder %s55, %s57
    %p64 = scmp.eq.s32.totalorder %s14, 1
    %p65 = por %p63, %p64
    %p66 = scmp.ne.s32.totalorder %s57, %s58
    %p67 = scmp.eq.s32.totalorder %s14, 0
    %p68 = por %p66, %p67
    %p69 = scmp.ne.s32.totalorder %s57, %s58
    %p70 = scmp.eq.s32.totalorder %s15, 1
    %p71 = por %p69, %p70
    %p73 = scmp.ne.s32.totalorder %s58, %s72
    %p74 = scmp.eq.s32.totalorder %s15, 0
    %p75 = por %p73, %p74
    %s77 = sadd.s32 %s76, 1
    %p80 = scmp.eq.s32.totalorder %s9, 1
    %p81 = scmp.ne.s32.totalorder %s76, %s78
    %p82 = scmp.eq.s32.totalorder %s9, 0
    %p83 = por %p81, %p82
    %p84 = scmp.ne.s32.totalorder %s76, %s78
    %p85 = scmp.eq.s32.totalorder %s14, 1
    %p86 = por %p84, %p85
    %p87 = scmp.ne.s32.totalorder %s78, %s79
    %p88 = scmp.eq.s32.totalorder %s14, 0
    %p89 = por %p87, %p88
    %p90 = scmp.ne.s32.totalorder %s78, %s79
    %p91 = scmp.eq.s32.totalorder %s15, 1
    %p92 = por %p90, %p91
    %p94 = scmp.ne.s32.totalorder %s79, %s93
    %p95 = scmp.eq.s32.totalorder %s15, 0
    %p96 = por %p94, %p95
    %s97 = ssub.s32 %s16, %s28
    %p98 = scmp.eq.s32.totalorder %s97, 0
    %s100 = sadd.s32 %s99, 1
    %s101 = scalar_select %p98, %s99, %s100
    %p104 = pneg %p98
    %p105 = scmp.eq.s32.totalorder %s9, 1
    %p106 = por %p104, %p105
    %p107 = scmp.ne.s32.totalorder %s99, %s102
    %p108 = scmp.eq.s32.totalorder %s9, 0
    %p109 = por %p107, %p108
    %p110 = scmp.ne.s32.totalorder %s99, %s102
    %p111 = scmp.eq.s32.totalorder %s14, 1
    %p112 = por %p110, %p111
    %p113 = scmp.ne.s32.totalorder %s102, %s103
    %p114 = scmp.eq.s32.totalorder %s14, 0
    %p115 = por %p113, %p114
    %p116 = scmp.ne.s32.totalorder %s102, %s103
    %p117 = scmp.eq.s32.totalorder %s15, 1
    %p118 = por %p116, %p117
    %p120 = scmp.ne.s32.totalorder %s103, %s119
    %p121 = scmp.eq.s32.totalorder %s15, 0
    %p122 = por %p120, %p121
    %p123 = scmp.le.s32.totalorder 1, %s9
    %p124 = scmp.lt.s32.totalorder %s9, 3
    %p125 = pnand %p123, %p124
    %p126 = pneg %p125
    // Predicated region
    $region9: #{basic_block_forward.2} parent=5 // pred_check
      _
    $region10: #{basic_block_forward.2} parent=5 // pred_check_branch
      %128 = sbr.rel (%p125) target = $region12
    $region11: #{basic_block_forward.2} parent=5 // pred_region
      %s129 = ssub.s32 %s9, 1
      // Predicated region
      $region13: #{basic_block_forward.2} parent=11 // pred_check
        %p130 = pneg %p68
      $region14: #{basic_block_forward.2} parent=11 // pred_check_branch
        %132 = sbr.rel (%p130) target = $region16
      $region15: #{basic_block_forward.2} parent=11 // pred_region
        _
      $region16: #{basic_block_forward.2} parent=11 // pred_fallthru
        _
      // Predicated region
      $region17: #{basic_block_forward.2} parent=11 // pred_check
        %p133 = pneg %p89
      $region18: #{basic_block_forward.2} parent=11 // pred_check_branch
        %135 = sbr.rel (%p133) target = $region20
      $region19: #{basic_block_forward.2} parent=11 // pred_region
        _
      $region20: #{basic_block_forward.2} parent=11 // pred_fallthru
        _
    $region12: #{basic_block_forward.2} parent=5 // pred_fallthru
      _
    %p136 = scmp.lt.s32.totalorder %s9, 2
    // Predicated region
    $region21: #{basic_block_forward.2} parent=5 // pred_check
      %p137 = pneg %p136
    $region22: #{basic_block_forward.2} parent=5 // pred_check_branch
      %139 = sbr.rel (%p137) target = $region24
    $region23: #{basic_block_forward.2} parent=5 // pred_region
      // Predicated region
      $region25: #{basic_block_forward.2} parent=23 // pred_check
        %p140 = pneg %p41
      $region26: #{basic_block_forward.2} parent=23 // pred_check_branch
        %142 = sbr.rel (%p140) target = $region28
      $region27: #{basic_block_forward.2} parent=23 // pred_region
        %p143 = scmp.lt.s32.totalorder %s16, 1
        %s144 = scalar_select %p143, %s16, 1
        %s145 = smul.addr %s144, 72
        %s146 = smul.addr %s145, 4
        %s147 = scalar_lea.vmem %s0, %s146
      $region28: #{basic_block_forward.2} parent=23 // pred_fallthru
        _
    $region24: #{basic_block_forward.2} parent=5 // pred_fallthru
      _
    %p148 = scmp.le.s32.totalorder 1, %s9
    %p149 = scmp.lt.s32.totalorder %s9, 3
    %p150 = pnand %p148, %p149
    %p151 = pneg %p150
    // Predicated region
    $region29: #{basic_block_forward.2} parent=5 // pred_check
      _
    $region30: #{basic_block_forward.2} parent=5 // pred_check_branch
      %153 = sbr.rel (%p150) target = $region32
    $region31: #{basic_block_forward.2} parent=5 // pred_region
      %s154 = ssub.s32 %s9, 1
      %p155 = scmp.lt.s32.totalorder %s18, 1
      %s156 = scalar_select %p155, %s18, 1
      %s157 = smul.addr %s156, 72
      %s158 = smul.addr %s157, 4
      %s159 = scalar_lea.vmem %s0, %s158
      %p160 = pneg %p47
      %p161 = pneg %p44
      %p162 = pneg %p68
      %p163 = pneg %p65
      %p164 = pneg %p89
      %p165 = pneg %p86
      %p166 = pneg %p115
      %p167 = pneg %p112
      %p168 = scmp.lt.s32.totalorder %s18, 1
      %s169 = scalar_select %p168, %s18, 1
      %s170 = smul.addr %s169, 20
      %s171 = smul.addr %s170, 4
      %s172 = scalar_lea.vmem %s3, %s171
      %p173 = scmp.lt.s32.totalorder %s18, 1
      %s174 = scalar_select %p173, %s18, 1
      %s175 = smul.addr %s174, 72
      %s176 = smul.addr %s175, 4
      %s177 = scalar_lea.vmem %s0, %s176
      %p178 = scmp.lt.s32.totalorder %s18, 1
      %s179 = scalar_select %p178, %s18, 1
      %s180 = smul.addr %s179, 20
      %s181 = smul.addr %s180, 4
      %s182 = scalar_lea.vmem %s3, %s181
      %s184 = smul.u32 %s19, 8
      %s185 = smul.u32 %s184, 2
      %s186 = smul.addr %s185, 4
      %s187 = scalar_lea.vmem %s177, %s186
      %v188 = vld [vmem:[%s187] sm:$0xf]
      %v189 = vld [vmem:[%s187 + $0x8] sm:$0xf]
      %v190 = vld [vmem:[%s187 + $0x10] sm:$0xf]
      %v191 = vld [vmem:[%s187 + $0x18] sm:$0xf]
      %v192 = vld [vmem:[%s187 + $0x20] sm:$0xf]
      %v193 = vld [vmem:[%s187 + $0x28] sm:$0xf]
      %v194 = vld [vmem:[%s187 + $0x30] sm:$0xf]
      %v195 = vld [vmem:[%s187 + $0x38] sm:$0xf]
      %v196 = vld [vmem:[%s1] sm:$0xf]
      %v197 = vld [vmem:[%s1 + $0x4] sm:$0xf]
      %v198 = vld [vmem:[%s1 + $0x8] sm:$0xf]
      %v199 = vld [vmem:[%s1 + $0xc] sm:$0xf]
      %v200 = vld [vmem:[%s1 + $0x10] sm:$0xf]
      %v201 = vld [vmem:[%s1 + $0x14] sm:$0xf]
      %v202 = vld [vmem:[%s1 + $0x18] sm:$0xf]
      %v203 = vld [vmem:[%s1 + $0x1c] sm:$0xf]
      %v204 = vld [vmem:[%s1 + $0x20] sm:$0xf]
      %v205 = vld [vmem:[%s1 + $0x24] sm:$0xf]
      %v206 = vld [vmem:[%s1 + $0x28] sm:$0xf]
      %v207 = vld [vmem:[%s1 + $0x2c] sm:$0xf]
      %v208 = vld [vmem:[%s1 + $0x30] sm:$0xf]
      %v209 = vld [vmem:[%s1 + $0x34] sm:$0xf]
      %v210 = vld [vmem:[%s1 + $0x38] sm:$0xf]
      %v211 = vld [vmem:[%s1 + $0x3c] sm:$0xf]
      %s212 = sadd.s32 %s185, 18
      %s213 = smul.addr %s212, 4
      %s214 = scalar_lea.vmem %s177, %s213
      %v215 = vld [vmem:[%s214] sm:$0xf]
      %v216 = vld [vmem:[%s214 + $0x8] sm:$0xf]
      %v217 = vld [vmem:[%s214 + $0x10] sm:$0xf]
      %v218 = vld [vmem:[%s214 + $0x18] sm:$0xf]
      %v219 = vld [vmem:[%s214 + $0x20] sm:$0xf]
      %v220 = vld [vmem:[%s214 + $0x28] sm:$0xf]
      %v221 = vld [vmem:[%s214 + $0x30] sm:$0xf]
      %v222 = vld [vmem:[%s214 + $0x38] sm:$0xf]
      %s223 = scalar_lea.vmem %s1, 64
      %v224 = vld [vmem:[%s223] sm:$0xf]
      %v225 = vld [vmem:[%s223 + $0x4] sm:$0xf]
      %v226 = vld [vmem:[%s223 + $0x8] sm:$0xf]
      %v227 = vld [vmem:[%s223 + $0xc] sm:$0xf]
      %v228 = vld [vmem:[%s223 + $0x10] sm:$0xf]
      %v229 = vld [vmem:[%s223 + $0x14] sm:$0xf]
      %v230 = vld [vmem:[%s223 + $0x18] sm:$0xf]
      %v231 = vld [vmem:[%s223 + $0x1c] sm:$0xf]
      %v232 = vld [vmem:[%s223 + $0x20] sm:$0xf]
      %v233 = vld [vmem:[%s223 + $0x24] sm:$0xf]
      %v234 = vld [vmem:[%s223 + $0x28] sm:$0xf]
      %v235 = vld [vmem:[%s223 + $0x2c] sm:$0xf]
      %v236 = vld [vmem:[%s223 + $0x30] sm:$0xf]
      %v237 = vld [vmem:[%s223 + $0x34] sm:$0xf]
      %v238 = vld [vmem:[%s223 + $0x38] sm:$0xf]
      %v239 = vld [vmem:[%s223 + $0x3c] sm:$0xf]
      %v248 = vunpack.c.l.b16 %v215
      %v249 = vunpack.c.l.b16 %v216
      %v250 = vunpack.c.l.b16 %v217
      %v251 = vunpack.c.l.b16 %v218
      %v252 = vunpack.c.l.b16 %v219
      %v253 = vunpack.c.l.b16 %v220
      %v254 = vunpack.c.l.b16 %v221
      %v255 = vunpack.c.l.b16 %v222
      %v256 = vpack.c.b16 %v249, %v248
      %v257 = vpack.c.b16 %v251, %v250
      %v258 = vpack.c.b16 %v253, %v252
      %v259 = vpack.c.b16 %v255, %v254
      %v280 = vunpack.c.l.b16 %v224
      %v281 = vunpack.c.l.b16 %v225
      %v282 = vunpack.c.l.b16 %v226
      %v283 = vunpack.c.l.b16 %v227
      %v284 = vunpack.c.l.b16 %v228
      %v285 = vunpack.c.l.b16 %v229
      %v286 = vunpack.c.l.b16 %v230
      %v287 = vunpack.c.l.b16 %v231
      %v288 = vunpack.c.l.b16 %v232
      %v289 = vunpack.c.l.b16 %v233
      %v290 = vunpack.c.l.b16 %v234
      %v291 = vunpack.c.l.b16 %v235
      %v292 = vunpack.c.l.b16 %v236
      %v293 = vunpack.c.l.b16 %v237
      %v294 = vunpack.c.l.b16 %v238
      %v295 = vunpack.c.l.b16 %v239
      %v296 = vpack.c.b16 %v281, %v280
      %v297 = vpack.c.b16 %v283, %v282
      %v298 = vpack.c.b16 %v285, %v284
      %v299 = vpack.c.b16 %v287, %v286
      %v300 = vpack.c.b16 %v289, %v288
      %v301 = vpack.c.b16 %v291, %v290
      %v302 = vpack.c.b16 %v293, %v292
      %v303 = vpack.c.b16 %v295, %v294
      %312 = vmatprep.subr.bf16.mxu0 0
      %313 = vmatpush1.bf16.msra.mxu0 %v296
      %314 = vmatprep.subr.bf16.mxu0 0
      %315 = vmatpush1.bf16.msra.mxu0 %v297
      %316 = vmatprep.subr.bf16.mxu0 0
      %317 = vmatpush1.bf16.msra.mxu0 %v298
      %318 = vmatprep.subr.bf16.mxu0 0
      %319 = vmatpush1.bf16.msra.mxu0 %v299
      %320 = vmatprep.subr.bf16.mxu0 0
      %321 = vmatpush1.bf16.msra.mxu0 %v300
      %322 = vmatprep.subr.bf16.mxu0 0
      %323 = vmatpush1.bf16.msra.mxu0 %v301
      %324 = vmatprep.subr.bf16.mxu0 0
      %325 = vmatpush1.bf16.msra.mxu0 %v302
      %326 = vmatprep.subr.bf16.mxu0 0
      %327 = vmatpush1.bf16.msra.mxu0 %v303
      %328 = vmatprep.subr.bf16.mxu0 0
      %329 = vmatpush1.bf16.msra.mxu0 0
      %330 = vmatprep.subr.bf16.mxu0 0
      %331 = vmatpush1.bf16.msra.mxu0 0
      %332 = vmatprep.subr.bf16.mxu0 0
      %333 = vmatpush1.bf16.msra.mxu0 0
      %334 = vmatprep.subr.bf16.mxu0 0
      %335 = vmatpush1.bf16.msra.mxu0 0
      %336 = vmatprep.subr.bf16.mxu0 0
      %337 = vmatpush1.bf16.msra.mxu0 0
      %338 = vmatprep.subr.bf16.mxu0 0
      %339 = vmatpush1.bf16.msra.mxu0 0
      %340 = vmatprep.subr.bf16.mxu0 0
      %341 = vmatpush1.bf16.msra.mxu0 0
      %342 = vmatprep.subr.bf16.mxu0 0
      %343 = vmatpush1.bf16.msra.mxu0 0
      %344 = vmatprep.mubr.bf16.mxu0 0
      %345 = vmatmul.mubr.bf16.gmra.mrb[0].mxu0 %v256
      %v346 = vpop.f32.mrb[0].mxu0
      %v347 = vadd.f32 0.0, %v346
      %v348 = vpop.f32.mrb[0].mxu0
      %v349 = vpop.f32.mrb[0].mxu0
      %v350 = vadd.f32 0.0, %v349
      %v351 = vpop.f32.mrb[0].mxu0
      %352 = vmatprep.mubr.bf16.mxu0 0
      %353 = vmatmul.mubr.bf16.gmra.mrb[0].mxu0 %v257
      %v354 = vpop.f32.mrb[0].mxu0
      %v355 = vadd.f32 0.0, %v354
      %v356 = vpop.f32.mrb[0].mxu0
      %v357 = vpop.f32.mrb[0].mxu0
      %v358 = vadd.f32 0.0, %v357
      %v359 = vpop.f32.mrb[0].mxu0
      %360 = vmatprep.mubr.bf16.mxu0 0
      %361 = vmatmul.mubr.bf16.gmra.mrb[0].mxu0 %v258
      %v362 = vpop.f32.mrb[0].mxu0
      %v363 = vadd.f32 0.0, %v362
      %v364 = vpop.f32.mrb[0].mxu0
      %v365 = vpop.f32.mrb[0].mxu0
      %v366 = vadd.f32 0.0, %v365
      %v367 = vpop.f32.mrb[0].mxu0
      %368 = vmatprep.mubr.bf16.mxu0 0
      %369 = vmatmul.mubr.bf16.gmra.mrb[0].mxu0 %v259
      %v370 = vpop.f32.mrb[0].mxu0
      %v371 = vadd.f32 0.0, %v370
      %v372 = vpop.f32.mrb[0].mxu0
      %v373 = vpop.f32.mrb[0].mxu0
      %v374 = vadd.f32 0.0, %v373
      %v375 = vpop.f32.mrb[0].mxu0
      %376 = vdwg.mxu0
      %v385 = vunpack.c.l.b16 %v188
      %v386 = vunpack.c.l.b16 %v189
      %v387 = vunpack.c.l.b16 %v190
      %v388 = vunpack.c.l.b16 %v191
      %v389 = vunpack.c.l.b16 %v192
      %v390 = vunpack.c.l.b16 %v193
      %v391 = vunpack.c.l.b16 %v194
      %v392 = vunpack.c.l.b16 %v195
      %v393 = vpack.c.b16 %v386, %v385
      %v394 = vpack.c.b16 %v388, %v387
      %v395 = vpack.c.b16 %v390, %v389
      %v396 = vpack.c.b16 %v392, %v391
      %v417 = vunpack.c.l.b16 %v196
      %v418 = vunpack.c.l.b16 %v197
      %v419 = vunpack.c.l.b16 %v198
      %v420 = vunpack.c.l.b16 %v199
      %v421 = vunpack.c.l.b16 %v200
      %v422 = vunpack.c.l.b16 %v201
      %v423 = vunpack.c.l.b16 %v202
      %v424 = vunpack.c.l.b16 %v203
      %v425 = vunpack.c.l.b16 %v204
      %v426 = vunpack.c.l.b16 %v205
      %v427 = vunpack.c.l.b16 %v206
      %v428 = vunpack.c.l.b16 %v207
      %v429 = vunpack.c.l.b16 %v208
      %v430 = vunpack.c.l.b16 %v209
      %v431 = vunpack.c.l.b16 %v210
      %v432 = vunpack.c.l.b16 %v211
      %v433 = vpack.c.b16 %v418, %v417
      %v434 = vpack.c.b16 %v420, %v419
      %v435 = vpack.c.b16 %v422, %v421
      %v436 = vpack.c.b16 %v424, %v423
      %v437 = vpack.c.b16 %v426, %v425
      %v438 = vpack.c.b16 %v428, %v427
      %v439 = vpack.c.b16 %v430, %v429
      %v440 = vpack.c.b16 %v432, %v431
      %449 = vmatprep.subr.bf16.mxu0 0
      %450 = vmatpush1.bf16.msra.mxu0 %v433
      %451 = vmatprep.subr.bf16.mxu0 0
      %452 = vmatpush1.bf16.msra.mxu0 %v434
      %453 = vmatprep.subr.bf16.mxu0 0
      %454 = vmatpush1.bf16.msra.mxu0 %v435
      %455 = vmatprep.subr.bf16.mxu0 0
      %456 = vmatpush1.bf16.msra.mxu0 %v436
      %457 = vmatprep.subr.bf16.mxu0 0
      %458 = vmatpush1.bf16.msra.mxu0 %v437
      %459 = vmatprep.subr.bf16.mxu0 0
      %460 = vmatpush1.bf16.msra.mxu0 %v438
      %461 = vmatprep.subr.bf16.mxu0 0
      %462 = vmatpush1.bf16.msra.mxu0 %v439
      %463 = vmatprep.subr.bf16.mxu0 0
      %464 = vmatpush1.bf16.msra.mxu0 %v440
      %465 = vmatprep.subr.bf16.mxu0 0
      %466 = vmatpush1.bf16.msra.mxu0 0
      %467 = vmatprep.subr.bf16.mxu0 0
      %468 = vmatpush1.bf16.msra.mxu0 0
      %469 = vmatprep.subr.bf16.mxu0 0
      %470 = vmatpush1.bf16.msra.mxu0 0
      %471 = vmatprep.subr.bf16.mxu0 0
      %472 = vmatpush1.bf16.msra.mxu0 0
      %473 = vmatprep.subr.bf16.mxu0 0
      %474 = vmatpush1.bf16.msra.mxu0 0
      %475 = vmatprep.subr.bf16.mxu0 0
      %476 = vmatpush1.bf16.msra.mxu0 0
      %477 = vmatprep.subr.bf16.mxu0 0
      %478 = vmatpush1.bf16.msra.mxu0 0
      %479 = vmatprep.subr.bf16.mxu0 0
      %480 = vmatpush1.bf16.msra.mxu0 0
      %481 = vmatprep.mubr.bf16.mxu0 0
      %482 = vmatmul.mubr.bf16.gmra.mrb[0].mxu0 %v393
      %v483 = vpop.f32.mrb[0].mxu0
      %v484 = vadd.f32 %v347, %v483
      %v485 = vpop.f32.mrb[0].mxu0
      %v486 = vpop.f32.mrb[0].mxu0
      %v487 = vadd.f32 %v350, %v486
      %v488 = vpop.f32.mrb[0].mxu0
      %489 = vmatprep.mubr.bf16.mxu0 0
      %490 = vmatmul.mubr.bf16.gmra.mrb[0].mxu0 %v394
      %v491 = vpop.f32.mrb[0].mxu0
      %v492 = vadd.f32 %v355, %v491
      %v493 = vpop.f32.mrb[0].mxu0
      %v494 = vpop.f32.mrb[0].mxu0
      %v495 = vadd.f32 %v358, %v494
      %v496 = vpop.f32.mrb[0].mxu0
      %497 = vmatprep.mubr.bf16.mxu0 0
      %498 = vmatmul.mubr.bf16.gmra.mrb[0].mxu0 %v395
      %v499 = vpop.f32.mrb[0].mxu0
      %v500 = vadd.f32 %v363, %v499
      %v501 = vpop.f32.mrb[0].mxu0
      %v502 = vpop.f32.mrb[0].mxu0
      %v503 = vadd.f32 %v366, %v502
      %v504 = vpop.f32.mrb[0].mxu0
      %505 = vmatprep.mubr.bf16.mxu0 0
      %506 = vmatmul.mubr.bf16.gmra.mrb[0].mxu0 %v396
      %v507 = vpop.f32.mrb[0].mxu0
      %v508 = vadd.f32 %v371, %v507
      %v509 = vpop.f32.mrb[0].mxu0
      %v510 = vpop.f32.mrb[0].mxu0
      %v511 = vadd.f32 %v374, %v510
      %v512 = vpop.f32.mrb[0].mxu0
      %513 = vdwg.mxu0
      %v514 = vld [vmem:[%s187] sm:$0xf]
      %v515 = vld [vmem:[%s187 + $0x4] sm:$0x1]
      %v516 = vld [vmem:[%s187 + $0x8] sm:$0xf]
      %v517 = vld [vmem:[%s187 + $0xc] sm:$0x1]
      %v518 = vld [vmem:[%s187 + $0x10] sm:$0xf]
      %v519 = vld [vmem:[%s187 + $0x14] sm:$0x1]
      %v520 = vld [vmem:[%s187 + $0x18] sm:$0xf]
      %v521 = vld [vmem:[%s187 + $0x1c] sm:$0x1]
      %v522 = vld [vmem:[%s187 + $0x20] sm:$0xf]
      %v523 = vld [vmem:[%s187 + $0x24] sm:$0x1]
      %v524 = vld [vmem:[%s187 + $0x28] sm:$0xf]
      %v525 = vld [vmem:[%s187 + $0x2c] sm:$0x1]
      %v526 = vld [vmem:[%s187 + $0x30] sm:$0xf]
      %v527 = vld [vmem:[%s187 + $0x34] sm:$0x1]
      %v528 = vld [vmem:[%s187 + $0x38] sm:$0xf]
      %v529 = vld [vmem:[%s187 + $0x3c] sm:$0x1]
      %vm530 = vsmask.f32 3328
      %vm531 = vsmask.f32 7440
      %vm532 = vmor %vm530, %vm531
      %v534 = vshrl.u32 %v514, 16
      %v536 = vrot.slane %v534, 4
      %v537 = vshll.u32 %v514, 16
      %v539 = vrot.slane %v537, 5
      %v540 = vor.u32 %v536, %v539
      %v541 = vrot.slane %v540, 4
      %v543 = vshll.u32 %v515, 16
      %v545 = vrot.slane %v543, 5
      %v546 = vsel %vm532, %v541, %v545
      %v548 = vshrl.u32 %v516, 16
      %v550 = vrot.slane %v548, 4
      %v551 = vshll.u32 %v516, 16
      %v553 = vrot.slane %v551, 5
      %v554 = vor.u32 %v550, %v553
      %v555 = vrot.slane %v554, 4
      %v557 = vshll.u32 %v517, 16
      %v559 = vrot.slane %v557, 5
      %v560 = vsel %vm532, %v555, %v559
      %v562 = vshrl.u32 %v518, 16
      %v564 = vrot.slane %v562, 4
      %v565 = vshll.u32 %v518, 16
      %v567 = vrot.slane %v565, 5
      %v568 = vor.u32 %v564, %v567
      %v569 = vrot.slane %v568, 4
      %v571 = vshll.u32 %v519, 16
      %v573 = vrot.slane %v571, 5
      %v574 = vsel %vm532, %v569, %v573
      %v576 = vshrl.u32 %v520, 16
      %v578 = vrot.slane %v576, 4
      %v579 = vshll.u32 %v520, 16
      %v581 = vrot.slane %v579, 5
      %v582 = vor.u32 %v578, %v581
      %v583 = vrot.slane %v582, 4
      %v585 = vshll.u32 %v521, 16
      %v587 = vrot.slane %v585, 5
      %v588 = vsel %vm532, %v583, %v587
      %v590 = vshrl.u32 %v522, 16
      %v592 = vrot.slane %v590, 4
      %v593 = vshll.u32 %v522, 16
      %v595 = vrot.slane %v593, 5
      %v596 = vor.u32 %v592, %v595
      %v597 = vrot.slane %v596, 4
      %v599 = vshll.u32 %v523, 16
      %v601 = vrot.slane %v599, 5
      %v602 = vsel %vm532, %v597, %v601
      %v604 = vshrl.u32 %v524, 16
      %v606 = vrot.slane %v604, 4
      %v607 = vshll.u32 %v524, 16
      %v609 = vrot.slane %v607, 5
      %v610 = vor.u32 %v606, %v609
      %v611 = vrot.slane %v610, 4
      %v613 = vshll.u32 %v525, 16
      %v615 = vrot.slane %v613, 5
      %v616 = vsel %vm532, %v611, %v615
      %v618 = vshrl.u32 %v526, 16
      %v620 = vrot.slane %v618, 4
      %v621 = vshll.u32 %v526, 16
      %v623 = vrot.slane %v621, 5
      %v624 = vor.u32 %v620, %v623
      %v625 = vrot.slane %v624, 4
      %v627 = vshll.u32 %v527, 16
      %v629 = vrot.slane %v627, 5
      %v630 = vsel %vm532, %v625, %v629
      %v632 = vshrl.u32 %v528, 16
      %v634 = vrot.slane %v632, 4
      %v635 = vshll.u32 %v528, 16
      %v637 = vrot.slane %v635, 5
      %v638 = vor.u32 %v634, %v637
      %v639 = vrot.slane %v638, 4
      %v641 = vshll.u32 %v529, 16
      %v643 = vrot.slane %v641, 5
      %v644 = vsel %vm532, %v639, %v643
      %s645 = scalar_lea.vmem %s1, 128
      %v646 = vld [vmem:[%s645] sm:$0xf]
      %v647 = vld [vmem:[%s645 + $0x4] sm:$0xf]
      %v648 = vld [vmem:[%s645 + $0x8] sm:$0xf]
      %v649 = vld [vmem:[%s645 + $0xc] sm:$0xf]
      %v650 = vld [vmem:[%s645 + $0x10] sm:$0xf]
      %v651 = vld [vmem:[%s645 + $0x14] sm:$0xf]
      %v652 = vld [vmem:[%s645 + $0x18] sm:$0xf]
      %v653 = vld [vmem:[%s645 + $0x1c] sm:$0xf]
      %v654 = vld [vmem:[%s645 + $0x20] sm:$0xf]
      %v655 = vld [vmem:[%s645 + $0x24] sm:$0xf]
      %v656 = vld [vmem:[%s645 + $0x28] sm:$0xf]
      %v657 = vld [vmem:[%s645 + $0x2c] sm:$0xf]
      %v658 = vld [vmem:[%s645 + $0x30] sm:$0xf]
      %v659 = vld [vmem:[%s645 + $0x34] sm:$0xf]
      %v660 = vld [vmem:[%s645 + $0x38] sm:$0xf]
      %v661 = vld [vmem:[%s645 + $0x3c] sm:$0xf]
      %v662 = vunpack.c.l.b16 %v546
      %v663 = vunpack.c.l.b16 %v560
      %v664 = vunpack.c.l.b16 %v574
      %v665 = vunpack.c.l.b16 %v588
      %v666 = vunpack.c.l.b16 %v602
      %v667 = vunpack.c.l.b16 %v616
      %v668 = vunpack.c.l.b16 %v630
      %v669 = vunpack.c.l.b16 %v644
      %v670 = vpack.c.b16 %v663, %v662
      %v671 = vpack.c.b16 %v665, %v664
      %v672 = vpack.c.b16 %v667, %v666
      %v673 = vpack.c.b16 %v669, %v668
      %v694 = vunpack.c.l.b16 %v646
      %v695 = vunpack.c.l.b16 %v647
      %v696 = vunpack.c.l.b16 %v648
      %v697 = vunpack.c.l.b16 %v649
      %v698 = vunpack.c.l.b16 %v650
      %v699 = vunpack.c.l.b16 %v651
      %v700 = vunpack.c.l.b16 %v652
      %v701 = vunpack.c.l.b16 %v653
      %v702 = vunpack.c.l.b16 %v654
      %v703 = vunpack.c.l.b16 %v655
      %v704 = vunpack.c.l.b16 %v656
      %v705 = vunpack.c.l.b16 %v657
      %v706 = vunpack.c.l.b16 %v658
      %v707 = vunpack.c.l.b16 %v659
      %v708 = vunpack.c.l.b16 %v660
      %v709 = vunpack.c.l.b16 %v661
      %v710 = vpack.c.b16 %v695, %v694
      %v711 = vpack.c.b16 %v697, %v696
      %v712 = vpack.c.b16 %v699, %v698
      %v713 = vpack.c.b16 %v701, %v700
      %v714 = vpack.c.b16 %v703, %v702
      %v715 = vpack.c.b16 %v705, %v704
      %v716 = vpack.c.b16 %v707, %v706
      %v717 = vpack.c.b16 %v709, %v708
      %726 = vmatprep.subr.bf16.mxu0 0
      %727 = vmatpush1.bf16.msra.mxu0 %v710
      %728 = vmatprep.subr.bf16.mxu0 0
      %729 = vmatpush1.bf16.msra.mxu0 %v711
      %730 = vmatprep.subr.bf16.mxu0 0
      %731 = vmatpush1.bf16.msra.mxu0 %v712
      %732 = vmatprep.subr.bf16.mxu0 0
      %733 = vmatpush1.bf16.msra.mxu0 %v713
      %734 = vmatprep.subr.bf16.mxu0 0
      %735 = vmatpush1.bf16.msra.mxu0 %v714
      %736 = vmatprep.subr.bf16.mxu0 0
      %737 = vmatpush1.bf16.msra.mxu0 %v715
      %738 = vmatprep.subr.bf16.mxu0 0
      %739 = vmatpush1.bf16.msra.mxu0 %v716
      %740 = vmatprep.subr.bf16.mxu0 0
      %741 = vmatpush1.bf16.msra.mxu0 %v717
      %742 = vmatprep.subr.bf16.mxu0 0
      %743 = vmatpush1.bf16.msra.mxu0 0
      %744 = vmatprep.subr.bf16.mxu0 0
      %745 = vmatpush1.bf16.msra.mxu0 0
      %746 = vmatprep.subr.bf16.mxu0 0
      %747 = vmatpush1.bf16.msra.mxu0 0
      %748 = vmatprep.subr.bf16.mxu0 0
      %749 = vmatpush1.bf16.msra.mxu0 0
      %750 = vmatprep.subr.bf16.mxu0 0
      %751 = vmatpush1.bf16.msra.mxu0 0
      %752 = vmatprep.subr.bf16.mxu0 0
      %753 = vmatpush1.bf16.msra.mxu0 0
      %754 = vmatprep.subr.bf16.mxu0 0
      %755 = vmatpush1.bf16.msra.mxu0 0
      %756 = vmatprep.subr.bf16.mxu0 0
      %757 = vmatpush1.bf16.msra.mxu0 0
      %758 = vmatprep.mubr.bf16.mxu0 0
      %759 = vmatmul.mubr.bf16.gmra.mrb[0].mxu0 %v670
      %v760 = vpop.f32.mrb[0].mxu0
      %v761 = vadd.f32 0.0, %v760
      %v762 = vpop.f32.mrb[0].mxu0
      %v763 = vpop.f32.mrb[0].mxu0
      %v764 = vadd.f32 0.0, %v763
      %v765 = vpop.f32.mrb[0].mxu0
      %766 = vmatprep.mubr.bf16.mxu0 0
      %767 = vmatmul.mubr.bf16.gmra.mrb[0].mxu0 %v671
      %v768 = vpop.f32.mrb[0].mxu0
      %v769 = vadd.f32 0.0, %v768
      %v770 = vpop.f32.mrb[0].mxu0
      %v771 = vpop.f32.mrb[0].mxu0
      %v772 = vadd.f32 0.0, %v771
      %v773 = vpop.f32.mrb[0].mxu0
      %774 = vmatprep.mubr.bf16.mxu0 0
      %775 = vmatmul.mubr.bf16.gmra.mrb[0].mxu0 %v672
      %v776 = vpop.f32.mrb[0].mxu0
      %v777 = vadd.f32 0.0, %v776
      %v778 = vpop.f32.mrb[0].mxu0
      %v779 = vpop.f32.mrb[0].mxu0
      %v780 = vadd.f32 0.0, %v779
      %v781 = vpop.f32.mrb[0].mxu0
      %782 = vmatprep.mubr.bf16.mxu0 0
      %783 = vmatmul.mubr.bf16.gmra.mrb[0].mxu0 %v673
      %v784 = vpop.f32.mrb[0].mxu0
      %v785 = vadd.f32 0.0, %v784
      %v786 = vpop.f32.mrb[0].mxu0
      %v787 = vpop.f32.mrb[0].mxu0
      %v788 = vadd.f32 0.0, %v787
      %v789 = vpop.f32.mrb[0].mxu0
      %790 = vdwg.mxu0
      %v791 = vadd.f32 %v484, %v761
      %v792 = vadd.f32 %v487, %v764
      %v793 = vadd.f32 %v492, %v769
      %v794 = vadd.f32 %v495, %v772
      %v795 = vadd.f32 %v500, %v777
      %v796 = vadd.f32 %v503, %v780
      %v797 = vadd.f32 %v508, %v785
      %v798 = vadd.f32 %v511, %v788
      %s799 = sadd.s32 %s185, 36
      %s800 = smul.addr %s799, 4
      %s801 = scalar_lea.vmem %s177, %s800
      %v802 = vld [vmem:[%s801] sm:$0xf]
      %v803 = vld [vmem:[%s801 + $0x8] sm:$0xf]
      %v804 = vld [vmem:[%s801 + $0x10] sm:$0xf]
      %v805 = vld [vmem:[%s801 + $0x18] sm:$0xf]
      %v806 = vld [vmem:[%s801 + $0x20] sm:$0xf]
      %v807 = vld [vmem:[%s801 + $0x28] sm:$0xf]
      %v808 = vld [vmem:[%s801 + $0x30] sm:$0xf]
      %v809 = vld [vmem:[%s801 + $0x38] sm:$0xf]
      %s810 = scalar_lea.vmem %s1, 192
      %v811 = vld [vmem:[%s810] sm:$0xf]
      %v812 = vld [vmem:[%s810 + $0x4] sm:$0xf]
      %v813 = vld [vmem:[%s810 + $0x8] sm:$0xf]
      %v814 = vld [vmem:[%s810 + $0xc] sm:$0xf]
      %v815 = vld [vmem:[%s810 + $0x10] sm:$0xf]
      %v816 = vld [vmem:[%s810 + $0x14] sm:$0xf]
      %v817 = vld [vmem:[%s810 + $0x18] sm:$0xf]
      %v818 = vld [vmem:[%s810 + $0x1c] sm:$0xf]
      %v819 = vld [vmem:[%s810 + $0x20] sm:$0xf]
      %v820 = vld [vmem:[%s810 + $0x24] sm:$0xf]
      %v821 = vld [vmem:[%s810 + $0x28] sm:$0xf]
      %v822 = vld [vmem:[%s810 + $0x2c] sm:$0xf]
      %v823 = vld [vmem:[%s810 + $0x30] sm:$0xf]
      %v824 = vld [vmem:[%s810 + $0x34] sm:$0xf]
      %v825 = vld [vmem:[%s810 + $0x38] sm:$0xf]
      %v826 = vld [vmem:[%s810 + $0x3c] sm:$0xf]
      %v835 = vunpack.c.l.b16 %v802
      %v836 = vunpack.c.l.b16 %v803
      %v837 = vunpack.c.l.b16 %v804
      %v838 = vunpack.c.l.b16 %v805
      %v839 = vunpack.c.l.b16 %v806
      %v840 = vunpack.c.l.b16 %v807
      %v841 = vunpack.c.l.b16 %v808
      %v842 = vunpack.c.l.b16 %v809
      %v843 = vpack.c.b16 %v836, %v835
      %v844 = vpack.c.b16 %v838, %v837
      %v845 = vpack.c.b16 %v840, %v839
      %v846 = vpack.c.b16 %v842, %v841
      %v867 = vunpack.c.l.b16 %v811
      %v868 = vunpack.c.l.b16 %v812
      %v869 = vunpack.c.l.b16 %v813
      %v870 = vunpack.c.l.b16 %v814
      %v871 = vunpack.c.l.b16 %v815
      %v872 = vunpack.c.l.b16 %v816
      %v873 = vunpack.c.l.b16 %v817
      %v874 = vunpack.c.l.b16 %v818
      %v875 = vunpack.c.l.b16 %v819
      %v876 = vunpack.c.l.b16 %v820
      %v877 = vunpack.c.l.b16 %v821
      %v878 = vunpack.c.l.b16 %v822
      %v879 = vunpack.c.l.b16 %v823
      %v880 = vunpack.c.l.b16 %v824
      %v881 = vunpack.c.l.b16 %v825
      %v882 = vunpack.c.l.b16 %v826
      %v883 = vpack.c.b16 %v868, %v867
      %v884 = vpack.c.b16 %v870, %v869
      %v885 = vpack.c.b16 %v872, %v871
      %v886 = vpack.c.b16 %v874, %v873
      %v887 = vpack.c.b16 %v876, %v875
      %v888 = vpack.c.b16 %v878, %v877
      %v889 = vpack.c.b16 %v880, %v879
      %v890 = vpack.c.b16 %v882, %v881
      %899 = vmatprep.subr.bf16.mxu0 0
      %900 = vmatpush1.bf16.msra.mxu0 %v883
      %901 = vmatprep.subr.bf16.mxu0 0
      %902 = vmatpush1.bf16.msra.mxu0 %v884
      %903 = vmatprep.subr.bf16.mxu0 0
      %904 = vmatpush1.bf16.msra.mxu0 %v885
      %905 = vmatprep.subr.bf16.mxu0 0
      %906 = vmatpush1.bf16.msra.mxu0 %v886
      %907 = vmatprep.subr.bf16.mxu0 0
      %908 = vmatpush1.bf16.msra.mxu0 %v887
      %909 = vmatprep.subr.bf16.mxu0 0
      %910 = vmatpush1.bf16.msra.mxu0 %v888
      %911 = vmatprep.subr.bf16.mxu0 0
      %912 = vmatpush1.bf16.msra.mxu0 %v889
      %913 = vmatprep.subr.bf16.mxu0 0
      %914 = vmatpush1.bf16.msra.mxu0 %v890
      %915 = vmatprep.subr.bf16.mxu0 0
      %916 = vmatpush1.bf16.msra.mxu0 0
      %917 = vmatprep.subr.bf16.mxu0 0
      %918 = vmatpush1.bf16.msra.mxu0 0
      %919 = vmatprep.subr.bf16.mxu0 0
      %920 = vmatpush1.bf16.msra.mxu0 0
      %921 = vmatprep.subr.bf16.mxu0 0
      %922 = vmatpush1.bf16.msra.mxu0 0
      %923 = vmatprep.subr.bf16.mxu0 0
      %924 = vmatpush1.bf16.msra.mxu0 0
      %925 = vmatprep.subr.bf16.mxu0 0
      %926 = vmatpush1.bf16.msra.mxu0 0
      %927 = vmatprep.subr.bf16.mxu0 0
      %928 = vmatpush1.bf16.msra.mxu0 0
      %929 = vmatprep.subr.bf16.mxu0 0
      %930 = vmatpush1.bf16.msra.mxu0 0
      %931 = vmatprep.mubr.bf16.mxu0 0
      %932 = vmatmul.mubr.bf16.gmra.mrb[0].mxu0 %v843
      %v933 = vpop.f32.mrb[0].mxu0
      %v934 = vadd.f32 0.0, %v933
      %v935 = vpop.f32.mrb[0].mxu0
      %v936 = vpop.f32.mrb[0].mxu0
      %v937 = vadd.f32 0.0, %v936
      %v938 = vpop.f32.mrb[0].mxu0
      %939 = vmatprep.mubr.bf16.mxu0 0
      %940 = vmatmul.mubr.bf16.gmra.mrb[0].mxu0 %v844
      %v941 = vpop.f32.mrb[0].mxu0
      %v942 = vadd.f32 0.0, %v941
      %v943 = vpop.f32.mrb[0].mxu0
      %v944 = vpop.f32.mrb[0].mxu0
      %v945 = vadd.f32 0.0, %v944
      %v946 = vpop.f32.mrb[0].mxu0
      %947 = vmatprep.mubr.bf16.mxu0 0
      %948 = vmatmul.mubr.bf16.gmra.mrb[0].mxu0 %v845
      %v949 = vpop.f32.mrb[0].mxu0
      %v950 = vadd.f32 0.0, %v949
      %v951 = vpop.f32.mrb[0].mxu0
      %v952 = vpop.f32.mrb[0].mxu0
      %v953 = vadd.f32 0.0, %v952
      %v954 = vpop.f32.mrb[0].mxu0
      %955 = vmatprep.mubr.bf16.mxu0 0
      %956 = vmatmul.mubr.bf16.gmra.mrb[0].mxu0 %v846
      %v957 = vpop.f32.mrb[0].mxu0
      %v958 = vadd.f32 0.0, %v957
      %v959 = vpop.f32.mrb[0].mxu0
      %v960 = vpop.f32.mrb[0].mxu0
      %v961 = vadd.f32 0.0, %v960
      %v962 = vpop.f32.mrb[0].mxu0
      %963 = vdwg.mxu0
      %v964 = vadd.f32 %v791, %v934
      %v965 = vadd.f32 %v792, %v937
      %v966 = vadd.f32 %v793, %v942
      %v967 = vadd.f32 %v794, %v945
      %v968 = vadd.f32 %v795, %v950
      %v969 = vadd.f32 %v796, %v953
      %v970 = vadd.f32 %v797, %v958
      %v971 = vadd.f32 %v798, %v961
      %s972 = sadd.s32 %s185, 54
      %s973 = smul.addr %s972, 4
      %s974 = scalar_lea.vmem %s177, %s973
      %v975 = vld [vmem:[%s974] sm:$0xf]
      %v976 = vld [vmem:[%s974 + $0x8] sm:$0xf]
      %v977 = vld [vmem:[%s974 + $0x10] sm:$0xf]
      %v978 = vld [vmem:[%s974 + $0x18] sm:$0xf]
      %v979 = vld [vmem:[%s974 + $0x20] sm:$0xf]
      %v980 = vld [vmem:[%s974 + $0x28] sm:$0xf]
      %v981 = vld [vmem:[%s974 + $0x30] sm:$0xf]
      %v982 = vld [vmem:[%s974 + $0x38] sm:$0xf]
      %s983 = scalar_lea.vmem %s1, 256
      %v984 = vld [vmem:[%s983] sm:$0xf]
      %v985 = vld [vmem:[%s983 + $0x4] sm:$0xf]
      %v986 = vld [vmem:[%s983 + $0x8] sm:$0xf]
      %v987 = vld [vmem:[%s983 + $0xc] sm:$0xf]
      %v988 = vld [vmem:[%s983 + $0x10] sm:$0xf]
      %v989 = vld [vmem:[%s983 + $0x14] sm:$0xf]
      %v990 = vld [vmem:[%s983 + $0x18] sm:$0xf]
      %v991 = vld [vmem:[%s983 + $0x1c] sm:$0xf]
      %v992 = vld [vmem:[%s983 + $0x20] sm:$0xf]
      %v993 = vld [vmem:[%s983 + $0x24] sm:$0xf]
      %v994 = vld [vmem:[%s983 + $0x28] sm:$0xf]
      %v995 = vld [vmem:[%s983 + $0x2c] sm:$0xf]
      %v996 = vld [vmem:[%s983 + $0x30] sm:$0xf]
      %v997 = vld [vmem:[%s983 + $0x34] sm:$0xf]
      %v998 = vld [vmem:[%s983 + $0x38] sm:$0xf]
      %v999 = vld [vmem:[%s983 + $0x3c] sm:$0xf]
      %v1008 = vunpack.c.l.b16 %v975
      %v1009 = vunpack.c.l.b16 %v976
      %v1010 = vunpack.c.l.b16 %v977
      %v1011 = vunpack.c.l.b16 %v978
      %v1012 = vunpack.c.l.b16 %v979
      %v1013 = vunpack.c.l.b16 %v980
      %v1014 = vunpack.c.l.b16 %v981
      %v1015 = vunpack.c.l.b16 %v982
      %v1016 = vpack.c.b16 %v1009, %v1008
      %v1017 = vpack.c.b16 %v1011, %v1010
      %v1018 = vpack.c.b16 %v1013, %v1012
      %v1019 = vpack.c.b16 %v1015, %v1014
      %v1040 = vunpack.c.l.b16 %v984
      %v1041 = vunpack.c.l.b16 %v985
      %v1042 = vunpack.c.l.b16 %v986
      %v1043 = vunpack.c.l.b16 %v987
      %v1044 = vunpack.c.l.b16 %v988
      %v1045 = vunpack.c.l.b16 %v989
      %v1046 = vunpack.c.l.b16 %v990
      %v1047 = vunpack.c.l.b16 %v991
      %v1048 = vunpack.c.l.b16 %v992
      %v1049 = vunpack.c.l.b16 %v993
      %v1050 = vunpack.c.l.b16 %v994
      %v1051 = vunpack.c.l.b16 %v995
      %v1052 = vunpack.c.l.b16 %v996
      %v1053 = vunpack.c.l.b16 %v997
      %v1054 = vunpack.c.l.b16 %v998
      %v1055 = vunpack.c.l.b16 %v999
      %v1056 = vpack.c.b16 %v1041, %v1040
      %v1057 = vpack.c.b16 %v1043, %v1042
      %v1058 = vpack.c.b16 %v1045, %v1044
      %v1059 = vpack.c.b16 %v1047, %v1046
      %v1060 = vpack.c.b16 %v1049, %v1048
      %v1061 = vpack.c.b16 %v1051, %v1050
      %v1062 = vpack.c.b16 %v1053, %v1052
      %v1063 = vpack.c.b16 %v1055, %v1054
      %1072 = vmatprep.subr.bf16.mxu0 0
      %1073 = vmatpush1.bf16.msra.mxu0 %v1056
      %1074 = vmatprep.subr.bf16.mxu0 0
      %1075 = vmatpush1.bf16.msra.mxu0 %v1057
      %1076 = vmatprep.subr.bf16.mxu0 0
      %1077 = vmatpush1.bf16.msra.mxu0 %v1058
      %1078 = vmatprep.subr.bf16.mxu0 0
      %1079 = vmatpush1.bf16.msra.mxu0 %v1059
      %1080 = vmatprep.subr.bf16.mxu0 0
      %1081 = vmatpush1.bf16.msra.mxu0 %v1060
      %1082 = vmatprep.subr.bf16.mxu0 0
      %1083 = vmatpush1.bf16.msra.mxu0 %v1061
      %1084 = vmatprep.subr.bf16.mxu0 0
      %1085 = vmatpush1.bf16.msra.mxu0 %v1062
      %1086 = vmatprep.subr.bf16.mxu0 0
      %1087 = vmatpush1.bf16.msra.mxu0 %v1063
      %1088 = vmatprep.subr.bf16.mxu0 0
      %1089 = vmatpush1.bf16.msra.mxu0 0
      %1090 = vmatprep.subr.bf16.mxu0 0
      %1091 = vmatpush1.bf16.msra.mxu0 0
      %1092 = vmatprep.subr.bf16.mxu0 0
      %1093 = vmatpush1.bf16.msra.mxu0 0
      %1094 = vmatprep.subr.bf16.mxu0 0
      %1095 = vmatpush1.bf16.msra.mxu0 0
      %1096 = vmatprep.subr.bf16.mxu0 0
      %1097 = vmatpush1.bf16.msra.mxu0 0
      %1098 = vmatprep.subr.bf16.mxu0 0
      %1099 = vmatpush1.bf16.msra.mxu0 0
      %1100 = vmatprep.subr.bf16.mxu0 0
      %1101 = vmatpush1.bf16.msra.mxu0 0
      %1102 = vmatprep.subr.bf16.mxu0 0
      %1103 = vmatpush1.bf16.msra.mxu0 0
      %1104 = vmatprep.mubr.bf16.mxu0 0
      %1105 = vmatmul.mubr.bf16.gmra.mrb[0].mxu0 %v1016
      %v1106 = vpop.f32.mrb[0].mxu0
      %v1107 = vadd.f32 0.0, %v1106
      %v1108 = vpop.f32.mrb[0].mxu0
      %v1109 = vpop.f32.mrb[0].mxu0
      %v1110 = vadd.f32 0.0, %v1109
      %v1111 = vpop.f32.mrb[0].mxu0
      %1112 = vmatprep.mubr.bf16.mxu0 0
      %1113 = vmatmul.mubr.bf16.gmra.mrb[0].mxu0 %v1017
      %v1114 = vpop.f32.mrb[0].mxu0
      %v1115 = vadd.f32 0.0, %v1114
      %v1116 = vpop.f32.mrb[0].mxu0
      %v1117 = vpop.f32.mrb[0].mxu0
      %v1118 = vadd.f32 0.0, %v1117
      %v1119 = vpop.f32.mrb[0].mxu0
      %1120 = vmatprep.mubr.bf16.mxu0 0
      %1121 = vmatmul.mubr.bf16.gmra.mrb[0].mxu0 %v1018
      %v1122 = vpop.f32.mrb[0].mxu0
      %v1123 = vadd.f32 0.0, %v1122
      %v1124 = vpop.f32.mrb[0].mxu0
      %v1125 = vpop.f32.mrb[0].mxu0
      %v1126 = vadd.f32 0.0, %v1125
      %v1127 = vpop.f32.mrb[0].mxu0
      %1128 = vmatprep.mubr.bf16.mxu0 0
      %1129 = vmatmul.mubr.bf16.gmra.mrb[0].mxu0 %v1019
      %v1130 = vpop.f32.mrb[0].mxu0
      %v1131 = vadd.f32 0.0, %v1130
      %v1132 = vpop.f32.mrb[0].mxu0
      %v1133 = vpop.f32.mrb[0].mxu0
      %v1134 = vadd.f32 0.0, %v1133
      %v1135 = vpop.f32.mrb[0].mxu0
      %1136 = vdwg.mxu0
      %v1137 = vadd.f32 %v964, %v1107
      %v1138 = vadd.f32 %v965, %v1110
      %v1139 = vadd.f32 %v966, %v1115
      %v1140 = vadd.f32 %v967, %v1118
      %v1141 = vadd.f32 %v968, %v1123
      %v1142 = vadd.f32 %v969, %v1126
      %v1143 = vadd.f32 %v970, %v1131
      %v1144 = vadd.f32 %v971, %v1134
      %v1145 = vld [vmem:[%s801] sm:$0xf]
      %v1146 = vld [vmem:[%s801 + $0x4] sm:$0x1]
      %v1147 = vld [vmem:[%s801 + $0x8] sm:$0xf]
      %v1148 = vld [vmem:[%s801 + $0xc] sm:$0x1]
      %v1149 = vld [vmem:[%s801 + $0x10] sm:$0xf]
      %v1150 = vld [vmem:[%s801 + $0x14] sm:$0x1]
      %v1151 = vld [vmem:[%s801 + $0x18] sm:$0xf]
      %v1152 = vld [vmem:[%s801 + $0x1c] sm:$0x1]
      %v1153 = vld [vmem:[%s801 + $0x20] sm:$0xf]
      %v1154 = vld [vmem:[%s801 + $0x24] sm:$0x1]
      %v1155 = vld [vmem:[%s801 + $0x28] sm:$0xf]
      %v1156 = vld [vmem:[%s801 + $0x2c] sm:$0x1]
      %v1157 = vld [vmem:[%s801 + $0x30] sm:$0xf]
      %v1158 = vld [vmem:[%s801 + $0x34] sm:$0x1]
      %v1159 = vld [vmem:[%s801 + $0x38] sm:$0xf]
      %v1160 = vld [vmem:[%s801 + $0x3c] sm:$0x1]
      %v1162 = vshrl.u32 %v1145, 16
      %v1164 = vrot.slane %v1162, 4
      %v1165 = vshll.u32 %v1145, 16
      %v1167 = vrot.slane %v1165, 5
      %v1168 = vor.u32 %v1164, %v1167
      %v1169 = vrot.slane %v1168, 4
      %v1171 = vshll.u32 %v1146, 16
      %v1173 = vrot.slane %v1171, 5
      %v1174 = vsel %vm532, %v1169, %v1173
      %v1176 = vshrl.u32 %v1147, 16
      %v1178 = vrot.slane %v1176, 4
      %v1179 = vshll.u32 %v1147, 16
      %v1181 = vrot.slane %v1179, 5
      %v1182 = vor.u32 %v1178, %v1181
      %v1183 = vrot.slane %v1182, 4
      %v1185 = vshll.u32 %v1148, 16
      %v1187 = vrot.slane %v1185, 5
      %v1188 = vsel %vm532, %v1183, %v1187
      %v1190 = vshrl.u32 %v1149, 16
      %v1192 = vrot.slane %v1190, 4
      %v1193 = vshll.u32 %v1149, 16
      %v1195 = vrot.slane %v1193, 5
      %v1196 = vor.u32 %v1192, %v1195
      %v1197 = vrot.slane %v1196, 4
      %v1199 = vshll.u32 %v1150, 16
      %v1201 = vrot.slane %v1199, 5
      %v1202 = vsel %vm532, %v1197, %v1201
      %v1204 = vshrl.u32 %v1151, 16
      %v1206 = vrot.slane %v1204, 4
      %v1207 = vshll.u32 %v1151, 16
      %v1209 = vrot.slane %v1207, 5
      %v1210 = vor.u32 %v1206, %v1209
      %v1211 = vrot.slane %v1210, 4
      %v1213 = vshll.u32 %v1152, 16
      %v1215 = vrot.slane %v1213, 5
      %v1216 = vsel %vm532, %v1211, %v1215
      %v1218 = vshrl.u32 %v1153, 16
      %v1220 = vrot.slane %v1218, 4
      %v1221 = vshll.u32 %v1153, 16
      %v1223 = vrot.slane %v1221, 5
      %v1224 = vor.u32 %v1220, %v1223
      %v1225 = vrot.slane %v1224, 4
      %v1227 = vshll.u32 %v1154, 16
      %v1229 = vrot.slane %v1227, 5
      %v1230 = vsel %vm532, %v1225, %v1229
      %v1232 = vshrl.u32 %v1155, 16
      %v1234 = vrot.slane %v1232, 4
      %v1235 = vshll.u32 %v1155, 16
      %v1237 = vrot.slane %v1235, 5
      %v1238 = vor.u32 %v1234, %v1237
      %v1239 = vrot.slane %v1238, 4
      %v1241 = vshll.u32 %v1156, 16
      %v1243 = vrot.slane %v1241, 5
      %v1244 = vsel %vm532, %v1239, %v1243
      %v1246 = vshrl.u32 %v1157, 16
      %v1248 = vrot.slane %v1246, 4
      %v1249 = vshll.u32 %v1157, 16
      %v1251 = vrot.slane %v1249, 5
      %v1252 = vor.u32 %v1248, %v1251
      %v1253 = vrot.slane %v1252, 4
      %v1255 = vshll.u32 %v1158, 16
      %v1257 = vrot.slane %v1255, 5
      %v1258 = vsel %vm532, %v1253, %v1257
      %v1260 = vshrl.u32 %v1159, 16
      %v1262 = vrot.slane %v1260, 4
      %v1263 = vshll.u32 %v1159, 16
      %v1265 = vrot.slane %v1263, 5
      %v1266 = vor.u32 %v1262, %v1265
      %v1267 = vrot.slane %v1266, 4
      %v1269 = vshll.u32 %v1160, 16
      %v1271 = vrot.slane %v1269, 5
      %v1272 = vsel %vm532, %v1267, %v1271
      %s1273 = scalar_lea.vmem %s1, 320
      %v1274 = vld [vmem:[%s1273] sm:$0xf]
      %v1275 = vld [vmem:[%s1273 + $0x4] sm:$0xf]
      %v1276 = vld [vmem:[%s1273 + $0x8] sm:$0xf]
      %v1277 = vld [vmem:[%s1273 + $0xc] sm:$0xf]
      %v1278 = vld [vmem:[%s1273 + $0x10] sm:$0xf]
      %v1279 = vld [vmem:[%s1273 + $0x14] sm:$0xf]
      %v1280 = vld [vmem:[%s1273 + $0x18] sm:$0xf]
      %v1281 = vld [vmem:[%s1273 + $0x1c] sm:$0xf]
      %v1282 = vld [vmem:[%s1273 + $0x20] sm:$0xf]
      %v1283 = vld [vmem:[%s1273 + $0x24] sm:$0xf]
      %v1284 = vld [vmem:[%s1273 + $0x28] sm:$0xf]
      %v1285 = vld [vmem:[%s1273 + $0x2c] sm:$0xf]
      %v1286 = vld [vmem:[%s1273 + $0x30] sm:$0xf]
      %v1287 = vld [vmem:[%s1273 + $0x34] sm:$0xf]
      %v1288 = vld [vmem:[%s1273 + $0x38] sm:$0xf]
      %v1289 = vld [vmem:[%s1273 + $0x3c] sm:$0xf]
      %v1290 = vunpack.c.l.b16 %v1174
      %v1291 = vunpack.c.l.b16 %v1188
      %v1292 = vunpack.c.l.b16 %v1202
      %v1293 = vunpack.c.l.b16 %v1216
      %v1294 = vunpack.c.l.b16 %v1230
      %v1295 = vunpack.c.l.b16 %v1244
      %v1296 = vunpack.c.l.b16 %v1258
      %v1297 = vunpack.c.l.b16 %v1272
      %v1298 = vpack.c.b16 %v1291, %v1290
      %v1299 = vpack.c.b16 %v1293, %v1292
      %v1300 = vpack.c.b16 %v1295, %v1294
      %v1301 = vpack.c.b16 %v1297, %v1296
      %v1322 = vunpack.c.l.b16 %v1274
      %v1323 = vunpack.c.l.b16 %v1275
      %v1324 = vunpack.c.l.b16 %v1276
      %v1325 = vunpack.c.l.b16 %v1277
      %v1326 = vunpack.c.l.b16 %v1278
      %v1327 = vunpack.c.l.b16 %v1279
      %v1328 = vunpack.c.l.b16 %v1280
      %v1329 = vunpack.c.l.b16 %v1281
      %v1330 = vunpack.c.l.b16 %v1282
      %v1331 = vunpack.c.l.b16 %v1283
      %v1332 = vunpack.c.l.b16 %v1284
      %v1333 = vunpack.c.l.b16 %v1285
      %v1334 = vunpack.c.l.b16 %v1286
      %v1335 = vunpack.c.l.b16 %v1287
      %v1336 = vunpack.c.l.b16 %v1288
      %v1337 = vunpack.c.l.b16 %v1289
      %v1338 = vpack.c.b16 %v1323, %v1322
      %v1339 = vpack.c.b16 %v1325, %v1324
      %v1340 = vpack.c.b16 %v1327, %v1326
      %v1341 = vpack.c.b16 %v1329, %v1328
      %v1342 = vpack.c.b16 %v1331, %v1330
      %v1343 = vpack.c.b16 %v1333, %v1332
      %v1344 = vpack.c.b16 %v1335, %v1334
      %v1345 = vpack.c.b16 %v1337, %v1336
      %1354 = vmatprep.subr.bf16.mxu0 0
      %1355 = vmatpush1.bf16.msra.mxu0 %v1338
      %1356 = vmatprep.subr.bf16.mxu0 0
      %1357 = vmatpush1.bf16.msra.mxu0 %v1339
      %1358 = vmatprep.subr.bf16.mxu0 0
      %1359 = vmatpush1.bf16.msra.mxu0 %v1340
      %1360 = vmatprep.subr.bf16.mxu0 0
      %1361 = vmatpush1.bf16.msra.mxu0 %v1341
      %1362 = vmatprep.subr.bf16.mxu0 0
      %1363 = vmatpush1.bf16.msra.mxu0 %v1342
      %1364 = vmatprep.subr.bf16.mxu0 0
      %1365 = vmatpush1.bf16.msra.mxu0 %v1343
      %1366 = vmatprep.subr.bf16.mxu0 0
      %1367 = vmatpush1.bf16.msra.mxu0 %v1344
      %1368 = vmatprep.subr.bf16.mxu0 0
      %1369 = vmatpush1.bf16.msra.mxu0 %v1345
      %1370 = vmatprep.subr.bf16.mxu0 0
      %1371 = vmatpush1.bf16.msra.mxu0 0
      %1372 = vmatprep.subr.bf16.mxu0 0
      %1373 = vmatpush1.bf16.msra.mxu0 0
      %1374 = vmatprep.subr.bf16.mxu0 0
      %1375 = vmatpush1.bf16.msra.mxu0 0
      %1376 = vmatprep.subr.bf16.mxu0 0
      %1377 = vmatpush1.bf16.msra.mxu0 0
      %1378 = vmatprep.subr.bf16.mxu0 0
      %1379 = vmatpush1.bf16.msra.mxu0 0
      %1380 = vmatprep.subr.bf16.mxu0 0
      %1381 = vmatpush1.bf16.msra.mxu0 0
      %1382 = vmatprep.subr.bf16.mxu0 0
      %1383 = vmatpush1.bf16.msra.mxu0 0
      %1384 = vmatprep.subr.bf16.mxu0 0
      %1385 = vmatpush1.bf16.msra.mxu0 0
      %1386 = vmatprep.mubr.bf16.mxu0 0
      %1387 = vmatmul.mubr.bf16.gmra.mrb[0].mxu0 %v1298
      %v1388 = vpop.f32.mrb[0].mxu0
      %v1389 = vadd.f32 0.0, %v1388
      %v1390 = vpop.f32.mrb[0].mxu0
      %v1391 = vpop.f32.mrb[0].mxu0
      %v1392 = vadd.f32 0.0, %v1391
      %v1393 = vpop.f32.mrb[0].mxu0
      %1394 = vmatprep.mubr.bf16.mxu0 0
      %1395 = vmatmul.mubr.bf16.gmra.mrb[0].mxu0 %v1299
      %v1396 = vpop.f32.mrb[0].mxu0
      %v1397 = vadd.f32 0.0, %v1396
      %v1398 = vpop.f32.mrb[0].mxu0
      %v1399 = vpop.f32.mrb[0].mxu0
      %v1400 = vadd.f32 0.0, %v1399
      %v1401 = vpop.f32.mrb[0].mxu0
      %1402 = vmatprep.mubr.bf16.mxu0 0
      %1403 = vmatmul.mubr.bf16.gmra.mrb[0].mxu0 %v1300
      %v1404 = vpop.f32.mrb[0].mxu0
      %v1405 = vadd.f32 0.0, %v1404
      %v1406 = vpop.f32.mrb[0].mxu0
      %v1407 = vpop.f32.mrb[0].mxu0
      %v1408 = vadd.f32 0.0, %v1407
      %v1409 = vpop.f32.mrb[0].mxu0
      %1410 = vmatprep.mubr.bf16.mxu0 0
      %1411 = vmatmul.mubr.bf16.gmra.mrb[0].mxu0 %v1301
      %v1412 = vpop.f32.mrb[0].mxu0
      %v1413 = vadd.f32 0.0, %v1412
      %v1414 = vpop.f32.mrb[0].mxu0
      %v1415 = vpop.f32.mrb[0].mxu0
      %v1416 = vadd.f32 0.0, %v1415
      %v1417 = vpop.f32.mrb[0].mxu0
      %1418 = vdwg.mxu0
      %v1419 = vadd.f32 %v1137, %v1389
      %v1420 = vadd.f32 %v1138, %v1392
      %v1421 = vadd.f32 %v1139, %v1397
      %v1422 = vadd.f32 %v1140, %v1400
      %v1423 = vadd.f32 %v1141, %v1405
      %v1424 = vadd.f32 %v1142, %v1408
      %v1425 = vadd.f32 %v1143, %v1413
      %v1426 = vadd.f32 %v1144, %v1416
      %s1427 = sadd.s32 %s184, 1
      %s1428 = smul.u32 %s1427, 2
      %s1429 = smul.addr %s1428, 4
      %s1430 = scalar_lea.vmem %s177, %s1429
      %v1431 = vld [vmem:[%s1430] sm:$0xf]
      %v1432 = vld [vmem:[%s1430 + $0x8] sm:$0xf]
      %v1433 = vld [vmem:[%s1430 + $0x10] sm:$0xf]
      %v1434 = vld [vmem:[%s1430 + $0x18] sm:$0xf]
      %v1435 = vld [vmem:[%s1430 + $0x20] sm:$0xf]
      %v1436 = vld [vmem:[%s1430 + $0x28] sm:$0xf]
      %v1437 = vld [vmem:[%s1430 + $0x30] sm:$0xf]
      %v1438 = vld [vmem:[%s1430 + $0x38] sm:$0xf]
      %s1439 = scalar_lea.vmem %s1, 384
      %v1440 = vld [vmem:[%s1439] sm:$0xf]
      %v1441 = vld [vmem:[%s1439 + $0x4] sm:$0xf]
      %v1442 = vld [vmem:[%s1439 + $0x8] sm:$0xf]
      %v1443 = vld [vmem:[%s1439 + $0xc] sm:$0xf]
      %v1444 = vld [vmem:[%s1439 + $0x10] sm:$0xf]
      %v1445 = vld [vmem:[%s1439 + $0x14] sm:$0xf]
      %v1446 = vld [vmem:[%s1439 + $0x18] sm:$0xf]
      %v1447 = vld [vmem:[%s1439 + $0x1c] sm:$0xf]
      %v1448 = vld [vmem:[%s1439 + $0x20] sm:$0xf]
      %v1449 = vld [vmem:[%s1439 + $0x24] sm:$0xf]
      %v1450 = vld [vmem:[%s1439 + $0x28] sm:$0xf]
      %v1451 = vld [vmem:[%s1439 + $0x2c] sm:$0xf]
      %v1452 = vld [vmem:[%s1439 + $0x30] sm:$0xf]
      %v1453 = vld [vmem:[%s1439 + $0x34] sm:$0xf]
      %v1454 = vld [vmem:[%s1439 + $0x38] sm:$0xf]
      %v1455 = vld [vmem:[%s1439 + $0x3c] sm:$0xf]
      %v1464 = vunpack.c.l.b16 %v1431
      %v1465 = vunpack.c.l.b16 %v1432
      %v1466 = vunpack.c.l.b16 %v1433
      %v1467 = vunpack.c.l.b16 %v1434
      %v1468 = vunpack.c.l.b16 %v1435
      %v1469 = vunpack.c.l.b16 %v1436
      %v1470 = vunpack.c.l.b16 %v1437
      %v1471 = vunpack.c.l.b16 %v1438
      %v1472 = vpack.c.b16 %v1465, %v1464
      %v1473 = vpack.c.b16 %v1467, %v1466
      %v1474 = vpack.c.b16 %v1469, %v1468
      %v1475 = vpack.c.b16 %v1471, %v1470
      %v1496 = vunpack.c.l.b16 %v1440
      %v1497 = vunpack.c.l.b16 %v1441
      %v1498 = vunpack.c.l.b16 %v1442
      %v1499 = vunpack.c.l.b16 %v1443
      %v1500 = vunpack.c.l.b16 %v1444
      %v1501 = vunpack.c.l.b16 %v1445
      %v1502 = vunpack.c.l.b16 %v1446
      %v1503 = vunpack.c.l.b16 %v1447
      %v1504 = vunpack.c.l.b16 %v1448
      %v1505 = vunpack.c.l.b16 %v1449
      %v1506 = vunpack.c.l.b16 %v1450
      %v1507 = vunpack.c.l.b16 %v1451
      %v1508 = vunpack.c.l.b16 %v1452
      %v1509 = vunpack.c.l.b16 %v1453
      %v1510 = vunpack.c.l.b16 %v1454
      %v1511 = vunpack.c.l.b16 %v1455
      %v1512 = vpack.c.b16 %v1497, %v1496
      %v1513 = vpack.c.b16 %v1499, %v1498
      %v1514 = vpack.c.b16 %v1501, %v1500
      %v1515 = vpack.c.b16 %v1503, %v1502
      %v1516 = vpack.c.b16 %v1505, %v1504
      %v1517 = vpack.c.b16 %v1507, %v1506
      %v1518 = vpack.c.b16 %v1509, %v1508
      %v1519 = vpack.c.b16 %v1511, %v1510
      %1528 = vmatprep.subr.bf16.mxu0 0
      %1529 = vmatpush1.bf16.msra.mxu0 %v1512
      %1530 = vmatprep.subr.bf16.mxu0 0
      %1531 = vmatpush1.bf16.msra.mxu0 %v1513
      %1532 = vmatprep.subr.bf16.mxu0 0
      %1533 = vmatpush1.bf16.msra.mxu0 %v1514
      %1534 = vmatprep.subr.bf16.mxu0 0
      %1535 = vmatpush1.bf16.msra.mxu0 %v1515
      %1536 = vmatprep.subr.bf16.mxu0 0
      %1537 = vmatpush1.bf16.msra.mxu0 %v1516
      %1538 = vmatprep.subr.bf16.mxu0 0
      %1539 = vmatpush1.bf16.msra.mxu0 %v1517
      %1540 = vmatprep.subr.bf16.mxu0 0
      %1541 = vmatpush1.bf16.msra.mxu0 %v1518
      %1542 = vmatprep.subr.bf16.mxu0 0
      %1543 = vmatpush1.bf16.msra.mxu0 %v1519
      %1544 = vmatprep.subr.bf16.mxu0 0
      %1545 = vmatpush1.bf16.msra.mxu0 0
      %1546 = vmatprep.subr.bf16.mxu0 0
      %1547 = vmatpush1.bf16.msra.mxu0 0
      %1548 = vmatprep.subr.bf16.mxu0 0
      %1549 = vmatpush1.bf16.msra.mxu0 0
      %1550 = vmatprep.subr.bf16.mxu0 0
      %1551 = vmatpush1.bf16.msra.mxu0 0
      %1552 = vmatprep.subr.bf16.mxu0 0
      %1553 = vmatpush1.bf16.msra.mxu0 0
      %1554 = vmatprep.subr.bf16.mxu0 0
      %1555 = vmatpush1.bf16.msra.mxu0 0
      %1556 = vmatprep.subr.bf16.mxu0 0
      %1557 = vmatpush1.bf16.msra.mxu0 0
      %1558 = vmatprep.subr.bf16.mxu0 0
      %1559 = vmatpush1.bf16.msra.mxu0 0
      %1560 = vmatprep.mubr.bf16.mxu0 0
      %1561 = vmatmul.mubr.bf16.gmra.mrb[0].mxu0 %v1472
      %v1562 = vpop.f32.mrb[0].mxu0
      %v1563 = vadd.f32 0.0, %v1562
      %v1564 = vpop.f32.mrb[0].mxu0
      %v1565 = vpop.f32.mrb[0].mxu0
      %v1566 = vadd.f32 0.0, %v1565
      %v1567 = vpop.f32.mrb[0].mxu0
      %1568 = vmatprep.mubr.bf16.mxu0 0
      %1569 = vmatmul.mubr.bf16.gmra.mrb[0].mxu0 %v1473
      %v1570 = vpop.f32.mrb[0].mxu0
      %v1571 = vadd.f32 0.0, %v1570
      %v1572 = vpop.f32.mrb[0].mxu0
      %v1573 = vpop.f32.mrb[0].mxu0
      %v1574 = vadd.f32 0.0, %v1573
      %v1575 = vpop.f32.mrb[0].mxu0
      %1576 = vmatprep.mubr.bf16.mxu0 0
      %1577 = vmatmul.mubr.bf16.gmra.mrb[0].mxu0 %v1474
      %v1578 = vpop.f32.mrb[0].mxu0
      %v1579 = vadd.f32 0.0, %v1578
      %v1580 = vpop.f32.mrb[0].mxu0
      %v1581 = vpop.f32.mrb[0].mxu0
      %v1582 = vadd.f32 0.0, %v1581
      %v1583 = vpop.f32.mrb[0].mxu0
      %1584 = vmatprep.mubr.bf16.mxu0 0
      %1585 = vmatmul.mubr.bf16.gmra.mrb[0].mxu0 %v1475
      %v1586 = vpop.f32.mrb[0].mxu0
      %v1587 = vadd.f32 0.0, %v1586
      %v1588 = vpop.f32.mrb[0].mxu0
      %v1589 = vpop.f32.mrb[0].mxu0
      %v1590 = vadd.f32 0.0, %v1589
      %v1591 = vpop.f32.mrb[0].mxu0
      %1592 = vdwg.mxu0
      %v1593 = vadd.f32 %v1419, %v1563
      %v1594 = vadd.f32 %v1420, %v1566
      %v1595 = vadd.f32 %v1421, %v1571
      %v1596 = vadd.f32 %v1422, %v1574
      %v1597 = vadd.f32 %v1423, %v1579
      %v1598 = vadd.f32 %v1424, %v1582
      %v1599 = vadd.f32 %v1425, %v1587
      %v1600 = vadd.f32 %v1426, %v1590
      %s1601 = sadd.s32 %s1428, 18
      %s1602 = smul.addr %s1601, 4
      %s1603 = scalar_lea.vmem %s177, %s1602
      %v1604 = vld [vmem:[%s1603] sm:$0xf]
      %v1605 = vld [vmem:[%s1603 + $0x8] sm:$0xf]
      %v1606 = vld [vmem:[%s1603 + $0x10] sm:$0xf]
      %v1607 = vld [vmem:[%s1603 + $0x18] sm:$0xf]
      %v1608 = vld [vmem:[%s1603 + $0x20] sm:$0xf]
      %v1609 = vld [vmem:[%s1603 + $0x28] sm:$0xf]
      %v1610 = vld [vmem:[%s1603 + $0x30] sm:$0xf]
      %v1611 = vld [vmem:[%s1603 + $0x38] sm:$0xf]
      %s1612 = scalar_lea.vmem %s1, 448
      %v1613 = vld [vmem:[%s1612] sm:$0xf]
      %v1614 = vld [vmem:[%s1612 + $0x4] sm:$0xf]
      %v1615 = vld [vmem:[%s1612 + $0x8] sm:$0xf]
      %v1616 = vld [vmem:[%s1612 + $0xc] sm:$0xf]
      %v1617 = vld [vmem:[%s1612 + $0x10] sm:$0xf]
      %v1618 = vld [vmem:[%s1612 + $0x14] sm:$0xf]
      %v1619 = vld [vmem:[%s1612 + $0x18] sm:$0xf]
      %v1620 = vld [vmem:[%s1612 + $0x1c] sm:$0xf]
      %v1621 = vld [vmem:[%s1612 + $0x20] sm:$0xf]
      %v1622 = vld [vmem:[%s1612 + $0x24] sm:$0xf]
      %v1623 = vld [vmem:[%s1612 + $0x28] sm:$0xf]
      %v1624 = vld [vmem:[%s1612 + $0x2c] sm:$0xf]
      %v1625 = vld [vmem:[%s1612 + $0x30] sm:$0xf]
      %v1626 = vld [vmem:[%s1612 + $0x34] sm:$0xf]
      %v1627 = vld [vmem:[%s1612 + $0x38] sm:$0xf]
      %v1628 = vld [vmem:[%s1612 + $0x3c] sm:$0xf]
      %v1637 = vunpack.c.l.b16 %v1604
      %v1638 = vunpack.c.l.b16 %v1605
      %v1639 = vunpack.c.l.b16 %v1606
      %v1640 = vunpack.c.l.b16 %v1607
      %v1641 = vunpack.c.l.b16 %v1608
      %v1642 = vunpack.c.l.b16 %v1609
      %v1643 = vunpack.c.l.b16 %v1610
      %v1644 = vunpack.c.l.b16 %v1611
      %v1645 = vpack.c.b16 %v1638, %v1637
      %v1646 = vpack.c.b16 %v1640, %v1639
      %v1647 = vpack.c.b16 %v1642, %v1641
      %v1648 = vpack.c.b16 %v1644, %v1643
      %v1669 = vunpack.c.l.b16 %v1613
      %v1670 = vunpack.c.l.b16 %v1614
      %v1671 = vunpack.c.l.b16 %v1615
      %v1672 = vunpack.c.l.b16 %v1616
      %v1673 = vunpack.c.l.b16 %v1617
      %v1674 = vunpack.c.l.b16 %v1618
      %v1675 = vunpack.c.l.b16 %v1619
      %v1676 = vunpack.c.l.b16 %v1620
      %v1677 = vunpack.c.l.b16 %v1621
      %v1678 = vunpack.c.l.b16 %v1622
      %v1679 = vunpack.c.l.b16 %v1623
      %v1680 = vunpack.c.l.b16 %v1624
      %v1681 = vunpack.c.l.b16 %v1625
      %v1682 = vunpack.c.l.b16 %v1626
      %v1683 = vunpack.c.l.b16 %v1627
      %v1684 = vunpack.c.l.b16 %v1628
      %v1685 = vpack.c.b16 %v1670, %v1669
      %v1686 = vpack.c.b16 %v1672, %v1671
      %v1687 = vpack.c.b16 %v1674, %v1673
      %v1688 = vpack.c.b16 %v1676, %v1675
      %v1689 = vpack.c.b16 %v1678, %v1677
      %v1690 = vpack.c.b16 %v1680, %v1679
      %v1691 = vpack.c.b16 %v1682, %v1681
      %v1692 = vpack.c.b16 %v1684, %v1683
      %1701 = vmatprep.subr.bf16.mxu0 0
      %1702 = vmatpush1.bf16.msra.mxu0 %v1685
      %1703 = vmatprep.subr.bf16.mxu0 0
      %1704 = vmatpush1.bf16.msra.mxu0 %v1686
      %1705 = vmatprep.subr.bf16.mxu0 0
      %1706 = vmatpush1.bf16.msra.mxu0 %v1687
      %1707 = vmatprep.subr.bf16.mxu0 0
      %1708 = vmatpush1.bf16.msra.mxu0 %v1688
      %1709 = vmatprep.subr.bf16.mxu0 0
      %1710 = vmatpush1.bf16.msra.mxu0 %v1689
      %1711 = vmatprep.subr.bf16.mxu0 0
      %1712 = vmatpush1.bf16.msra.mxu0 %v1690
      %1713 = vmatprep.subr.bf16.mxu0 0
      %1714 = vmatpush1.bf16.msra.mxu0 %v1691
      %1715 = vmatprep.subr.bf16.mxu0 0
      %1716 = vmatpush1.bf16.msra.mxu0 %v1692
      %1717 = vmatprep.subr.bf16.mxu0 0
      %1718 = vmatpush1.bf16.msra.mxu0 0
      %1719 = vmatprep.subr.bf16.mxu0 0
      %1720 = vmatpush1.bf16.msra.mxu0 0
      %1721 = vmatprep.subr.bf16.mxu0 0
      %1722 = vmatpush1.bf16.msra.mxu0 0
      %1723 = vmatprep.subr.bf16.mxu0 0
      %1724 = vmatpush1.bf16.msra.mxu0 0
      %1725 = vmatprep.subr.bf16.mxu0 0
      %1726 = vmatpush1.bf16.msra.mxu0 0
      %1727 = vmatprep.subr.bf16.mxu0 0
      %1728 = vmatpush1.bf16.msra.mxu0 0
      %1729 = vmatprep.subr.bf16.mxu0 0
      %1730 = vmatpush1.bf16.msra.mxu0 0
      %1731 = vmatprep.subr.bf16.mxu0 0
      %1732 = vmatpush1.bf16.msra.mxu0 0
      %1733 = vmatprep.mubr.bf16.mxu0 0
      %1734 = vmatmul.mubr.bf16.gmra.mrb[0].mxu0 %v1645
      %v1735 = vpop.f32.mrb[0].mxu0
      %v1736 = vadd.f32 0.0, %v1735
      %v1737 = vpop.f32.mrb[0].mxu0
      %v1738 = vpop.f32.mrb[0].mxu0
      %v1739 = vadd.f32 0.0, %v1738
      %v1740 = vpop.f32.mrb[0].mxu0
      %1741 = vmatprep.mubr.bf16.mxu0 0
      %1742 = vmatmul.mubr.bf16.gmra.mrb[0].mxu0 %v1646
      %v1743 = vpop.f32.mrb[0].mxu0
      %v1744 = vadd.f32 0.0, %v1743
      %v1745 = vpop.f32.mrb[0].mxu0
      %v1746 = vpop.f32.mrb[0].mxu0
      %v1747 = vadd.f32 0.0, %v1746
      %v1748 = vpop.f32.mrb[0].mxu0
      %1749 = vmatprep.mubr.bf16.mxu0 0
      %1750 = vmatmul.mubr.bf16.gmra.mrb[0].mxu0 %v1647
      %v1751 = vpop.f32.mrb[0].mxu0
      %v1752 = vadd.f32 0.0, %v1751
      %v1753 = vpop.f32.mrb[0].mxu0
      %v1754 = vpop.f32.mrb[0].mxu0
      %v1755 = vadd.f32 0.0, %v1754
      %v1756 = vpop.f32.mrb[0].mxu0
      %1757 = vmatprep.mubr.bf16.mxu0 0
      %1758 = vmatmul.mubr.bf16.gmra.mrb[0].mxu0 %v1648
      %v1759 = vpop.f32.mrb[0].mxu0
      %v1760 = vadd.f32 0.0, %v1759
      %v1761 = vpop.f32.mrb[0].mxu0
      %v1762 = vpop.f32.mrb[0].mxu0
      %v1763 = vadd.f32 0.0, %v1762
      %v1764 = vpop.f32.mrb[0].mxu0
      %1765 = vdwg.mxu0
      %v1766 = vadd.f32 %v1593, %v1736
      %v1767 = vadd.f32 %v1594, %v1739
      %v1768 = vadd.f32 %v1595, %v1744
      %v1769 = vadd.f32 %v1596, %v1747
      %v1770 = vadd.f32 %v1597, %v1752
      %v1771 = vadd.f32 %v1598, %v1755
      %v1772 = vadd.f32 %v1599, %v1760
      %v1773 = vadd.f32 %v1600, %v1763
      %v1774 = vld [vmem:[%s1430] sm:$0xf]
      %v1775 = vld [vmem:[%s1430 + $0x4] sm:$0x1]
      %v1776 = vld [vmem:[%s1430 + $0x8] sm:$0xf]
      %v1777 = vld [vmem:[%s1430 + $0xc] sm:$0x1]
      %v1778 = vld [vmem:[%s1430 + $0x10] sm:$0xf]
      %v1779 = vld [vmem:[%s1430 + $0x14] sm:$0x1]
      %v1780 = vld [vmem:[%s1430 + $0x18] sm:$0xf]
      %v1781 = vld [vmem:[%s1430 + $0x1c] sm:$0x1]
      %v1782 = vld [vmem:[%s1430 + $0x20] sm:$0xf]
      %v1783 = vld [vmem:[%s1430 + $0x24] sm:$0x1]
      %v1784 = vld [vmem:[%s1430 + $0x28] sm:$0xf]
      %v1785 = vld [vmem:[%s1430 + $0x2c] sm:$0x1]
      %v1786 = vld [vmem:[%s1430 + $0x30] sm:$0xf]
      %v1787 = vld [vmem:[%s1430 + $0x34] sm:$0x1]
      %v1788 = vld [vmem:[%s1430 + $0x38] sm:$0xf]
      %v1789 = vld [vmem:[%s1430 + $0x3c] sm:$0x1]
      %v1791 = vshrl.u32 %v1774, 16
      %v1793 = vrot.slane %v1791, 4
      %v1794 = vshll.u32 %v1774, 16
      %v1796 = vrot.slane %v1794, 5
      %v1797 = vor.u32 %v1793, %v1796
      %v1798 = vrot.slane %v1797, 4
      %v1800 = vshll.u32 %v1775, 16
      %v1802 = vrot.slane %v1800, 5
      %v1803 = vsel %vm532, %v1798, %v1802
      %v1805 = vshrl.u32 %v1776, 16
      %v1807 = vrot.slane %v1805, 4
      %v1808 = vshll.u32 %v1776, 16
      %v1810 = vrot.slane %v1808, 5
      %v1811 = vor.u32 %v1807, %v1810
      %v1812 = vrot.slane %v1811, 4
      %v1814 = vshll.u32 %v1777, 16
      %v1816 = vrot.slane %v1814, 5
      %v1817 = vsel %vm532, %v1812, %v1816
      %v1819 = vshrl.u32 %v1778, 16
      %v1821 = vrot.slane %v1819, 4
      %v1822 = vshll.u32 %v1778, 16
      %v1824 = vrot.slane %v1822, 5
      %v1825 = vor.u32 %v1821, %v1824
      %v1826 = vrot.slane %v1825, 4
      %v1828 = vshll.u32 %v1779, 16
      %v1830 = vrot.slane %v1828, 5
      %v1831 = vsel %vm532, %v1826, %v1830
      %v1833 = vshrl.u32 %v1780, 16
      %v1835 = vrot.slane %v1833, 4
      %v1836 = vshll.u32 %v1780, 16
      %v1838 = vrot.slane %v1836, 5
      %v1839 = vor.u32 %v1835, %v1838
      %v1840 = vrot.slane %v1839, 4
      %v1842 = vshll.u32 %v1781, 16
      %v1844 = vrot.slane %v1842, 5
      %v1845 = vsel %vm532, %v1840, %v1844
      %v1847 = vshrl.u32 %v1782, 16
      %v1849 = vrot.slane %v1847, 4
      %v1850 = vshll.u32 %v1782, 16
      %v1852 = vrot.slane %v1850, 5
      %v1853 = vor.u32 %v1849, %v1852
      %v1854 = vrot.slane %v1853, 4
      %v1856 = vshll.u32 %v1783, 16
      %v1858 = vrot.slane %v1856, 5
      %v1859 = vsel %vm532, %v1854, %v1858
      %v1861 = vshrl.u32 %v1784, 16
      %v1863 = vrot.slane %v1861, 4
      %v1864 = vshll.u32 %v1784, 16
      %v1866 = vrot.slane %v1864, 5
      %v1867 = vor.u32 %v1863, %v1866
      %v1868 = vrot.slane %v1867, 4
      %v1870 = vshll.u32 %v1785, 16
      %v1872 = vrot.slane %v1870, 5
      %v1873 = vsel %vm532, %v1868, %v1872
      %v1875 = vshrl.u32 %v1786, 16
      %v1877 = vrot.slane %v1875, 4
      %v1878 = vshll.u32 %v1786, 16
      %v1880 = vrot.slane %v1878, 5
      %v1881 = vor.u32 %v1877, %v1880
      %v1882 = vrot.slane %v1881, 4
      %v1884 = vshll.u32 %v1787, 16
      %v1886 = vrot.slane %v1884, 5
      %v1887 = vsel %vm532, %v1882, %v1886
      %v1889 = vshrl.u32 %v1788, 16
      %v1891 = vrot.slane %v1889, 4
      %v1892 = vshll.u32 %v1788, 16
      %v1894 = vrot.slane %v1892, 5
      %v1895 = vor.u32 %v1891, %v1894
      %v1896 = vrot.slane %v1895, 4
      %v1898 = vshll.u32 %v1789, 16
      %v1900 = vrot.slane %v1898, 5
      %v1901 = vsel %vm532, %v1896, %v1900
      %s1902 = scalar_lea.vmem %s1, 512
      %v1903 = vld [vmem:[%s1902] sm:$0xf]
      %v1904 = vld [vmem:[%s1902 + $0x4] sm:$0xf]
      %v1905 = vld [vmem:[%s1902 + $0x8] sm:$0xf]
      %v1906 = vld [vmem:[%s1902 + $0xc] sm:$0xf]
      %v1907 = vld [vmem:[%s1902 + $0x10] sm:$0xf]
      %v1908 = vld [vmem:[%s1902 + $0x14] sm:$0xf]
      %v1909 = vld [vmem:[%s1902 + $0x18] sm:$0xf]
      %v1910 = vld [vmem:[%s1902 + $0x1c] sm:$0xf]
      %v1911 = vld [vmem:[%s1902 + $0x20] sm:$0xf]
      %v1912 = vld [vmem:[%s1902 + $0x24] sm:$0xf]
      %v1913 = vld [vmem:[%s1902 + $0x28] sm:$0xf]
      %v1914 = vld [vmem:[%s1902 + $0x2c] sm:$0xf]
      %v1915 = vld [vmem:[%s1902 + $0x30] sm:$0xf]
      %v1916 = vld [vmem:[%s1902 + $0x34] sm:$0xf]
      %v1917 = vld [vmem:[%s1902 + $0x38] sm:$0xf]
      %v1918 = vld [vmem:[%s1902 + $0x3c] sm:$0xf]
      %v1919 = vunpack.c.l.b16 %v1803
      %v1920 = vunpack.c.l.b16 %v1817
      %v1921 = vunpack.c.l.b16 %v1831
      %v1922 = vunpack.c.l.b16 %v1845
      %v1923 = vunpack.c.l.b16 %v1859
      %v1924 = vunpack.c.l.b16 %v1873
      %v1925 = vunpack.c.l.b16 %v1887
      %v1926 = vunpack.c.l.b16 %v1901
      %v1927 = vpack.c.b16 %v1920, %v1919
      %v1928 = vpack.c.b16 %v1922, %v1921
      %v1929 = vpack.c.b16 %v1924, %v1923
      %v1930 = vpack.c.b16 %v1926, %v1925
      %v1951 = vunpack.c.l.b16 %v1903
      %v1952 = vunpack.c.l.b16 %v1904
      %v1953 = vunpack.c.l.b16 %v1905
      %v1954 = vunpack.c.l.b16 %v1906
      %v1955 = vunpack.c.l.b16 %v1907
      %v1956 = vunpack.c.l.b16 %v1908
      %v1957 = vunpack.c.l.b16 %v1909
      %v1958 = vunpack.c.l.b16 %v1910
      %v1959 = vunpack.c.l.b16 %v1911
      %v1960 = vunpack.c.l.b16 %v1912
      %v1961 = vunpack.c.l.b16 %v1913
      %v1962 = vunpack.c.l.b16 %v1914
      %v1963 = vunpack.c.l.b16 %v1915
      %v1964 = vunpack.c.l.b16 %v1916
      %v1965 = vunpack.c.l.b16 %v1917
      %v1966 = vunpack.c.l.b16 %v1918
      %v1967 = vpack.c.b16 %v1952, %v1951
      %v1968 = vpack.c.b16 %v1954, %v1953
      %v1969 = vpack.c.b16 %v1956, %v1955
      %v1970 = vpack.c.b16 %v1958, %v1957
      %v1971 = vpack.c.b16 %v1960, %v1959
      %v1972 = vpack.c.b16 %v1962, %v1961
      %v1973 = vpack.c.b16 %v1964, %v1963
      %v1974 = vpack.c.b16 %v1966, %v1965
      %1983 = vmatprep.subr.bf16.mxu0 0
      %1984 = vmatpush1.bf16.msra.mxu0 %v1967
      %1985 = vmatprep.subr.bf16.mxu0 0
      %1986 = vmatpush1.bf16.msra.mxu0 %v1968
      %1987 = vmatprep.subr.bf16.mxu0 0
      %1988 = vmatpush1.bf16.msra.mxu0 %v1969
      %1989 = vmatprep.subr.bf16.mxu0 0
      %1990 = vmatpush1.bf16.msra.mxu0 %v1970
      %1991 = vmatprep.subr.bf16.mxu0 0
      %1992 = vmatpush1.bf16.msra.mxu0 %v1971
      %1993 = vmatprep.subr.bf16.mxu0 0
      %1994 = vmatpush1.bf16.msra.mxu0 %v1972
      %1995 = vmatprep.subr.bf16.mxu0 0
      %1996 = vmatpush1.bf16.msra.mxu0 %v1973
      %1997 = vmatprep.subr.bf16.mxu0 0
      %1998 = vmatpush1.bf16.msra.mxu0 %v1974
      %1999 = vmatprep.subr.bf16.mxu0 0
      %2000 = vmatpush1.bf16.msra.mxu0 0
      %2001 = vmatprep.subr.bf16.mxu0 0
      %2002 = vmatpush1.bf16.msra.mxu0 0
      %2003 = vmatprep.subr.bf16.mxu0 0
      %2004 = vmatpush1.bf16.msra.mxu0 0
      %2005 = vmatprep.subr.bf16.mxu0 0
      %2006 = vmatpush1.bf16.msra.mxu0 0
      %2007 = vmatprep.subr.bf16.mxu0 0
      %2008 = vmatpush1.bf16.msra.mxu0 0
      %2009 = vmatprep.subr.bf16.mxu0 0
      %2010 = vmatpush1.bf16.msra.mxu0 0
      %2011 = vmatprep.subr.bf16.mxu0 0
      %2012 = vmatpush1.bf16.msra.mxu0 0
      %2013 = vmatprep.subr.bf16.mxu0 0
      %2014 = vmatpush1.bf16.msra.mxu0 0
      %2015 = vmatprep.mubr.bf16.mxu0 0
      %2016 = vmatmul.mubr.bf16.gmra.mrb[0].mxu0 %v1927
      %v2017 = vpop.f32.mrb[0].mxu0
      %v2018 = vadd.f32 0.0, %v2017
      %v2019 = vpop.f32.mrb[0].mxu0
      %v2020 = vpop.f32.mrb[0].mxu0
      %v2021 = vadd.f32 0.0, %v2020
      %v2022 = vpop.f32.mrb[0].mxu0
      %2023 = vmatprep.mubr.bf16.mxu0 0
      %2024 = vmatmul.mubr.bf16.gmra.mrb[0].mxu0 %v1928
      %v2025 = vpop.f32.mrb[0].mxu0
      %v2026 = vadd.f32 0.0, %v2025
      %v2027 = vpop.f32.mrb[0].mxu0
      %v2028 = vpop.f32.mrb[0].mxu0
      %v2029 = vadd.f32 0.0, %v2028
      %v2030 = vpop.f32.mrb[0].mxu0
      %2031 = vmatprep.mubr.bf16.mxu0 0
      %2032 = vmatmul.mubr.bf16.gmra.mrb[0].mxu0 %v1929
      %v2033 = vpop.f32.mrb[0].mxu0
      %v2034 = vadd.f32 0.0, %v2033
      %v2035 = vpop.f32.mrb[0].mxu0
      %v2036 = vpop.f32.mrb[0].mxu0
      %v2037 = vadd.f32 0.0, %v2036
      %v2038 = vpop.f32.mrb[0].mxu0
      %2039 = vmatprep.mubr.bf16.mxu0 0
      %2040 = vmatmul.mubr.bf16.gmra.mrb[0].mxu0 %v1930
      %v2041 = vpop.f32.mrb[0].mxu0
      %v2042 = vadd.f32 0.0, %v2041
      %v2043 = vpop.f32.mrb[0].mxu0
      %v2044 = vpop.f32.mrb[0].mxu0
      %v2045 = vadd.f32 0.0, %v2044
      %v2046 = vpop.f32.mrb[0].mxu0
      %2047 = vdwg.mxu0
      %v2048 = vadd.f32 %v1766, %v2018
      %v2049 = vadd.f32 %v1767, %v2021
      %v2050 = vadd.f32 %v1768, %v2026
      %v2051 = vadd.f32 %v1769, %v2029
      %v2052 = vadd.f32 %v1770, %v2034
      %v2053 = vadd.f32 %v1771, %v2037
      %v2054 = vadd.f32 %v1772, %v2042
      %v2055 = vadd.f32 %v1773, %v2045
      %v2056 = vld [vmem:[%s2] sm:$0x1]
      %v2058 = vlaneseq
      %v2059 = vshrl.u32 %v2058, 7
      %v2060 = vsub.s32 0, %v2059
      %v2061 = vrot.slane %v2056, %v2060
      %v2063 = vadd.f32 %v2048, %v2061
      %v2064 = vadd.f32 %v2049, %v2061
      %v2065 = vadd.f32 %v2050, %v2061
      %v2066 = vadd.f32 %v2051, %v2061
      %v2067 = vadd.f32 %v2052, %v2061
      %v2068 = vadd.f32 %v2053, %v2061
      %v2069 = vadd.f32 %v2054, %v2061
      %v2070 = vadd.f32 %v2055, %v2061
      %v2071 = vmax.f32 %v2063, 0.0
      %v2072 = vmax.f32 %v2064, 0.0
      %v2073 = vmax.f32 %v2065, 0.0
      %v2074 = vmax.f32 %v2066, 0.0
      %v2075 = vmax.f32 %v2067, 0.0
      %v2076 = vmax.f32 %v2068, 0.0
      %v2077 = vmax.f32 %v2069, 0.0
      %v2078 = vmax.f32 %v2070, 0.0
      %v2079 = vpack.c.bf16 %v2071, %v2071
      %v2080 = vpack.c.bf16 %v2072, %v2072
      %v2081 = vpack.c.bf16 %v2073, %v2073
      %v2082 = vpack.c.bf16 %v2074, %v2074
      %v2083 = vpack.c.bf16 %v2075, %v2075
      %v2084 = vpack.c.bf16 %v2076, %v2076
      %v2085 = vpack.c.bf16 %v2077, %v2077
      %v2086 = vpack.c.bf16 %v2078, %v2078
      %p2087 = scmp.eq.s32.totalorder %s19, 0
      // Predicated region
      $region33: #{basic_block_forward.2} parent=31 // pred_check
        %p2088 = pneg %p2087
      $region34: #{basic_block_forward.2} parent=31 // pred_check_branch
        %2090 = sbr.rel (%p2088) target = $region36
      $region35: #{basic_block_forward.2} parent=31 // pred_region
        %2091 = vst [vmem:[%s182] sm:$0xf] 0
        %2092 = vst [vmem:[%s182 + $0x4] sm:$0x1] 0
        %s2093 = scalar_lea.vmem %s182, 72
        %2094 = vst [vmem:[%s2093] sm:$0xf] 0
        %2095 = vst [vmem:[%s2093 + $0x4] sm:$0x1] 0
      $region36: #{basic_block_forward.2} parent=31 // pred_fallthru
        _
      %v2097 = vshrl.u32 %v2079, 16
      %v2099 = vrot.slane %v2097, 7
      %v2100 = vshll.u32 %v2079, 16
      %v2102 = vor.u32 %v2099, %v2100
      %v2104 = vshrl.u32 %v2080, 16
      %v2106 = vrot.slane %v2104, 7
      %v2107 = vshll.u32 %v2080, 16
      %v2109 = vor.u32 %v2106, %v2107
      %v2111 = vshrl.u32 %v2081, 16
      %v2113 = vrot.slane %v2111, 7
      %v2114 = vshll.u32 %v2081, 16
      %v2116 = vor.u32 %v2113, %v2114
      %v2118 = vshrl.u32 %v2082, 16
      %v2120 = vrot.slane %v2118, 7
      %v2121 = vshll.u32 %v2082, 16
      %v2123 = vor.u32 %v2120, %v2121
      %v2125 = vshrl.u32 %v2083, 16
      %v2127 = vrot.slane %v2125, 7
      %v2128 = vshll.u32 %v2083, 16
      %v2130 = vor.u32 %v2127, %v2128
      %v2132 = vshrl.u32 %v2084, 16
      %v2134 = vrot.slane %v2132, 7
      %v2135 = vshll.u32 %v2084, 16
      %v2137 = vor.u32 %v2134, %v2135
      %v2139 = vshrl.u32 %v2085, 16
      %v2141 = vrot.slane %v2139, 7
      %v2142 = vshll.u32 %v2085, 16
      %v2144 = vor.u32 %v2141, %v2142
      %v2146 = vshrl.u32 %v2086, 16
      %v2148 = vrot.slane %v2146, 7
      %v2149 = vshll.u32 %v2086, 16
      %v2151 = vor.u32 %v2148, %v2149
      %vm2160 = vcmask 1040384
      %vm2161 = vsmask.f32 256
      %vm2162 = vmand %vm2160, %vm2161
      %v2163 = vsel %vm2162, 0, %v2102
      %v2164 = vsel %vm2162, 0, %v2109
      %v2165 = vsel %vm2162, 0, %v2116
      %v2166 = vsel %vm2162, 0, %v2123
      %v2167 = vsel %vm2162, 0, %v2130
      %v2168 = vsel %vm2162, 0, %v2137
      %v2169 = vsel %vm2162, 0, %v2144
      %v2170 = vsel %vm2162, 0, %v2151
      %vm2171 = vcmask 1044480
      %vm2172 = vsmask.f32 4352
      %vm2173 = vmand %vm2171, %vm2172
      %v2174 = vsel %vm2173, %v2163, 0
      %v2175 = vsel %vm2173, %v2164, 0
      %v2176 = vsel %vm2173, %v2165, 0
      %v2177 = vsel %vm2173, %v2166, 0
      %v2178 = vsel %vm2173, %v2167, 0
      %v2179 = vsel %vm2173, %v2168, 0
      %v2180 = vsel %vm2173, %v2169, 0
      %v2181 = vsel %vm2173, %v2170, 0
      %v2190 = vunpack.c.l.b16 %v2174
      %v2191 = vunpack.c.h.b16 %v2174
      %v2192 = vunpack.c.l.b16 %v2175
      %v2193 = vunpack.c.h.b16 %v2175
      %v2194 = vunpack.c.l.b16 %v2176
      %v2195 = vunpack.c.h.b16 %v2176
      %v2196 = vunpack.c.l.b16 %v2177
      %v2197 = vunpack.c.h.b16 %v2177
      %v2198 = vunpack.c.l.b16 %v2178
      %v2199 = vunpack.c.h.b16 %v2178
      %v2200 = vunpack.c.l.b16 %v2179
      %v2201 = vunpack.c.h.b16 %v2179
      %v2202 = vunpack.c.l.b16 %v2180
      %v2203 = vunpack.c.h.b16 %v2180
      %v2204 = vunpack.c.l.b16 %v2181
      %v2205 = vunpack.c.h.b16 %v2181
      %v2206 = vpack.c.b16 %v2190, %v2190
      %v2207 = vpack.c.b16 %v2191, %v2191
      %v2208 = vpack.c.b16 %v2192, %v2192
      %v2209 = vpack.c.b16 %v2193, %v2193
      %v2210 = vpack.c.b16 %v2194, %v2194
      %v2211 = vpack.c.b16 %v2195, %v2195
      %v2212 = vpack.c.b16 %v2196, %v2196
      %v2213 = vpack.c.b16 %v2197, %v2197
      %v2214 = vpack.c.b16 %v2198, %v2198
      %v2215 = vpack.c.b16 %v2199, %v2199
      %v2216 = vpack.c.b16 %v2200, %v2200
      %v2217 = vpack.c.b16 %v2201, %v2201
      %v2218 = vpack.c.b16 %v2202, %v2202
      %v2219 = vpack.c.b16 %v2203, %v2203
      %v2220 = vpack.c.b16 %v2204, %v2204
      %v2221 = vpack.c.b16 %v2205, %v2205
      %s2238 = smul.addr %s1428, 4
      %s2239 = scalar_lea.vmem %s182, %s2238
      %2240 = vst [vmem:[%s2239] sm:$0xf] %v2206
      %2241 = vst [vmem:[%s2239 + $0x4] sm:$0x1] %v2207
      %2242 = vst [vmem:[%s2239 + $0x8] sm:$0xf] %v2208
      %2243 = vst [vmem:[%s2239 + $0xc] sm:$0x1] %v2209
      %2244 = vst [vmem:[%s2239 + $0x10] sm:$0xf] %v2210
      %2245 = vst [vmem:[%s2239 + $0x14] sm:$0x1] %v2211
      %2246 = vst [vmem:[%s2239 + $0x18] sm:$0xf] %v2212
      %2247 = vst [vmem:[%s2239 + $0x1c] sm:$0x1] %v2213
      %2248 = vst [vmem:[%s2239 + $0x20] sm:$0xf] %v2214
      %2249 = vst [vmem:[%s2239 + $0x24] sm:$0x1] %v2215
      %2250 = vst [vmem:[%s2239 + $0x28] sm:$0xf] %v2216
      %2251 = vst [vmem:[%s2239 + $0x2c] sm:$0x1] %v2217
      %2252 = vst [vmem:[%s2239 + $0x30] sm:$0xf] %v2218
      %2253 = vst [vmem:[%s2239 + $0x34] sm:$0x1] %v2219
      %2254 = vst [vmem:[%s2239 + $0x38] sm:$0xf] %v2220
      %2255 = vst [vmem:[%s2239 + $0x3c] sm:$0x1] %v2221
      %p2256 = scmp.lt.s32.totalorder %s18, 1
      %s2257 = scalar_select %p2256, %s18, 1
      %s2258 = smul.addr %s2257, 20
      %s2259 = smul.addr %s2258, 4
      %s2260 = scalar_lea.vmem %s3, %s2259
      // Predicated region
      $region37: #{basic_block_forward.2} parent=31 // pred_check
        %p2261 = pneg %p112
      $region38: #{basic_block_forward.2} parent=31 // pred_check_branch
        %2263 = sbr.rel (%p2261) target = $region40
      $region39: #{basic_block_forward.2} parent=31 // pred_region
        _
      $region40: #{basic_block_forward.2} parent=31 // pred_fallthru
        _
    $region32: #{basic_block_forward.2} parent=5 // pred_fallthru
      _
    %p2264 = scmp.le.s32.totalorder 2, %s9
    // Predicated region
    $region41: #{basic_block_forward.2} parent=5 // pred_check
      %p2265 = pneg %p2264
    $region42: #{basic_block_forward.2} parent=5 // pred_check_branch
      %2267 = sbr.rel (%p2265) target = $region44
    $region43: #{basic_block_forward.2} parent=5 // pred_region
      %s2268 = ssub.s32 %s9, 2
      // Predicated region
      $region45: #{basic_block_forward.2} parent=43 // pred_check
        %p2269 = pneg %p118
      $region46: #{basic_block_forward.2} parent=43 // pred_check_branch
        %2271 = sbr.rel (%p2269) target = $region48
      $region47: #{basic_block_forward.2} parent=43 // pred_region
        %p2272 = scmp.lt.s32.totalorder %s20, 1
        %s2273 = scalar_select %p2272, %s20, 1
        %s2274 = smul.addr %s2273, 20
        %s2275 = smul.addr %s2274, 4
        %s2276 = scalar_lea.vmem %s3, %s2275
      $region48: #{basic_block_forward.2} parent=43 // pred_fallthru
        _
    $region44: #{basic_block_forward.2} parent=5 // pred_fallthru
      _
  $region6: #{basic_block_forward.2} parent=0 // loop_footer
    %s13 = sadd.s32 1, %s9
  $region7: #{basic_block_forward.2} parent=0 // loop_footer_branch
    %8 = sbr.rel target = $region3
  $region8: #{basic_block_forward.2} parent=0 // loop_exit
    _

// kernel: basic_block_forward.3
$region0: #{basic_block_forward.3}
  #allocation0 [shape = 'u32[]', space=smem, size = 0x4, offset = 0x4, fixed_abs, tag = 'smem constant byte address 0x4 - core index']
  #allocation1 [shape = 'u32[144,128]{1,0:T(1,128)}', space=vmem, size = 0x12000, scoped, tag = 'internal scratch']
  %s0 = inlined_call_operand.vmem [shape: bf16[2,10,10,128], index: 0, kind: input, shape index: {}]
  %s1 = inlined_call_operand.vmem [shape: bf16[9,128,128], index: 1, kind: input, shape index: {}]
  %s2 = inlined_call_operand.vmem [shape: f32[1,128], index: 2, kind: input, shape index: {}]
  %s3 = inlined_call_operand.vmem [shape: bf16[2,8,8,128], index: 3, kind: input, shape index: {}]
  %s4 = inlined_call_operand.vmem [shape: bf16[128,128], index: 4, kind: input, shape index: {}]
  %s5 = inlined_call_operand.vmem [shape: f32[1,128], index: 5, kind: input, shape index: {}]
  %s6 = inlined_call_operand.vmem [shape: bf16[2,8,8,128], index: 6, kind: output, shape index: {}]
  %s7 = sld [smem:[#allocation0]]
  $region57: #{basic_block_forward.3} parent=0
    _
  %s9 = ssub.s32 1, %s7
  %s10 = scalar_select 0, %s9, %s7
  loop: start=0, step=1, limit=4
  $region2: #{basic_block_forward.3} parent=0 // loop_pre_header
    _
  $region3: #{basic_block_forward.3} parent=0 // loop_header
    %s12 = sphi 0, %s16
    %p13 = scmp.ge.s32.totalorder %s12, 4
    %s19 = sphi 0, %s31
    %s20 = sphi 0, %s27
    %s21 = sphi 0, %s19
    %s22 = sphi 0, %s20
    %s23 = sphi 0, %s21
    %s24 = sphi 0, %s22
    %s34 = sphi 0, %s36
    %s37 = sphi 0, %s34
    %s38 = sphi 0, %s37
    %s54 = sphi 0, %s38
    %s58 = sphi 0, %s58
    %s60 = sphi 0, %s58
    %s61 = sphi 0, %s60
    %s75 = sphi 0, %s61
    %s79 = sphi 0, %s79
    %s81 = sphi 0, %s79
    %s82 = sphi 0, %s81
    %s96 = sphi 0, %s82
    %s104 = sphi 0, %s106
    %s107 = sphi 0, %s104
    %s108 = sphi 0, %s107
    %s124 = sphi 0, %s108
    %s128 = sphi 0, %s128
    %s130 = sphi 0, %s128
    %s131 = sphi 0, %s130
    %s145 = sphi 0, %s131
    %s149 = sphi 0, %s149
    %s151 = sphi 0, %s149
    %s152 = sphi 0, %s151
    %s166 = sphi 0, %s152
    %s174 = sphi 0, %s176
    %s177 = sphi 0, %s174
    %s178 = sphi 0, %s177
    %s194 = sphi 0, %s178
  $region4: #{basic_block_forward.3} parent=0 // loop_header_branch
    %15 = sbr.rel (%p13) target = $region8
  $region5: #{basic_block_forward.3} parent=0 // loop_body
    %s17 = ssub.s32 %s12, 1
    %s18 = ssub.s32 %s12, 2
    %s25 = sadd.s32 1, %s20
    %p26 = scmp.ge.s32.totalorder %s25, 1
    %s27 = scalar_select %p26, 0, %s25
    %s28 = sadd.s32 1, %s19
    %s29 = scalar_select %p26, %s28, %s19
    %p30 = scmp.ge.s32.totalorder %s29, 2
    %s31 = scalar_select %p30, 0, %s29
    %s32 = ssub.s32 %s19, %s31
    %p33 = scmp.eq.s32.totalorder %s32, 0
    %s35 = sadd.s32 %s34, 1
    %s36 = scalar_select %p33, %s34, %s35
    %p39 = pneg %p33
    %p40 = scmp.eq.s32.totalorder %s12, 1
    %p41 = por %p39, %p40
    %p42 = scmp.ne.s32.totalorder %s34, %s37
    %p43 = scmp.eq.s32.totalorder %s12, 0
    %p44 = por %p42, %p43
    %p45 = scmp.ne.s32.totalorder %s34, %s37
    %p46 = scmp.eq.s32.totalorder %s17, 1
    %p47 = por %p45, %p46
    %p48 = scmp.ne.s32.totalorder %s37, %s38
    %p49 = scmp.eq.s32.totalorder %s17, 0
    %p50 = por %p48, %p49
    %p51 = scmp.ne.s32.totalorder %s37, %s38
    %p52 = scmp.eq.s32.totalorder %s18, 1
    %p53 = por %p51, %p52
    %p55 = scmp.ne.s32.totalorder %s38, %s54
    %p56 = scmp.eq.s32.totalorder %s18, 0
    %p57 = por %p55, %p56
    %s59 = sadd.s32 %s58, 1
    %p62 = scmp.eq.s32.totalorder %s12, 1
    %p63 = scmp.ne.s32.totalorder %s58, %s60
    %p64 = scmp.eq.s32.totalorder %s12, 0
    %p65 = por %p63, %p64
    %p66 = scmp.ne.s32.totalorder %s58, %s60
    %p67 = scmp.eq.s32.totalorder %s17, 1
    %p68 = por %p66, %p67
    %p69 = scmp.ne.s32.totalorder %s60, %s61
    %p70 = scmp.eq.s32.totalorder %s17, 0
    %p71 = por %p69, %p70
    %p72 = scmp.ne.s32.totalorder %s60, %s61
    %p73 = scmp.eq.s32.totalorder %s18, 1
    %p74 = por %p72, %p73
    %p76 = scmp.ne.s32.totalorder %s61, %s75
    %p77 = scmp.eq.s32.totalorder %s18, 0
    %p78 = por %p76, %p77
    %s80 = sadd.s32 %s79, 1
    %p83 = scmp.eq.s32.totalorder %s12, 1
    %p84 = scmp.ne.s32.totalorder %s79, %s81
    %p85 = scmp.eq.s32.totalorder %s12, 0
    %p86 = por %p84, %p85
    %p87 = scmp.ne.s32.totalorder %s79, %s81
    %p88 = scmp.eq.s32.totalorder %s17, 1
    %p89 = por %p87, %p88
    %p90 = scmp.ne.s32.totalorder %s81, %s82
    %p91 = scmp.eq.s32.totalorder %s17, 0
    %p92 = por %p90, %p91
    %p93 = scmp.ne.s32.totalorder %s81, %s82
    %p94 = scmp.eq.s32.totalorder %s18, 1
    %p95 = por %p93, %p94
    %p97 = scmp.ne.s32.totalorder %s82, %s96
    %p98 = scmp.eq.s32.totalorder %s18, 0
    %p99 = por %p97, %p98
    %s100 = ssub.s32 %s19, %s31
    %s101 = ssub.s32 %s20, %s27
    %s102 = sor.u32 %s100, %s101
    %p103 = scmp.eq.s32.totalorder %s102, 0
    %s105 = sadd.s32 %s104, 1
    %s106 = scalar_select %p103, %s104, %s105
    %p109 = pneg %p103
    %p110 = scmp.eq.s32.totalorder %s12, 1
    %p111 = por %p109, %p110
    %p112 = scmp.ne.s32.totalorder %s104, %s107
    %p113 = scmp.eq.s32.totalorder %s12, 0
    %p114 = por %p112, %p113
    %p115 = scmp.ne.s32.totalorder %s104, %s107
    %p116 = scmp.eq.s32.totalorder %s17, 1
    %p117 = por %p115, %p116
    %p118 = scmp.ne.s32.totalorder %s107, %s108
    %p119 = scmp.eq.s32.totalorder %s17, 0
    %p120 = por %p118, %p119
    %p121 = scmp.ne.s32.totalorder %s107, %s108
    %p122 = scmp.eq.s32.totalorder %s18, 1
    %p123 = por %p121, %p122
    %p125 = scmp.ne.s32.totalorder %s108, %s124
    %p126 = scmp.eq.s32.totalorder %s18, 0
    %p127 = por %p125, %p126
    %s129 = sadd.s32 %s128, 1
    %p132 = scmp.eq.s32.totalorder %s12, 1
    %p133 = scmp.ne.s32.totalorder %s128, %s130
    %p134 = scmp.eq.s32.totalorder %s12, 0
    %p135 = por %p133, %p134
    %p136 = scmp.ne.s32.totalorder %s128, %s130
    %p137 = scmp.eq.s32.totalorder %s17, 1
    %p138 = por %p136, %p137
    %p139 = scmp.ne.s32.totalorder %s130, %s131
    %p140 = scmp.eq.s32.totalorder %s17, 0
    %p141 = por %p139, %p140
    %p142 = scmp.ne.s32.totalorder %s130, %s131
    %p143 = scmp.eq.s32.totalorder %s18, 1
    %p144 = por %p142, %p143
    %p146 = scmp.ne.s32.totalorder %s131, %s145
    %p147 = scmp.eq.s32.totalorder %s18, 0
    %p148 = por %p146, %p147
    %s150 = sadd.s32 %s149, 1
    %p153 = scmp.eq.s32.totalorder %s12, 1
    %p154 = scmp.ne.s32.totalorder %s149, %s151
    %p155 = scmp.eq.s32.totalorder %s12, 0
    %p156 = por %p154, %p155
    %p157 = scmp.ne.s32.totalorder %s149, %s151
    %p158 = scmp.eq.s32.totalorder %s17, 1
    %p159 = por %p157, %p158
    %p160 = scmp.ne.s32.totalorder %s151, %s152
    %p161 = scmp.eq.s32.totalorder %s17, 0
    %p162 = por %p160, %p161
    %p163 = scmp.ne.s32.totalorder %s151, %s152
    %p164 = scmp.eq.s32.totalorder %s18, 1
    %p165 = por %p163, %p164
    %p167 = scmp.ne.s32.totalorder %s152, %s166
    %p168 = scmp.eq.s32.totalorder %s18, 0
    %p169 = por %p167, %p168
    %s170 = ssub.s32 %s19, %s31
    %s171 = ssub.s32 %s20, %s27
    %s172 = sor.u32 %s170, %s171
    %p173 = scmp.eq.s32.totalorder %s172, 0
    %s175 = sadd.s32 %s174, 1
    %s176 = scalar_select %p173, %s174, %s175
    %p179 = pneg %p173
    %p180 = scmp.eq.s32.totalorder %s12, 1
    %p181 = por %p179, %p180
    %p182 = scmp.ne.s32.totalorder %s174, %s177
    %p183 = scmp.eq.s32.totalorder %s12, 0
    %p184 = por %p182, %p183
    %p185 = scmp.ne.s32.totalorder %s174, %s177
    %p186 = scmp.eq.s32.totalorder %s17, 1
    %p187 = por %p185, %p186
    %p188 = scmp.ne.s32.totalorder %s177, %s178
    %p189 = scmp.eq.s32.totalorder %s17, 0
    %p190 = por %p188, %p189
    %p191 = scmp.ne.s32.totalorder %s177, %s178
    %p192 = scmp.eq.s32.totalorder %s18, 1
    %p193 = por %p191, %p192
    %p195 = scmp.ne.s32.totalorder %s178, %s194
    %p196 = scmp.eq.s32.totalorder %s18, 0
    %p197 = por %p195, %p196
    %p198 = scmp.le.s32.totalorder 1, %s12
    %p199 = scmp.lt.s32.totalorder %s12, 3
    %p200 = pnand %p198, %p199
    %p201 = pneg %p200
    // Predicated region
    $region9: #{basic_block_forward.3} parent=5 // pred_check
      _
    $region10: #{basic_block_forward.3} parent=5 // pred_check_branch
      %203 = sbr.rel (%p200) target = $region12
    $region11: #{basic_block_forward.3} parent=5 // pred_region
      %s204 = ssub.s32 %s12, 1
      // Predicated region
      $region13: #{basic_block_forward.3} parent=11 // pred_check
        %p205 = pneg %p71
      $region14: #{basic_block_forward.3} parent=11 // pred_check_branch
        %207 = sbr.rel (%p205) target = $region16
      $region15: #{basic_block_forward.3} parent=11 // pred_region
        _
      $region16: #{basic_block_forward.3} parent=11 // pred_fallthru
        _
      // Predicated region
      $region17: #{basic_block_forward.3} parent=11 // pred_check
        %p208 = pneg %p92
      $region18: #{basic_block_forward.3} parent=11 // pred_check_branch
        %210 = sbr.rel (%p208) target = $region20
      $region19: #{basic_block_forward.3} parent=11 // pred_region
        _
      $region20: #{basic_block_forward.3} parent=11 // pred_fallthru
        _
      // Predicated region
      $region21: #{basic_block_forward.3} parent=11 // pred_check
        %p211 = pneg %p141
      $region22: #{basic_block_forward.3} parent=11 // pred_check_branch
        %213 = sbr.rel (%p211) target = $region24
      $region23: #{basic_block_forward.3} parent=11 // pred_region
        _
      $region24: #{basic_block_forward.3} parent=11 // pred_fallthru
        _
      // Predicated region
      $region25: #{basic_block_forward.3} parent=11 // pred_check
        %p214 = pneg %p162
      $region26: #{basic_block_forward.3} parent=11 // pred_check_branch
        %216 = sbr.rel (%p214) target = $region28
      $region27: #{basic_block_forward.3} parent=11 // pred_region
        _
      $region28: #{basic_block_forward.3} parent=11 // pred_fallthru
        _
    $region12: #{basic_block_forward.3} parent=5 // pred_fallthru
      _
    %p217 = scmp.lt.s32.totalorder %s12, 2
    // Predicated region
    $region29: #{basic_block_forward.3} parent=5 // pred_check
      %p218 = pneg %p217
    $region30: #{basic_block_forward.3} parent=5 // pred_check_branch
      %220 = sbr.rel (%p218) target = $region32
    $region31: #{basic_block_forward.3} parent=5 // pred_region
      // Predicated region
      $region33: #{basic_block_forward.3} parent=31 // pred_check
        %p221 = pneg %p44
      $region34: #{basic_block_forward.3} parent=31 // pred_check_branch
        %223 = sbr.rel (%p221) target = $region36
      $region35: #{basic_block_forward.3} parent=31 // pred_region
        %p224 = scmp.lt.s32.totalorder %s19, 1
        %s225 = scalar_select %p224, %s19, 1
        %s226 = smul.addr %s225, 20
        %s227 = smul.addr %s226, 4
        %s228 = scalar_lea.vmem %s0, %s227
      $region36: #{basic_block_forward.3} parent=31 // pred_fallthru
        _
      // Predicated region
      $region37: #{basic_block_forward.3} parent=31 // pred_check
        %p229 = pneg %p114
      $region38: #{basic_block_forward.3} parent=31 // pred_check_branch
        %231 = sbr.rel (%p229) target = $region40
      $region39: #{basic_block_forward.3} parent=31 // pred_region
        %s232 = smul.u32 8, %s20
        %p233 = scmp.lt.s32.totalorder %s19, 1
        %s234 = scalar_select %p233, %s19, 1
        %p235 = scmp.lt.s32.totalorder %s232, 7
        %s236 = scalar_select %p235, %s232, 7
        %s237 = smul.addr %s234, 8
        %s238 = sadd.s32 %s236, %s237
        %s239 = smul.addr %s238, 4
        %s240 = scalar_lea.vmem %s3, %s239
        %s241 = smul.u32 8, %s20
      $region40: #{basic_block_forward.3} parent=31 // pred_fallthru
        _
    $region32: #{basic_block_forward.3} parent=5 // pred_fallthru
      _
    %p242 = scmp.le.s32.totalorder 1, %s12
    %p243 = scmp.lt.s32.totalorder %s12, 3
    %p244 = pnand %p242, %p243
    %p245 = pneg %p244
    // Predicated region
    $region41: #{basic_block_forward.3} parent=5 // pred_check
      _
    $region42: #{basic_block_forward.3} parent=5 // pred_check_branch
      %247 = sbr.rel (%p244) target = $region44
    $region43: #{basic_block_forward.3} parent=5 // pred_region
      %s248 = ssub.s32 %s12, 1
      %p249 = scmp.lt.s32.totalorder %s21, 1
      %s250 = scalar_select %p249, %s21, 1
      %s251 = smul.addr %s250, 20
      %s252 = smul.addr %s251, 4
      %s253 = scalar_lea.vmem %s0, %s252
      %p254 = pneg %p50
      %p255 = pneg %p47
      %p256 = pneg %p71
      %p257 = pneg %p68
      %p258 = pneg %p92
      %p259 = pneg %p89
      %s260 = smul.u32 8, %s22
      %p261 = scmp.lt.s32.totalorder %s21, 1
      %s262 = scalar_select %p261, %s21, 1
      %p263 = scmp.lt.s32.totalorder %s260, 7
      %s264 = scalar_select %p263, %s260, 7
      %s265 = smul.addr %s262, 8
      %s266 = sadd.s32 %s264, %s265
      %s267 = smul.addr %s266, 4
      %s268 = scalar_lea.vmem %s3, %s267
      %p269 = pneg %p120
      %p270 = pneg %p117
      %p271 = pneg %p141
      %p272 = pneg %p138
      %p273 = pneg %p162
      %p274 = pneg %p159
      %p275 = pneg %p190
      %p276 = pneg %p187
      %s277 = smul.u32 8, %s22
      %p278 = scmp.lt.s32.totalorder %s21, 1
      %s279 = scalar_select %p278, %s21, 1
      %p280 = scmp.lt.s32.totalorder %s277, 7
      %s281 = scalar_select %p280, %s277, 7
      %s282 = smul.addr %s279, 8
      %s283 = sadd.s32 %s281, %s282
      %s284 = smul.addr %s283, 4
      %s285 = scalar_lea.vmem %s6, %s284
      %p286 = scmp.lt.s32.totalorder %s21, 1
      %s287 = scalar_select %p286, %s21, 1
      %s288 = smul.addr %s287, 20
      %s289 = smul.addr %s288, 4
      %s290 = scalar_lea.vmem %s0, %s289
      %s291 = smul.u32 8, %s22
      %p292 = scmp.lt.s32.totalorder %s21, 1
      %s293 = scalar_select %p292, %s21, 1
      %p294 = scmp.lt.s32.totalorder %s291, 7
      %s295 = scalar_select %p294, %s291, 7
      %s296 = smul.addr %s293, 8
      %s297 = sadd.s32 %s295, %s296
      %s298 = smul.addr %s297, 4
      %s299 = scalar_lea.vmem %s3, %s298
      %s300 = smul.u32 8, %s22
      %s301 = smul.u32 8, %s22
      %p302 = scmp.lt.s32.totalorder %s21, 1
      %s303 = scalar_select %p302, %s21, 1
      %p304 = scmp.lt.s32.totalorder %s301, 7
      %s305 = scalar_select %p304, %s301, 7
      %s306 = smul.addr %s303, 8
      %s307 = sadd.s32 %s305, %s306
      %s308 = smul.addr %s307, 4
      %s309 = scalar_lea.vmem %s6, %s308
      %s310 = smul.u32 8, %s22
      %s312 = smul.u32 %s22, 8
      %s313 = smul.u32 %s312, 2
      %s314 = smul.addr %s313, 4
      %s315 = scalar_lea.vmem %s290, %s314
      %v316 = vld [vmem:[%s315] sm:$0xf]
      %v317 = vld [vmem:[%s315 + $0x8] sm:$0xf]
      %v318 = vld [vmem:[%s315 + $0x10] sm:$0xf]
      %v319 = vld [vmem:[%s315 + $0x18] sm:$0xf]
      %v320 = vld [vmem:[%s315 + $0x20] sm:$0xf]
      %v321 = vld [vmem:[%s315 + $0x28] sm:$0xf]
      %v322 = vld [vmem:[%s315 + $0x30] sm:$0xf]
      %v323 = vld [vmem:[%s315 + $0x38] sm:$0xf]
      %v324 = vld [vmem:[%s1] sm:$0xf]
      %v325 = vld [vmem:[%s1 + $0x4] sm:$0xf]
      %v326 = vld [vmem:[%s1 + $0x8] sm:$0xf]
      %v327 = vld [vmem:[%s1 + $0xc] sm:$0xf]
      %v328 = vld [vmem:[%s1 + $0x10] sm:$0xf]
      %v329 = vld [vmem:[%s1 + $0x14] sm:$0xf]
      %v330 = vld [vmem:[%s1 + $0x18] sm:$0xf]
      %v331 = vld [vmem:[%s1 + $0x1c] sm:$0xf]
      %v332 = vld [vmem:[%s1 + $0x20] sm:$0xf]
      %v333 = vld [vmem:[%s1 + $0x24] sm:$0xf]
      %v334 = vld [vmem:[%s1 + $0x28] sm:$0xf]
      %v335 = vld [vmem:[%s1 + $0x2c] sm:$0xf]
      %v336 = vld [vmem:[%s1 + $0x30] sm:$0xf]
      %v337 = vld [vmem:[%s1 + $0x34] sm:$0xf]
      %v338 = vld [vmem:[%s1 + $0x38] sm:$0xf]
      %v339 = vld [vmem:[%s1 + $0x3c] sm:$0xf]
      %v340 = vld [vmem:[%s315 + $0x4] sm:$0x1]
      %v341 = vld [vmem:[%s315 + $0xc] sm:$0x1]
      %v342 = vld [vmem:[%s315 + $0x14] sm:$0x1]
      %v343 = vld [vmem:[%s315 + $0x1c] sm:$0x1]
      %v344 = vld [vmem:[%s315 + $0x24] sm:$0x1]
      %v345 = vld [vmem:[%s315 + $0x2c] sm:$0x1]
      %v346 = vld [vmem:[%s315 + $0x34] sm:$0x1]
      %v347 = vld [vmem:[%s315 + $0x3c] sm:$0x1]
      %vm348 = vsmask.f32 3328
      %vm349 = vsmask.f32 7440
      %vm350 = vmor %vm348, %vm349
      %v352 = vshrl.u32 %v316, 16
      %v354 = vrot.slane %v352, 4
      %v355 = vshll.u32 %v316, 16
      %v357 = vrot.slane %v355, 5
      %v358 = vor.u32 %v354, %v357
      %v359 = vrot.slane %v358, 4
      %v361 = vshll.u32 %v340, 16
      %v363 = vrot.slane %v361, 5
      %v364 = vsel %vm350, %v359, %v363
      %v366 = vshrl.u32 %v317, 16
      %v368 = vrot.slane %v366, 4
      %v369 = vshll.u32 %v317, 16
      %v371 = vrot.slane %v369, 5
      %v372 = vor.u32 %v368, %v371
      %v373 = vrot.slane %v372, 4
      %v375 = vshll.u32 %v341, 16
      %v377 = vrot.slane %v375, 5
      %v378 = vsel %vm350, %v373, %v377
      %v380 = vshrl.u32 %v318, 16
      %v382 = vrot.slane %v380, 4
      %v383 = vshll.u32 %v318, 16
      %v385 = vrot.slane %v383, 5
      %v386 = vor.u32 %v382, %v385
      %v387 = vrot.slane %v386, 4
      %v389 = vshll.u32 %v342, 16
      %v391 = vrot.slane %v389, 5
      %v392 = vsel %vm350, %v387, %v391
      %v394 = vshrl.u32 %v319, 16
      %v396 = vrot.slane %v394, 4
      %v397 = vshll.u32 %v319, 16
      %v399 = vrot.slane %v397, 5
      %v400 = vor.u32 %v396, %v399
      %v401 = vrot.slane %v400, 4
      %v403 = vshll.u32 %v343, 16
      %v405 = vrot.slane %v403, 5
      %v406 = vsel %vm350, %v401, %v405
      %v408 = vshrl.u32 %v320, 16
      %v410 = vrot.slane %v408, 4
      %v411 = vshll.u32 %v320, 16
      %v413 = vrot.slane %v411, 5
      %v414 = vor.u32 %v410, %v413
      %v415 = vrot.slane %v414, 4
      %v417 = vshll.u32 %v344, 16
      %v419 = vrot.slane %v417, 5
      %v420 = vsel %vm350, %v415, %v419
      %v422 = vshrl.u32 %v321, 16
      %v424 = vrot.slane %v422, 4
      %v425 = vshll.u32 %v321, 16
      %v427 = vrot.slane %v425, 5
      %v428 = vor.u32 %v424, %v427
      %v429 = vrot.slane %v428, 4
      %v431 = vshll.u32 %v345, 16
      %v433 = vrot.slane %v431, 5
      %v434 = vsel %vm350, %v429, %v433
      %v436 = vshrl.u32 %v322, 16
      %v438 = vrot.slane %v436, 4
      %v439 = vshll.u32 %v322, 16
      %v441 = vrot.slane %v439, 5
      %v442 = vor.u32 %v438, %v441
      %v443 = vrot.slane %v442, 4
      %v445 = vshll.u32 %v346, 16
      %v447 = vrot.slane %v445, 5
      %v448 = vsel %vm350, %v443, %v447
      %v450 = vshrl.u32 %v323, 16
      %v452 = vrot.slane %v450, 4
      %v453 = vshll.u32 %v323, 16
      %v455 = vrot.slane %v453, 5
      %v456 = vor.u32 %v452, %v455
      %v457 = vrot.slane %v456, 4
      %v459 = vshll.u32 %v347, 16
      %v461 = vrot.slane %v459, 5
      %v462 = vsel %vm350, %v457, %v461
      %s463 = scalar_lea.vmem %s1, 64
      %v464 = vld [vmem:[%s463] sm:$0xf]
      %v465 = vld [vmem:[%s463 + $0x4] sm:$0xf]
      %v466 = vld [vmem:[%s463 + $0x8] sm:$0xf]
      %v467 = vld [vmem:[%s463 + $0xc] sm:$0xf]
      %v468 = vld [vmem:[%s463 + $0x10] sm:$0xf]
      %v469 = vld [vmem:[%s463 + $0x14] sm:$0xf]
      %v470 = vld [vmem:[%s463 + $0x18] sm:$0xf]
      %v471 = vld [vmem:[%s463 + $0x1c] sm:$0xf]
      %v472 = vld [vmem:[%s463 + $0x20] sm:$0xf]
      %v473 = vld [vmem:[%s463 + $0x24] sm:$0xf]
      %v474 = vld [vmem:[%s463 + $0x28] sm:$0xf]
      %v475 = vld [vmem:[%s463 + $0x2c] sm:$0xf]
      %v476 = vld [vmem:[%s463 + $0x30] sm:$0xf]
      %v477 = vld [vmem:[%s463 + $0x34] sm:$0xf]
      %v478 = vld [vmem:[%s463 + $0x38] sm:$0xf]
      %v479 = vld [vmem:[%s463 + $0x3c] sm:$0xf]
      %v480 = vunpack.c.l.b16 %v364
      %v481 = vunpack.c.l.b16 %v378
      %v482 = vunpack.c.l.b16 %v392
      %v483 = vunpack.c.l.b16 %v406
      %v484 = vunpack.c.l.b16 %v420
      %v485 = vunpack.c.l.b16 %v434
      %v486 = vunpack.c.l.b16 %v448
      %v487 = vunpack.c.l.b16 %v462
      %v488 = vpack.c.b16 %v481, %v480
      %v489 = vpack.c.b16 %v483, %v482
      %v490 = vpack.c.b16 %v485, %v484
      %v491 = vpack.c.b16 %v487, %v486
      %v512 = vunpack.c.l.b16 %v464
      %v513 = vunpack.c.l.b16 %v465
      %v514 = vunpack.c.l.b16 %v466
      %v515 = vunpack.c.l.b16 %v467
      %v516 = vunpack.c.l.b16 %v468
      %v517 = vunpack.c.l.b16 %v469
      %v518 = vunpack.c.l.b16 %v470
      %v519 = vunpack.c.l.b16 %v471
      %v520 = vunpack.c.l.b16 %v472
      %v521 = vunpack.c.l.b16 %v473
      %v522 = vunpack.c.l.b16 %v474
      %v523 = vunpack.c.l.b16 %v475
      %v524 = vunpack.c.l.b16 %v476
      %v525 = vunpack.c.l.b16 %v477
      %v526 = vunpack.c.l.b16 %v478
      %v527 = vunpack.c.l.b16 %v479
      %v528 = vpack.c.b16 %v513, %v512
      %v529 = vpack.c.b16 %v515, %v514
      %v530 = vpack.c.b16 %v517, %v516
      %v531 = vpack.c.b16 %v519, %v518
      %v532 = vpack.c.b16 %v521, %v520
      %v533 = vpack.c.b16 %v523, %v522
      %v534 = vpack.c.b16 %v525, %v524
      %v535 = vpack.c.b16 %v527, %v526
      %544 = vmatprep.subr.bf16.mxu0 0
      %545 = vmatpush1.bf16.msra.mxu0 %v528
      %546 = vmatprep.subr.bf16.mxu0 0
      %547 = vmatpush1.bf16.msra.mxu0 %v529
      %548 = vmatprep.subr.bf16.mxu0 0
      %549 = vmatpush1.bf16.msra.mxu0 %v530
      %550 = vmatprep.subr.bf16.mxu0 0
      %551 = vmatpush1.bf16.msra.mxu0 %v531
      %552 = vmatprep.subr.bf16.mxu0 0
      %553 = vmatpush1.bf16.msra.mxu0 %v532
      %554 = vmatprep.subr.bf16.mxu0 0
      %555 = vmatpush1.bf16.msra.mxu0 %v533
      %556 = vmatprep.subr.bf16.mxu0 0
      %557 = vmatpush1.bf16.msra.mxu0 %v534
      %558 = vmatprep.subr.bf16.mxu0 0
      %559 = vmatpush1.bf16.msra.mxu0 %v535
      %560 = vmatprep.subr.bf16.mxu0 0
      %561 = vmatpush1.bf16.msra.mxu0 0
      %562 = vmatprep.subr.bf16.mxu0 0
      %563 = vmatpush1.bf16.msra.mxu0 0
      %564 = vmatprep.subr.bf16.mxu0 0
      %565 = vmatpush1.bf16.msra.mxu0 0
      %566 = vmatprep.subr.bf16.mxu0 0
      %567 = vmatpush1.bf16.msra.mxu0 0
      %568 = vmatprep.subr.bf16.mxu0 0
      %569 = vmatpush1.bf16.msra.mxu0 0
      %570 = vmatprep.subr.bf16.mxu0 0
      %571 = vmatpush1.bf16.msra.mxu0 0
      %572 = vmatprep.subr.bf16.mxu0 0
      %573 = vmatpush1.bf16.msra.mxu0 0
      %574 = vmatprep.subr.bf16.mxu0 0
      %575 = vmatpush1.bf16.msra.mxu0 0
      %576 = vmatprep.mubr.bf16.mxu0 0
      %577 = vmatmul.mubr.bf16.gmra.mrb[0].mxu0 %v488
      %v578 = vpop.f32.mrb[0].mxu0
      %v579 = vadd.f32 0.0, %v578
      %v580 = vpop.f32.mrb[0].mxu0
      %v581 = vpop.f32.mrb[0].mxu0
      %v582 = vadd.f32 0.0, %v581
      %v583 = vpop.f32.mrb[0].mxu0
      %584 = vmatprep.mubr.bf16.mxu0 0
      %585 = vmatmul.mubr.bf16.gmra.mrb[0].mxu0 %v489
      %v586 = vpop.f32.mrb[0].mxu0
      %v587 = vadd.f32 0.0, %v586
      %v588 = vpop.f32.mrb[0].mxu0
      %v589 = vpop.f32.mrb[0].mxu0
      %v590 = vadd.f32 0.0, %v589
      %v591 = vpop.f32.mrb[0].mxu0
      %592 = vmatprep.mubr.bf16.mxu0 0
      %593 = vmatmul.mubr.bf16.gmra.mrb[0].mxu0 %v490
      %v594 = vpop.f32.mrb[0].mxu0
      %v595 = vadd.f32 0.0, %v594
      %v596 = vpop.f32.mrb[0].mxu0
      %v597 = vpop.f32.mrb[0].mxu0
      %v598 = vadd.f32 0.0, %v597
      %v599 = vpop.f32.mrb[0].mxu0
      %600 = vmatprep.mubr.bf16.mxu0 0
      %601 = vmatmul.mubr.bf16.gmra.mrb[0].mxu0 %v491
      %v602 = vpop.f32.mrb[0].mxu0
      %v603 = vadd.f32 0.0, %v602
      %v604 = vpop.f32.mrb[0].mxu0
      %v605 = vpop.f32.mrb[0].mxu0
      %v606 = vadd.f32 0.0, %v605
      %v607 = vpop.f32.mrb[0].mxu0
      %608 = vdwg.mxu0
      %v617 = vunpack.c.l.b16 %v316
      %v618 = vunpack.c.l.b16 %v317
      %v619 = vunpack.c.l.b16 %v318
      %v620 = vunpack.c.l.b16 %v319
      %v621 = vunpack.c.l.b16 %v320
      %v622 = vunpack.c.l.b16 %v321
      %v623 = vunpack.c.l.b16 %v322
      %v624 = vunpack.c.l.b16 %v323
      %v625 = vpack.c.b16 %v618, %v617
      %v626 = vpack.c.b16 %v620, %v619
      %v627 = vpack.c.b16 %v622, %v621
      %v628 = vpack.c.b16 %v624, %v623
      %v649 = vunpack.c.l.b16 %v324
      %v650 = vunpack.c.l.b16 %v325
      %v651 = vunpack.c.l.b16 %v326
      %v652 = vunpack.c.l.b16 %v327
      %v653 = vunpack.c.l.b16 %v328
      %v654 = vunpack.c.l.b16 %v329
      %v655 = vunpack.c.l.b16 %v330
      %v656 = vunpack.c.l.b16 %v331
      %v657 = vunpack.c.l.b16 %v332
      %v658 = vunpack.c.l.b16 %v333
      %v659 = vunpack.c.l.b16 %v334
      %v660 = vunpack.c.l.b16 %v335
      %v661 = vunpack.c.l.b16 %v336
      %v662 = vunpack.c.l.b16 %v337
      %v663 = vunpack.c.l.b16 %v338
      %v664 = vunpack.c.l.b16 %v339
      %v665 = vpack.c.b16 %v650, %v649
      %v666 = vpack.c.b16 %v652, %v651
      %v667 = vpack.c.b16 %v654, %v653
      %v668 = vpack.c.b16 %v656, %v655
      %v669 = vpack.c.b16 %v658, %v657
      %v670 = vpack.c.b16 %v660, %v659
      %v671 = vpack.c.b16 %v662, %v661
      %v672 = vpack.c.b16 %v664, %v663
      %681 = vmatprep.subr.bf16.mxu0 0
      %682 = vmatpush1.bf16.msra.mxu0 %v665
      %683 = vmatprep.subr.bf16.mxu0 0
      %684 = vmatpush1.bf16.msra.mxu0 %v666
      %685 = vmatprep.subr.bf16.mxu0 0
      %686 = vmatpush1.bf16.msra.mxu0 %v667
      %687 = vmatprep.subr.bf16.mxu0 0
      %688 = vmatpush1.bf16.msra.mxu0 %v668
      %689 = vmatprep.subr.bf16.mxu0 0
      %690 = vmatpush1.bf16.msra.mxu0 %v669
      %691 = vmatprep.subr.bf16.mxu0 0
      %692 = vmatpush1.bf16.msra.mxu0 %v670
      %693 = vmatprep.subr.bf16.mxu0 0
      %694 = vmatpush1.bf16.msra.mxu0 %v671
      %695 = vmatprep.subr.bf16.mxu0 0
      %696 = vmatpush1.bf16.msra.mxu0 %v672
      %697 = vmatprep.subr.bf16.mxu0 0
      %698 = vmatpush1.bf16.msra.mxu0 0
      %699 = vmatprep.subr.bf16.mxu0 0
      %700 = vmatpush1.bf16.msra.mxu0 0
      %701 = vmatprep.subr.bf16.mxu0 0
      %702 = vmatpush1.bf16.msra.mxu0 0
      %703 = vmatprep.subr.bf16.mxu0 0
      %704 = vmatpush1.bf16.msra.mxu0 0
      %705 = vmatprep.subr.bf16.mxu0 0
      %706 = vmatpush1.bf16.msra.mxu0 0
      %707 = vmatprep.subr.bf16.mxu0 0
      %708 = vmatpush1.bf16.msra.mxu0 0
      %709 = vmatprep.subr.bf16.mxu0 0
      %710 = vmatpush1.bf16.msra.mxu0 0
      %711 = vmatprep.subr.bf16.mxu0 0
      %712 = vmatpush1.bf16.msra.mxu0 0
      %713 = vmatprep.mubr.bf16.mxu0 0
      %714 = vmatmul.mubr.bf16.gmra.mrb[0].mxu0 %v625
      %v715 = vpop.f32.mrb[0].mxu0
      %v716 = vadd.f32 %v579, %v715
      %v717 = vpop.f32.mrb[0].mxu0
      %v718 = vpop.f32.mrb[0].mxu0
      %v719 = vadd.f32 %v582, %v718
      %v720 = vpop.f32.mrb[0].mxu0
      %721 = vmatprep.mubr.bf16.mxu0 0
      %722 = vmatmul.mubr.bf16.gmra.mrb[0].mxu0 %v626
      %v723 = vpop.f32.mrb[0].mxu0
      %v724 = vadd.f32 %v587, %v723
      %v725 = vpop.f32.mrb[0].mxu0
      %v726 = vpop.f32.mrb[0].mxu0
      %v727 = vadd.f32 %v590, %v726
      %v728 = vpop.f32.mrb[0].mxu0
      %729 = vmatprep.mubr.bf16.mxu0 0
      %730 = vmatmul.mubr.bf16.gmra.mrb[0].mxu0 %v627
      %v731 = vpop.f32.mrb[0].mxu0
      %v732 = vadd.f32 %v595, %v731
      %v733 = vpop.f32.mrb[0].mxu0
      %v734 = vpop.f32.mrb[0].mxu0
      %v735 = vadd.f32 %v598, %v734
      %v736 = vpop.f32.mrb[0].mxu0
      %737 = vmatprep.mubr.bf16.mxu0 0
      %738 = vmatmul.mubr.bf16.gmra.mrb[0].mxu0 %v628
      %v739 = vpop.f32.mrb[0].mxu0
      %v740 = vadd.f32 %v603, %v739
      %v741 = vpop.f32.mrb[0].mxu0
      %v742 = vpop.f32.mrb[0].mxu0
      %v743 = vadd.f32 %v606, %v742
      %v744 = vpop.f32.mrb[0].mxu0
      %745 = vdwg.mxu0
      %v746 = vld [vmem:[%s315] sm:$0xe]
      %v747 = vld [vmem:[%s315 + $0x8] sm:$0xe]
      %v748 = vld [vmem:[%s315 + $0x10] sm:$0xe]
      %v749 = vld [vmem:[%s315 + $0x18] sm:$0xe]
      %v750 = vld [vmem:[%s315 + $0x20] sm:$0xe]
      %v751 = vld [vmem:[%s315 + $0x28] sm:$0xe]
      %v752 = vld [vmem:[%s315 + $0x30] sm:$0xe]
      %v753 = vld [vmem:[%s315 + $0x38] sm:$0xe]
      %vm770 = vcmask 1042432
      %vm771 = vcmask 1046532
      %vm772 = vmor %vm770, %vm771
      %v773 = vrot.slane %v746, 5
      %v774 = vrot.slane %v773, 4
      %v775 = vrot.slane %v340, 5
      %v776 = vsel %vm772, %v774, %v775
      %v777 = vrot.slane %v747, 5
      %v778 = vrot.slane %v777, 4
      %v779 = vrot.slane %v341, 5
      %v780 = vsel %vm772, %v778, %v779
      %v781 = vrot.slane %v748, 5
      %v782 = vrot.slane %v781, 4
      %v783 = vrot.slane %v342, 5
      %v784 = vsel %vm772, %v782, %v783
      %v785 = vrot.slane %v749, 5
      %v786 = vrot.slane %v785, 4
      %v787 = vrot.slane %v343, 5
      %v788 = vsel %vm772, %v786, %v787
      %v789 = vrot.slane %v750, 5
      %v790 = vrot.slane %v789, 4
      %v791 = vrot.slane %v344, 5
      %v792 = vsel %vm772, %v790, %v791
      %v793 = vrot.slane %v751, 5
      %v794 = vrot.slane %v793, 4
      %v795 = vrot.slane %v345, 5
      %v796 = vsel %vm772, %v794, %v795
      %v797 = vrot.slane %v752, 5
      %v798 = vrot.slane %v797, 4
      %v799 = vrot.slane %v346, 5
      %v800 = vsel %vm772, %v798, %v799
      %v801 = vrot.slane %v753, 5
      %v802 = vrot.slane %v801, 4
      %v803 = vrot.slane %v347, 5
      %v804 = vsel %vm772, %v802, %v803
      %s805 = scalar_lea.vmem %s1, 128
      %v806 = vld [vmem:[%s805] sm:$0xf]
      %v807 = vld [vmem:[%s805 + $0x4] sm:$0xf]
      %v808 = vld [vmem:[%s805 + $0x8] sm:$0xf]
      %v809 = vld [vmem:[%s805 + $0xc] sm:$0xf]
      %v810 = vld [vmem:[%s805 + $0x10] sm:$0xf]
      %v811 = vld [vmem:[%s805 + $0x14] sm:$0xf]
      %v812 = vld [vmem:[%s805 + $0x18] sm:$0xf]
      %v813 = vld [vmem:[%s805 + $0x1c] sm:$0xf]
      %v814 = vld [vmem:[%s805 + $0x20] sm:$0xf]
      %v815 = vld [vmem:[%s805 + $0x24] sm:$0xf]
      %v816 = vld [vmem:[%s805 + $0x28] sm:$0xf]
      %v817 = vld [vmem:[%s805 + $0x2c] sm:$0xf]
      %v818 = vld [vmem:[%s805 + $0x30] sm:$0xf]
      %v819 = vld [vmem:[%s805 + $0x34] sm:$0xf]
      %v820 = vld [vmem:[%s805 + $0x38] sm:$0xf]
      %v821 = vld [vmem:[%s805 + $0x3c] sm:$0xf]
      %v822 = vunpack.c.l.b16 %v776
      %v823 = vunpack.c.l.b16 %v780
      %v824 = vunpack.c.l.b16 %v784
      %v825 = vunpack.c.l.b16 %v788
      %v826 = vunpack.c.l.b16 %v792
      %v827 = vunpack.c.l.b16 %v796
      %v828 = vunpack.c.l.b16 %v800
      %v829 = vunpack.c.l.b16 %v804
      %v830 = vpack.c.b16 %v823, %v822
      %v831 = vpack.c.b16 %v825, %v824
      %v832 = vpack.c.b16 %v827, %v826
      %v833 = vpack.c.b16 %v829, %v828
      %v854 = vunpack.c.l.b16 %v806
      %v855 = vunpack.c.l.b16 %v807
      %v856 = vunpack.c.l.b16 %v808
      %v857 = vunpack.c.l.b16 %v809
      %v858 = vunpack.c.l.b16 %v810
      %v859 = vunpack.c.l.b16 %v811
      %v860 = vunpack.c.l.b16 %v812
      %v861 = vunpack.c.l.b16 %v813
      %v862 = vunpack.c.l.b16 %v814
      %v863 = vunpack.c.l.b16 %v815
      %v864 = vunpack.c.l.b16 %v816
      %v865 = vunpack.c.l.b16 %v817
      %v866 = vunpack.c.l.b16 %v818
      %v867 = vunpack.c.l.b16 %v819
      %v868 = vunpack.c.l.b16 %v820
      %v869 = vunpack.c.l.b16 %v821
      %v870 = vpack.c.b16 %v855, %v854
      %v871 = vpack.c.b16 %v857, %v856
      %v872 = vpack.c.b16 %v859, %v858
      %v873 = vpack.c.b16 %v861, %v860
      %v874 = vpack.c.b16 %v863, %v862
      %v875 = vpack.c.b16 %v865, %v864
      %v876 = vpack.c.b16 %v867, %v866
      %v877 = vpack.c.b16 %v869, %v868
      %886 = vmatprep.subr.bf16.mxu0 0
      %887 = vmatpush1.bf16.msra.mxu0 %v870
      %888 = vmatprep.subr.bf16.mxu0 0
      %889 = vmatpush1.bf16.msra.mxu0 %v871
      %890 = vmatprep.subr.bf16.mxu0 0
      %891 = vmatpush1.bf16.msra.mxu0 %v872
      %892 = vmatprep.subr.bf16.mxu0 0
      %893 = vmatpush1.bf16.msra.mxu0 %v873
      %894 = vmatprep.subr.bf16.mxu0 0
      %895 = vmatpush1.bf16.msra.mxu0 %v874
      %896 = vmatprep.subr.bf16.mxu0 0
      %897 = vmatpush1.bf16.msra.mxu0 %v875
      %898 = vmatprep.subr.bf16.mxu0 0
      %899 = vmatpush1.bf16.msra.mxu0 %v876
      %900 = vmatprep.subr.bf16.mxu0 0
      %901 = vmatpush1.bf16.msra.mxu0 %v877
      %902 = vmatprep.subr.bf16.mxu0 0
      %903 = vmatpush1.bf16.msra.mxu0 0
      %904 = vmatprep.subr.bf16.mxu0 0
      %905 = vmatpush1.bf16.msra.mxu0 0
      %906 = vmatprep.subr.bf16.mxu0 0
      %907 = vmatpush1.bf16.msra.mxu0 0
      %908 = vmatprep.subr.bf16.mxu0 0
      %909 = vmatpush1.bf16.msra.mxu0 0
      %910 = vmatprep.subr.bf16.mxu0 0
      %911 = vmatpush1.bf16.msra.mxu0 0
      %912 = vmatprep.subr.bf16.mxu0 0
      %913 = vmatpush1.bf16.msra.mxu0 0
      %914 = vmatprep.subr.bf16.mxu0 0
      %915 = vmatpush1.bf16.msra.mxu0 0
      %916 = vmatprep.subr.bf16.mxu0 0
      %917 = vmatpush1.bf16.msra.mxu0 0
      %918 = vmatprep.mubr.bf16.mxu0 0
      %919 = vmatmul.mubr.bf16.gmra.mrb[0].mxu0 %v830
      %v920 = vpop.f32.mrb[0].mxu0
      %v921 = vadd.f32 0.0, %v920
      %v922 = vpop.f32.mrb[0].mxu0
      %v923 = vpop.f32.mrb[0].mxu0
      %v924 = vadd.f32 0.0, %v923
      %v925 = vpop.f32.mrb[0].mxu0
      %926 = vmatprep.mubr.bf16.mxu0 0
      %927 = vmatmul.mubr.bf16.gmra.mrb[0].mxu0 %v831
      %v928 = vpop.f32.mrb[0].mxu0
      %v929 = vadd.f32 0.0, %v928
      %v930 = vpop.f32.mrb[0].mxu0
      %v931 = vpop.f32.mrb[0].mxu0
      %v932 = vadd.f32 0.0, %v931
      %v933 = vpop.f32.mrb[0].mxu0
      %934 = vmatprep.mubr.bf16.mxu0 0
      %935 = vmatmul.mubr.bf16.gmra.mrb[0].mxu0 %v832
      %v936 = vpop.f32.mrb[0].mxu0
      %v937 = vadd.f32 0.0, %v936
      %v938 = vpop.f32.mrb[0].mxu0
      %v939 = vpop.f32.mrb[0].mxu0
      %v940 = vadd.f32 0.0, %v939
      %v941 = vpop.f32.mrb[0].mxu0
      %942 = vmatprep.mubr.bf16.mxu0 0
      %943 = vmatmul.mubr.bf16.gmra.mrb[0].mxu0 %v833
      %v944 = vpop.f32.mrb[0].mxu0
      %v945 = vadd.f32 0.0, %v944
      %v946 = vpop.f32.mrb[0].mxu0
      %v947 = vpop.f32.mrb[0].mxu0
      %v948 = vadd.f32 0.0, %v947
      %v949 = vpop.f32.mrb[0].mxu0
      %950 = vdwg.mxu0
      %v951 = vadd.f32 %v716, %v921
      %v952 = vadd.f32 %v719, %v924
      %v953 = vadd.f32 %v724, %v929
      %v954 = vadd.f32 %v727, %v932
      %v955 = vadd.f32 %v732, %v937
      %v956 = vadd.f32 %v735, %v940
      %v957 = vadd.f32 %v740, %v945
      %v958 = vadd.f32 %v743, %v948
      %s959 = sadd.s32 %s312, 1
      %s960 = smul.u32 %s959, 2
      %s961 = smul.addr %s960, 4
      %s962 = scalar_lea.vmem %s290, %s961
      %v963 = vld [vmem:[%s962] sm:$0xf]
      %v964 = vld [vmem:[%s962 + $0x8] sm:$0xf]
      %v965 = vld [vmem:[%s962 + $0x10] sm:$0xf]
      %v966 = vld [vmem:[%s962 + $0x18] sm:$0xf]
      %v967 = vld [vmem:[%s962 + $0x20] sm:$0xf]
      %v968 = vld [vmem:[%s962 + $0x28] sm:$0xf]
      %v969 = vld [vmem:[%s962 + $0x30] sm:$0xf]
      %v970 = vld [vmem:[%s962 + $0x38] sm:$0xf]
      %s971 = scalar_lea.vmem %s1, 192
      %v972 = vld [vmem:[%s971] sm:$0xf]
      %v973 = vld [vmem:[%s971 + $0x4] sm:$0xf]
      %v974 = vld [vmem:[%s971 + $0x8] sm:$0xf]
      %v975 = vld [vmem:[%s971 + $0xc] sm:$0xf]
      %v976 = vld [vmem:[%s971 + $0x10] sm:$0xf]
      %v977 = vld [vmem:[%s971 + $0x14] sm:$0xf]
      %v978 = vld [vmem:[%s971 + $0x18] sm:$0xf]
      %v979 = vld [vmem:[%s971 + $0x1c] sm:$0xf]
      %v980 = vld [vmem:[%s971 + $0x20] sm:$0xf]
      %v981 = vld [vmem:[%s971 + $0x24] sm:$0xf]
      %v982 = vld [vmem:[%s971 + $0x28] sm:$0xf]
      %v983 = vld [vmem:[%s971 + $0x2c] sm:$0xf]
      %v984 = vld [vmem:[%s971 + $0x30] sm:$0xf]
      %v985 = vld [vmem:[%s971 + $0x34] sm:$0xf]
      %v986 = vld [vmem:[%s971 + $0x38] sm:$0xf]
      %v987 = vld [vmem:[%s971 + $0x3c] sm:$0xf]
      %v996 = vunpack.c.l.b16 %v963
      %v997 = vunpack.c.l.b16 %v964
      %v998 = vunpack.c.l.b16 %v965
      %v999 = vunpack.c.l.b16 %v966
      %v1000 = vunpack.c.l.b16 %v967
      %v1001 = vunpack.c.l.b16 %v968
      %v1002 = vunpack.c.l.b16 %v969
      %v1003 = vunpack.c.l.b16 %v970
      %v1004 = vpack.c.b16 %v997, %v996
      %v1005 = vpack.c.b16 %v999, %v998
      %v1006 = vpack.c.b16 %v1001, %v1000
      %v1007 = vpack.c.b16 %v1003, %v1002
      %v1028 = vunpack.c.l.b16 %v972
      %v1029 = vunpack.c.l.b16 %v973
      %v1030 = vunpack.c.l.b16 %v974
      %v1031 = vunpack.c.l.b16 %v975
      %v1032 = vunpack.c.l.b16 %v976
      %v1033 = vunpack.c.l.b16 %v977
      %v1034 = vunpack.c.l.b16 %v978
      %v1035 = vunpack.c.l.b16 %v979
      %v1036 = vunpack.c.l.b16 %v980
      %v1037 = vunpack.c.l.b16 %v981
      %v1038 = vunpack.c.l.b16 %v982
      %v1039 = vunpack.c.l.b16 %v983
      %v1040 = vunpack.c.l.b16 %v984
      %v1041 = vunpack.c.l.b16 %v985
      %v1042 = vunpack.c.l.b16 %v986
      %v1043 = vunpack.c.l.b16 %v987
      %v1044 = vpack.c.b16 %v1029, %v1028
      %v1045 = vpack.c.b16 %v1031, %v1030
      %v1046 = vpack.c.b16 %v1033, %v1032
      %v1047 = vpack.c.b16 %v1035, %v1034
      %v1048 = vpack.c.b16 %v1037, %v1036
      %v1049 = vpack.c.b16 %v1039, %v1038
      %v1050 = vpack.c.b16 %v1041, %v1040
      %v1051 = vpack.c.b16 %v1043, %v1042
      %1060 = vmatprep.subr.bf16.mxu0 0
      %1061 = vmatpush1.bf16.msra.mxu0 %v1044
      %1062 = vmatprep.subr.bf16.mxu0 0
      %1063 = vmatpush1.bf16.msra.mxu0 %v1045
      %1064 = vmatprep.subr.bf16.mxu0 0
      %1065 = vmatpush1.bf16.msra.mxu0 %v1046
      %1066 = vmatprep.subr.bf16.mxu0 0
      %1067 = vmatpush1.bf16.msra.mxu0 %v1047
      %1068 = vmatprep.subr.bf16.mxu0 0
      %1069 = vmatpush1.bf16.msra.mxu0 %v1048
      %1070 = vmatprep.subr.bf16.mxu0 0
      %1071 = vmatpush1.bf16.msra.mxu0 %v1049
      %1072 = vmatprep.subr.bf16.mxu0 0
      %1073 = vmatpush1.bf16.msra.mxu0 %v1050
      %1074 = vmatprep.subr.bf16.mxu0 0
      %1075 = vmatpush1.bf16.msra.mxu0 %v1051
      %1076 = vmatprep.subr.bf16.mxu0 0
      %1077 = vmatpush1.bf16.msra.mxu0 0
      %1078 = vmatprep.subr.bf16.mxu0 0
      %1079 = vmatpush1.bf16.msra.mxu0 0
      %1080 = vmatprep.subr.bf16.mxu0 0
      %1081 = vmatpush1.bf16.msra.mxu0 0
      %1082 = vmatprep.subr.bf16.mxu0 0
      %1083 = vmatpush1.bf16.msra.mxu0 0
      %1084 = vmatprep.subr.bf16.mxu0 0
      %1085 = vmatpush1.bf16.msra.mxu0 0
      %1086 = vmatprep.subr.bf16.mxu0 0
      %1087 = vmatpush1.bf16.msra.mxu0 0
      %1088 = vmatprep.subr.bf16.mxu0 0
      %1089 = vmatpush1.bf16.msra.mxu0 0
      %1090 = vmatprep.subr.bf16.mxu0 0
      %1091 = vmatpush1.bf16.msra.mxu0 0
      %1092 = vmatprep.mubr.bf16.mxu0 0
      %1093 = vmatmul.mubr.bf16.gmra.mrb[0].mxu0 %v1004
      %v1094 = vpop.f32.mrb[0].mxu0
      %v1095 = vadd.f32 0.0, %v1094
      %v1096 = vpop.f32.mrb[0].mxu0
      %v1097 = vpop.f32.mrb[0].mxu0
      %v1098 = vadd.f32 0.0, %v1097
      %v1099 = vpop.f32.mrb[0].mxu0
      %1100 = vmatprep.mubr.bf16.mxu0 0
      %1101 = vmatmul.mubr.bf16.gmra.mrb[0].mxu0 %v1005
      %v1102 = vpop.f32.mrb[0].mxu0
      %v1103 = vadd.f32 0.0, %v1102
      %v1104 = vpop.f32.mrb[0].mxu0
      %v1105 = vpop.f32.mrb[0].mxu0
      %v1106 = vadd.f32 0.0, %v1105
      %v1107 = vpop.f32.mrb[0].mxu0
      %1108 = vmatprep.mubr.bf16.mxu0 0
      %1109 = vmatmul.mubr.bf16.gmra.mrb[0].mxu0 %v1006
      %v1110 = vpop.f32.mrb[0].mxu0
      %v1111 = vadd.f32 0.0, %v1110
      %v1112 = vpop.f32.mrb[0].mxu0
      %v1113 = vpop.f32.mrb[0].mxu0
      %v1114 = vadd.f32 0.0, %v1113
      %v1115 = vpop.f32.mrb[0].mxu0
      %1116 = vmatprep.mubr.bf16.mxu0 0
      %1117 = vmatmul.mubr.bf16.gmra.mrb[0].mxu0 %v1007
      %v1118 = vpop.f32.mrb[0].mxu0
      %v1119 = vadd.f32 0.0, %v1118
      %v1120 = vpop.f32.mrb[0].mxu0
      %v1121 = vpop.f32.mrb[0].mxu0
      %v1122 = vadd.f32 0.0, %v1121
      %v1123 = vpop.f32.mrb[0].mxu0
      %1124 = vdwg.mxu0
      %v1125 = vadd.f32 %v951, %v1095
      %v1126 = vadd.f32 %v952, %v1098
      %v1127 = vadd.f32 %v953, %v1103
      %v1128 = vadd.f32 %v954, %v1106
      %v1129 = vadd.f32 %v955, %v1111
      %v1130 = vadd.f32 %v956, %v1114
      %v1131 = vadd.f32 %v957, %v1119
      %v1132 = vadd.f32 %v958, %v1122
      %v1133 = vld [vmem:[%s962] sm:$0xf]
      %v1134 = vld [vmem:[%s962 + $0x4] sm:$0x1]
      %v1135 = vld [vmem:[%s962 + $0x8] sm:$0xf]
      %v1136 = vld [vmem:[%s962 + $0xc] sm:$0x1]
      %v1137 = vld [vmem:[%s962 + $0x10] sm:$0xf]
      %v1138 = vld [vmem:[%s962 + $0x14] sm:$0x1]
      %v1139 = vld [vmem:[%s962 + $0x18] sm:$0xf]
      %v1140 = vld [vmem:[%s962 + $0x1c] sm:$0x1]
      %v1141 = vld [vmem:[%s962 + $0x20] sm:$0xf]
      %v1142 = vld [vmem:[%s962 + $0x24] sm:$0x1]
      %v1143 = vld [vmem:[%s962 + $0x28] sm:$0xf]
      %v1144 = vld [vmem:[%s962 + $0x2c] sm:$0x1]
      %v1145 = vld [vmem:[%s962 + $0x30] sm:$0xf]
      %v1146 = vld [vmem:[%s962 + $0x34] sm:$0x1]
      %v1147 = vld [vmem:[%s962 + $0x38] sm:$0xf]
      %v1148 = vld [vmem:[%s962 + $0x3c] sm:$0x1]
      %v1150 = vshrl.u32 %v1133, 16
      %v1152 = vrot.slane %v1150, 4
      %v1153 = vshll.u32 %v1133, 16
      %v1155 = vrot.slane %v1153, 5
      %v1156 = vor.u32 %v1152, %v1155
      %v1157 = vrot.slane %v1156, 4
      %v1159 = vshll.u32 %v1134, 16
      %v1161 = vrot.slane %v1159, 5
      %v1162 = vsel %vm350, %v1157, %v1161
      %v1164 = vshrl.u32 %v1135, 16
      %v1166 = vrot.slane %v1164, 4
      %v1167 = vshll.u32 %v1135, 16
      %v1169 = vrot.slane %v1167, 5
      %v1170 = vor.u32 %v1166, %v1169
      %v1171 = vrot.slane %v1170, 4
      %v1173 = vshll.u32 %v1136, 16
      %v1175 = vrot.slane %v1173, 5
      %v1176 = vsel %vm350, %v1171, %v1175
      %v1178 = vshrl.u32 %v1137, 16
      %v1180 = vrot.slane %v1178, 4
      %v1181 = vshll.u32 %v1137, 16
      %v1183 = vrot.slane %v1181, 5
      %v1184 = vor.u32 %v1180, %v1183
      %v1185 = vrot.slane %v1184, 4
      %v1187 = vshll.u32 %v1138, 16
      %v1189 = vrot.slane %v1187, 5
      %v1190 = vsel %vm350, %v1185, %v1189
      %v1192 = vshrl.u32 %v1139, 16
      %v1194 = vrot.slane %v1192, 4
      %v1195 = vshll.u32 %v1139, 16
      %v1197 = vrot.slane %v1195, 5
      %v1198 = vor.u32 %v1194, %v1197
      %v1199 = vrot.slane %v1198, 4
      %v1201 = vshll.u32 %v1140, 16
      %v1203 = vrot.slane %v1201, 5
      %v1204 = vsel %vm350, %v1199, %v1203
      %v1206 = vshrl.u32 %v1141, 16
      %v1208 = vrot.slane %v1206, 4
      %v1209 = vshll.u32 %v1141, 16
      %v1211 = vrot.slane %v1209, 5
      %v1212 = vor.u32 %v1208, %v1211
      %v1213 = vrot.slane %v1212, 4
      %v1215 = vshll.u32 %v1142, 16
      %v1217 = vrot.slane %v1215, 5
      %v1218 = vsel %vm350, %v1213, %v1217
      %v1220 = vshrl.u32 %v1143, 16
      %v1222 = vrot.slane %v1220, 4
      %v1223 = vshll.u32 %v1143, 16
      %v1225 = vrot.slane %v1223, 5
      %v1226 = vor.u32 %v1222, %v1225
      %v1227 = vrot.slane %v1226, 4
      %v1229 = vshll.u32 %v1144, 16
      %v1231 = vrot.slane %v1229, 5
      %v1232 = vsel %vm350, %v1227, %v1231
      %v1234 = vshrl.u32 %v1145, 16
      %v1236 = vrot.slane %v1234, 4
      %v1237 = vshll.u32 %v1145, 16
      %v1239 = vrot.slane %v1237, 5
      %v1240 = vor.u32 %v1236, %v1239
      %v1241 = vrot.slane %v1240, 4
      %v1243 = vshll.u32 %v1146, 16
      %v1245 = vrot.slane %v1243, 5
      %v1246 = vsel %vm350, %v1241, %v1245
      %v1248 = vshrl.u32 %v1147, 16
      %v1250 = vrot.slane %v1248, 4
      %v1251 = vshll.u32 %v1147, 16
      %v1253 = vrot.slane %v1251, 5
      %v1254 = vor.u32 %v1250, %v1253
      %v1255 = vrot.slane %v1254, 4
      %v1257 = vshll.u32 %v1148, 16
      %v1259 = vrot.slane %v1257, 5
      %v1260 = vsel %vm350, %v1255, %v1259
      %s1261 = scalar_lea.vmem %s1, 256
      %v1262 = vld [vmem:[%s1261] sm:$0xf]
      %v1263 = vld [vmem:[%s1261 + $0x4] sm:$0xf]
      %v1264 = vld [vmem:[%s1261 + $0x8] sm:$0xf]
      %v1265 = vld [vmem:[%s1261 + $0xc] sm:$0xf]
      %v1266 = vld [vmem:[%s1261 + $0x10] sm:$0xf]
      %v1267 = vld [vmem:[%s1261 + $0x14] sm:$0xf]
      %v1268 = vld [vmem:[%s1261 + $0x18] sm:$0xf]
      %v1269 = vld [vmem:[%s1261 + $0x1c] sm:$0xf]
      %v1270 = vld [vmem:[%s1261 + $0x20] sm:$0xf]
      %v1271 = vld [vmem:[%s1261 + $0x24] sm:$0xf]
      %v1272 = vld [vmem:[%s1261 + $0x28] sm:$0xf]
      %v1273 = vld [vmem:[%s1261 + $0x2c] sm:$0xf]
      %v1274 = vld [vmem:[%s1261 + $0x30] sm:$0xf]
      %v1275 = vld [vmem:[%s1261 + $0x34] sm:$0xf]
      %v1276 = vld [vmem:[%s1261 + $0x38] sm:$0xf]
      %v1277 = vld [vmem:[%s1261 + $0x3c] sm:$0xf]
      %v1278 = vunpack.c.l.b16 %v1162
      %v1279 = vunpack.c.l.b16 %v1176
      %v1280 = vunpack.c.l.b16 %v1190
      %v1281 = vunpack.c.l.b16 %v1204
      %v1282 = vunpack.c.l.b16 %v1218
      %v1283 = vunpack.c.l.b16 %v1232
      %v1284 = vunpack.c.l.b16 %v1246
      %v1285 = vunpack.c.l.b16 %v1260
      %v1286 = vpack.c.b16 %v1279, %v1278
      %v1287 = vpack.c.b16 %v1281, %v1280
      %v1288 = vpack.c.b16 %v1283, %v1282
      %v1289 = vpack.c.b16 %v1285, %v1284
      %v1310 = vunpack.c.l.b16 %v1262
      %v1311 = vunpack.c.l.b16 %v1263
      %v1312 = vunpack.c.l.b16 %v1264
      %v1313 = vunpack.c.l.b16 %v1265
      %v1314 = vunpack.c.l.b16 %v1266
      %v1315 = vunpack.c.l.b16 %v1267
      %v1316 = vunpack.c.l.b16 %v1268
      %v1317 = vunpack.c.l.b16 %v1269
      %v1318 = vunpack.c.l.b16 %v1270
      %v1319 = vunpack.c.l.b16 %v1271
      %v1320 = vunpack.c.l.b16 %v1272
      %v1321 = vunpack.c.l.b16 %v1273
      %v1322 = vunpack.c.l.b16 %v1274
      %v1323 = vunpack.c.l.b16 %v1275
      %v1324 = vunpack.c.l.b16 %v1276
      %v1325 = vunpack.c.l.b16 %v1277
      %v1326 = vpack.c.b16 %v1311, %v1310
      %v1327 = vpack.c.b16 %v1313, %v1312
      %v1328 = vpack.c.b16 %v1315, %v1314
      %v1329 = vpack.c.b16 %v1317, %v1316
      %v1330 = vpack.c.b16 %v1319, %v1318
      %v1331 = vpack.c.b16 %v1321, %v1320
      %v1332 = vpack.c.b16 %v1323, %v1322
      %v1333 = vpack.c.b16 %v1325, %v1324
      %1342 = vmatprep.subr.bf16.mxu0 0
      %1343 = vmatpush1.bf16.msra.mxu0 %v1326
      %1344 = vmatprep.subr.bf16.mxu0 0
      %1345 = vmatpush1.bf16.msra.mxu0 %v1327
      %1346 = vmatprep.subr.bf16.mxu0 0
      %1347 = vmatpush1.bf16.msra.mxu0 %v1328
      %1348 = vmatprep.subr.bf16.mxu0 0
      %1349 = vmatpush1.bf16.msra.mxu0 %v1329
      %1350 = vmatprep.subr.bf16.mxu0 0
      %1351 = vmatpush1.bf16.msra.mxu0 %v1330
      %1352 = vmatprep.subr.bf16.mxu0 0
      %1353 = vmatpush1.bf16.msra.mxu0 %v1331
      %1354 = vmatprep.subr.bf16.mxu0 0
      %1355 = vmatpush1.bf16.msra.mxu0 %v1332
      %1356 = vmatprep.subr.bf16.mxu0 0
      %1357 = vmatpush1.bf16.msra.mxu0 %v1333
      %1358 = vmatprep.subr.bf16.mxu0 0
      %1359 = vmatpush1.bf16.msra.mxu0 0
      %1360 = vmatprep.subr.bf16.mxu0 0
      %1361 = vmatpush1.bf16.msra.mxu0 0
      %1362 = vmatprep.subr.bf16.mxu0 0
      %1363 = vmatpush1.bf16.msra.mxu0 0
      %1364 = vmatprep.subr.bf16.mxu0 0
      %1365 = vmatpush1.bf16.msra.mxu0 0
      %1366 = vmatprep.subr.bf16.mxu0 0
      %1367 = vmatpush1.bf16.msra.mxu0 0
      %1368 = vmatprep.subr.bf16.mxu0 0
      %1369 = vmatpush1.bf16.msra.mxu0 0
      %1370 = vmatprep.subr.bf16.mxu0 0
      %1371 = vmatpush1.bf16.msra.mxu0 0
      %1372 = vmatprep.subr.bf16.mxu0 0
      %1373 = vmatpush1.bf16.msra.mxu0 0
      %1374 = vmatprep.mubr.bf16.mxu0 0
      %1375 = vmatmul.mubr.bf16.gmra.mrb[0].mxu0 %v1286
      %v1376 = vpop.f32.mrb[0].mxu0
      %v1377 = vadd.f32 0.0, %v1376
      %v1378 = vpop.f32.mrb[0].mxu0
      %v1379 = vpop.f32.mrb[0].mxu0
      %v1380 = vadd.f32 0.0, %v1379
      %v1381 = vpop.f32.mrb[0].mxu0
      %1382 = vmatprep.mubr.bf16.mxu0 0
      %1383 = vmatmul.mubr.bf16.gmra.mrb[0].mxu0 %v1287
      %v1384 = vpop.f32.mrb[0].mxu0
      %v1385 = vadd.f32 0.0, %v1384
      %v1386 = vpop.f32.mrb[0].mxu0
      %v1387 = vpop.f32.mrb[0].mxu0
      %v1388 = vadd.f32 0.0, %v1387
      %v1389 = vpop.f32.mrb[0].mxu0
      %1390 = vmatprep.mubr.bf16.mxu0 0
      %1391 = vmatmul.mubr.bf16.gmra.mrb[0].mxu0 %v1288
      %v1392 = vpop.f32.mrb[0].mxu0
      %v1393 = vadd.f32 0.0, %v1392
      %v1394 = vpop.f32.mrb[0].mxu0
      %v1395 = vpop.f32.mrb[0].mxu0
      %v1396 = vadd.f32 0.0, %v1395
      %v1397 = vpop.f32.mrb[0].mxu0
      %1398 = vmatprep.mubr.bf16.mxu0 0
      %1399 = vmatmul.mubr.bf16.gmra.mrb[0].mxu0 %v1289
      %v1400 = vpop.f32.mrb[0].mxu0
      %v1401 = vadd.f32 0.0, %v1400
      %v1402 = vpop.f32.mrb[0].mxu0
      %v1403 = vpop.f32.mrb[0].mxu0
      %v1404 = vadd.f32 0.0, %v1403
      %v1405 = vpop.f32.mrb[0].mxu0
      %1406 = vdwg.mxu0
      %v1407 = vadd.f32 %v1125, %v1377
      %v1408 = vadd.f32 %v1126, %v1380
      %v1409 = vadd.f32 %v1127, %v1385
      %v1410 = vadd.f32 %v1128, %v1388
      %v1411 = vadd.f32 %v1129, %v1393
      %v1412 = vadd.f32 %v1130, %v1396
      %v1413 = vadd.f32 %v1131, %v1401
      %v1414 = vadd.f32 %v1132, %v1404
      %v1415 = vld [vmem:[%s962] sm:$0xe]
      %v1416 = vld [vmem:[%s962 + $0x8] sm:$0xe]
      %v1417 = vld [vmem:[%s962 + $0x10] sm:$0xe]
      %v1418 = vld [vmem:[%s962 + $0x18] sm:$0xe]
      %v1419 = vld [vmem:[%s962 + $0x20] sm:$0xe]
      %v1420 = vld [vmem:[%s962 + $0x28] sm:$0xe]
      %v1421 = vld [vmem:[%s962 + $0x30] sm:$0xe]
      %v1422 = vld [vmem:[%s962 + $0x38] sm:$0xe]
      %v1439 = vrot.slane %v1415, 5
      %v1440 = vrot.slane %v1439, 4
      %v1441 = vrot.slane %v1134, 5
      %v1442 = vsel %vm772, %v1440, %v1441
      %v1443 = vrot.slane %v1416, 5
      %v1444 = vrot.slane %v1443, 4
      %v1445 = vrot.slane %v1136, 5
      %v1446 = vsel %vm772, %v1444, %v1445
      %v1447 = vrot.slane %v1417, 5
      %v1448 = vrot.slane %v1447, 4
      %v1449 = vrot.slane %v1138, 5
      %v1450 = vsel %vm772, %v1448, %v1449
      %v1451 = vrot.slane %v1418, 5
      %v1452 = vrot.slane %v1451, 4
      %v1453 = vrot.slane %v1140, 5
      %v1454 = vsel %vm772, %v1452, %v1453
      %v1455 = vrot.slane %v1419, 5
      %v1456 = vrot.slane %v1455, 4
      %v1457 = vrot.slane %v1142, 5
      %v1458 = vsel %vm772, %v1456, %v1457
      %v1459 = vrot.slane %v1420, 5
      %v1460 = vrot.slane %v1459, 4
      %v1461 = vrot.slane %v1144, 5
      %v1462 = vsel %vm772, %v1460, %v1461
      %v1463 = vrot.slane %v1421, 5
      %v1464 = vrot.slane %v1463, 4
      %v1465 = vrot.slane %v1146, 5
      %v1466 = vsel %vm772, %v1464, %v1465
      %v1467 = vrot.slane %v1422, 5
      %v1468 = vrot.slane %v1467, 4
      %v1469 = vrot.slane %v1148, 5
      %v1470 = vsel %vm772, %v1468, %v1469
      %s1471 = scalar_lea.vmem %s1, 320
      %v1472 = vld [vmem:[%s1471] sm:$0xf]
      %v1473 = vld [vmem:[%s1471 + $0x4] sm:$0xf]
      %v1474 = vld [vmem:[%s1471 + $0x8] sm:$0xf]
      %v1475 = vld [vmem:[%s1471 + $0xc] sm:$0xf]
      %v1476 = vld [vmem:[%s1471 + $0x10] sm:$0xf]
      %v1477 = vld [vmem:[%s1471 + $0x14] sm:$0xf]
      %v1478 = vld [vmem:[%s1471 + $0x18] sm:$0xf]
      %v1479 = vld [vmem:[%s1471 + $0x1c] sm:$0xf]
      %v1480 = vld [vmem:[%s1471 + $0x20] sm:$0xf]
      %v1481 = vld [vmem:[%s1471 + $0x24] sm:$0xf]
      %v1482 = vld [vmem:[%s1471 + $0x28] sm:$0xf]
      %v1483 = vld [vmem:[%s1471 + $0x2c] sm:$0xf]
      %v1484 = vld [vmem:[%s1471 + $0x30] sm:$0xf]
      %v1485 = vld [vmem:[%s1471 + $0x34] sm:$0xf]
      %v1486 = vld [vmem:[%s1471 + $0x38] sm:$0xf]
      %v1487 = vld [vmem:[%s1471 + $0x3c] sm:$0xf]
      %v1488 = vunpack.c.l.b16 %v1442
      %v1489 = vunpack.c.l.b16 %v1446
      %v1490 = vunpack.c.l.b16 %v1450
      %v1491 = vunpack.c.l.b16 %v1454
      %v1492 = vunpack.c.l.b16 %v1458
      %v1493 = vunpack.c.l.b16 %v1462
      %v1494 = vunpack.c.l.b16 %v1466
      %v1495 = vunpack.c.l.b16 %v1470
      %v1496 = vpack.c.b16 %v1489, %v1488
      %v1497 = vpack.c.b16 %v1491, %v1490
      %v1498 = vpack.c.b16 %v1493, %v1492
      %v1499 = vpack.c.b16 %v1495, %v1494
      %v1520 = vunpack.c.l.b16 %v1472
      %v1521 = vunpack.c.l.b16 %v1473
      %v1522 = vunpack.c.l.b16 %v1474
      %v1523 = vunpack.c.l.b16 %v1475
      %v1524 = vunpack.c.l.b16 %v1476
      %v1525 = vunpack.c.l.b16 %v1477
      %v1526 = vunpack.c.l.b16 %v1478
      %v1527 = vunpack.c.l.b16 %v1479
      %v1528 = vunpack.c.l.b16 %v1480
      %v1529 = vunpack.c.l.b16 %v1481
      %v1530 = vunpack.c.l.b16 %v1482
      %v1531 = vunpack.c.l.b16 %v1483
      %v1532 = vunpack.c.l.b16 %v1484
      %v1533 = vunpack.c.l.b16 %v1485
      %v1534 = vunpack.c.l.b16 %v1486
      %v1535 = vunpack.c.l.b16 %v1487
      %v1536 = vpack.c.b16 %v1521, %v1520
      %v1537 = vpack.c.b16 %v1523, %v1522
      %v1538 = vpack.c.b16 %v1525, %v1524
      %v1539 = vpack.c.b16 %v1527, %v1526
      %v1540 = vpack.c.b16 %v1529, %v1528
      %v1541 = vpack.c.b16 %v1531, %v1530
      %v1542 = vpack.c.b16 %v1533, %v1532
      %v1543 = vpack.c.b16 %v1535, %v1534
      %1552 = vmatprep.subr.bf16.mxu0 0
      %1553 = vmatpush1.bf16.msra.mxu0 %v1536
      %1554 = vmatprep.subr.bf16.mxu0 0
      %1555 = vmatpush1.bf16.msra.mxu0 %v1537
      %1556 = vmatprep.subr.bf16.mxu0 0
      %1557 = vmatpush1.bf16.msra.mxu0 %v1538
      %1558 = vmatprep.subr.bf16.mxu0 0
      %1559 = vmatpush1.bf16.msra.mxu0 %v1539
      %1560 = vmatprep.subr.bf16.mxu0 0
      %1561 = vmatpush1.bf16.msra.mxu0 %v1540
      %1562 = vmatprep.subr.bf16.mxu0 0
      %1563 = vmatpush1.bf16.msra.mxu0 %v1541
      %1564 = vmatprep.subr.bf16.mxu0 0
      %1565 = vmatpush1.bf16.msra.mxu0 %v1542
      %1566 = vmatprep.subr.bf16.mxu0 0
      %1567 = vmatpush1.bf16.msra.mxu0 %v1543
      %1568 = vmatprep.subr.bf16.mxu0 0
      %1569 = vmatpush1.bf16.msra.mxu0 0
      %1570 = vmatprep.subr.bf16.mxu0 0
      %1571 = vmatpush1.bf16.msra.mxu0 0
      %1572 = vmatprep.subr.bf16.mxu0 0
      %1573 = vmatpush1.bf16.msra.mxu0 0
      %1574 = vmatprep.subr.bf16.mxu0 0
      %1575 = vmatpush1.bf16.msra.mxu0 0
      %1576 = vmatprep.subr.bf16.mxu0 0
      %1577 = vmatpush1.bf16.msra.mxu0 0
      %1578 = vmatprep.subr.bf16.mxu0 0
      %1579 = vmatpush1.bf16.msra.mxu0 0
      %1580 = vmatprep.subr.bf16.mxu0 0
      %1581 = vmatpush1.bf16.msra.mxu0 0
      %1582 = vmatprep.subr.bf16.mxu0 0
      %1583 = vmatpush1.bf16.msra.mxu0 0
      %1584 = vmatprep.mubr.bf16.mxu0 0
      %1585 = vmatmul.mubr.bf16.gmra.mrb[0].mxu0 %v1496
      %v1586 = vpop.f32.mrb[0].mxu0
      %v1587 = vadd.f32 0.0, %v1586
      %v1588 = vpop.f32.mrb[0].mxu0
      %v1589 = vpop.f32.mrb[0].mxu0
      %v1590 = vadd.f32 0.0, %v1589
      %v1591 = vpop.f32.mrb[0].mxu0
      %1592 = vmatprep.mubr.bf16.mxu0 0
      %1593 = vmatmul.mubr.bf16.gmra.mrb[0].mxu0 %v1497
      %v1594 = vpop.f32.mrb[0].mxu0
      %v1595 = vadd.f32 0.0, %v1594
      %v1596 = vpop.f32.mrb[0].mxu0
      %v1597 = vpop.f32.mrb[0].mxu0
      %v1598 = vadd.f32 0.0, %v1597
      %v1599 = vpop.f32.mrb[0].mxu0
      %1600 = vmatprep.mubr.bf16.mxu0 0
      %1601 = vmatmul.mubr.bf16.gmra.mrb[0].mxu0 %v1498
      %v1602 = vpop.f32.mrb[0].mxu0
      %v1603 = vadd.f32 0.0, %v1602
      %v1604 = vpop.f32.mrb[0].mxu0
      %v1605 = vpop.f32.mrb[0].mxu0
      %v1606 = vadd.f32 0.0, %v1605
      %v1607 = vpop.f32.mrb[0].mxu0
      %1608 = vmatprep.mubr.bf16.mxu0 0
      %1609 = vmatmul.mubr.bf16.gmra.mrb[0].mxu0 %v1499
      %v1610 = vpop.f32.mrb[0].mxu0
      %v1611 = vadd.f32 0.0, %v1610
      %v1612 = vpop.f32.mrb[0].mxu0
      %v1613 = vpop.f32.mrb[0].mxu0
      %v1614 = vadd.f32 0.0, %v1613
      %v1615 = vpop.f32.mrb[0].mxu0
      %1616 = vdwg.mxu0
      %v1617 = vadd.f32 %v1407, %v1587
      %v1618 = vadd.f32 %v1408, %v1590
      %v1619 = vadd.f32 %v1409, %v1595
      %v1620 = vadd.f32 %v1410, %v1598
      %v1621 = vadd.f32 %v1411, %v1603
      %v1622 = vadd.f32 %v1412, %v1606
      %v1623 = vadd.f32 %v1413, %v1611
      %v1624 = vadd.f32 %v1414, %v1614
      %s1625 = sadd.s32 %s312, 2
      %s1626 = smul.u32 %s1625, 2
      %s1627 = smul.addr %s1626, 4
      %s1628 = scalar_lea.vmem %s290, %s1627
      %v1629 = vld [vmem:[%s1628] sm:$0xf]
      %v1630 = vld [vmem:[%s1628 + $0x8] sm:$0xf]
      %v1631 = vld [vmem:[%s1628 + $0x10] sm:$0xf]
      %v1632 = vld [vmem:[%s1628 + $0x18] sm:$0xf]
      %v1633 = vld [vmem:[%s1628 + $0x20] sm:$0xf]
      %v1634 = vld [vmem:[%s1628 + $0x28] sm:$0xf]
      %v1635 = vld [vmem:[%s1628 + $0x30] sm:$0xf]
      %v1636 = vld [vmem:[%s1628 + $0x38] sm:$0xf]
      %s1637 = scalar_lea.vmem %s1, 384
      %v1638 = vld [vmem:[%s1637] sm:$0xf]
      %v1639 = vld [vmem:[%s1637 + $0x4] sm:$0xf]
      %v1640 = vld [vmem:[%s1637 + $0x8] sm:$0xf]
      %v1641 = vld [vmem:[%s1637 + $0xc] sm:$0xf]
      %v1642 = vld [vmem:[%s1637 + $0x10] sm:$0xf]
      %v1643 = vld [vmem:[%s1637 + $0x14] sm:$0xf]
      %v1644 = vld [vmem:[%s1637 + $0x18] sm:$0xf]
      %v1645 = vld [vmem:[%s1637 + $0x1c] sm:$0xf]
      %v1646 = vld [vmem:[%s1637 + $0x20] sm:$0xf]
      %v1647 = vld [vmem:[%s1637 + $0x24] sm:$0xf]
      %v1648 = vld [vmem:[%s1637 + $0x28] sm:$0xf]
      %v1649 = vld [vmem:[%s1637 + $0x2c] sm:$0xf]
      %v1650 = vld [vmem:[%s1637 + $0x30] sm:$0xf]
      %v1651 = vld [vmem:[%s1637 + $0x34] sm:$0xf]
      %v1652 = vld [vmem:[%s1637 + $0x38] sm:$0xf]
      %v1653 = vld [vmem:[%s1637 + $0x3c] sm:$0xf]
      %v1662 = vunpack.c.l.b16 %v1629
      %v1663 = vunpack.c.l.b16 %v1630
      %v1664 = vunpack.c.l.b16 %v1631
      %v1665 = vunpack.c.l.b16 %v1632
      %v1666 = vunpack.c.l.b16 %v1633
      %v1667 = vunpack.c.l.b16 %v1634
      %v1668 = vunpack.c.l.b16 %v1635
      %v1669 = vunpack.c.l.b16 %v1636
      %v1670 = vpack.c.b16 %v1663, %v1662
      %v1671 = vpack.c.b16 %v1665, %v1664
      %v1672 = vpack.c.b16 %v1667, %v1666
      %v1673 = vpack.c.b16 %v1669, %v1668
      %v1694 = vunpack.c.l.b16 %v1638
      %v1695 = vunpack.c.l.b16 %v1639
      %v1696 = vunpack.c.l.b16 %v1640
      %v1697 = vunpack.c.l.b16 %v1641
      %v1698 = vunpack.c.l.b16 %v1642
      %v1699 = vunpack.c.l.b16 %v1643
      %v1700 = vunpack.c.l.b16 %v1644
      %v1701 = vunpack.c.l.b16 %v1645
      %v1702 = vunpack.c.l.b16 %v1646
      %v1703 = vunpack.c.l.b16 %v1647
      %v1704 = vunpack.c.l.b16 %v1648
      %v1705 = vunpack.c.l.b16 %v1649
      %v1706 = vunpack.c.l.b16 %v1650
      %v1707 = vunpack.c.l.b16 %v1651
      %v1708 = vunpack.c.l.b16 %v1652
      %v1709 = vunpack.c.l.b16 %v1653
      %v1710 = vpack.c.b16 %v1695, %v1694
      %v1711 = vpack.c.b16 %v1697, %v1696
      %v1712 = vpack.c.b16 %v1699, %v1698
      %v1713 = vpack.c.b16 %v1701, %v1700
      %v1714 = vpack.c.b16 %v1703, %v1702
      %v1715 = vpack.c.b16 %v1705, %v1704
      %v1716 = vpack.c.b16 %v1707, %v1706
      %v1717 = vpack.c.b16 %v1709, %v1708
      %1726 = vmatprep.subr.bf16.mxu0 0
      %1727 = vmatpush1.bf16.msra.mxu0 %v1710
      %1728 = vmatprep.subr.bf16.mxu0 0
      %1729 = vmatpush1.bf16.msra.mxu0 %v1711
      %1730 = vmatprep.subr.bf16.mxu0 0
      %1731 = vmatpush1.bf16.msra.mxu0 %v1712
      %1732 = vmatprep.subr.bf16.mxu0 0
      %1733 = vmatpush1.bf16.msra.mxu0 %v1713
      %1734 = vmatprep.subr.bf16.mxu0 0
      %1735 = vmatpush1.bf16.msra.mxu0 %v1714
      %1736 = vmatprep.subr.bf16.mxu0 0
      %1737 = vmatpush1.bf16.msra.mxu0 %v1715
      %1738 = vmatprep.subr.bf16.mxu0 0
      %1739 = vmatpush1.bf16.msra.mxu0 %v1716
      %1740 = vmatprep.subr.bf16.mxu0 0
      %1741 = vmatpush1.bf16.msra.mxu0 %v1717
      %1742 = vmatprep.subr.bf16.mxu0 0
      %1743 = vmatpush1.bf16.msra.mxu0 0
      %1744 = vmatprep.subr.bf16.mxu0 0
      %1745 = vmatpush1.bf16.msra.mxu0 0
      %1746 = vmatprep.subr.bf16.mxu0 0
      %1747 = vmatpush1.bf16.msra.mxu0 0
      %1748 = vmatprep.subr.bf16.mxu0 0
      %1749 = vmatpush1.bf16.msra.mxu0 0
      %1750 = vmatprep.subr.bf16.mxu0 0
      %1751 = vmatpush1.bf16.msra.mxu0 0
      %1752 = vmatprep.subr.bf16.mxu0 0
      %1753 = vmatpush1.bf16.msra.mxu0 0
      %1754 = vmatprep.subr.bf16.mxu0 0
      %1755 = vmatpush1.bf16.msra.mxu0 0
      %1756 = vmatprep.subr.bf16.mxu0 0
      %1757 = vmatpush1.bf16.msra.mxu0 0
      %1758 = vmatprep.mubr.bf16.mxu0 0
      %1759 = vmatmul.mubr.bf16.gmra.mrb[0].mxu0 %v1670
      %v1760 = vpop.f32.mrb[0].mxu0
      %v1761 = vadd.f32 0.0, %v1760
      %v1762 = vpop.f32.mrb[0].mxu0
      %v1763 = vpop.f32.mrb[0].mxu0
      %v1764 = vadd.f32 0.0, %v1763
      %v1765 = vpop.f32.mrb[0].mxu0
      %1766 = vmatprep.mubr.bf16.mxu0 0
      %1767 = vmatmul.mubr.bf16.gmra.mrb[0].mxu0 %v1671
      %v1768 = vpop.f32.mrb[0].mxu0
      %v1769 = vadd.f32 0.0, %v1768
      %v1770 = vpop.f32.mrb[0].mxu0
      %v1771 = vpop.f32.mrb[0].mxu0
      %v1772 = vadd.f32 0.0, %v1771
      %v1773 = vpop.f32.mrb[0].mxu0
      %1774 = vmatprep.mubr.bf16.mxu0 0
      %1775 = vmatmul.mubr.bf16.gmra.mrb[0].mxu0 %v1672
      %v1776 = vpop.f32.mrb[0].mxu0
      %v1777 = vadd.f32 0.0, %v1776
      %v1778 = vpop.f32.mrb[0].mxu0
      %v1779 = vpop.f32.mrb[0].mxu0
      %v1780 = vadd.f32 0.0, %v1779
      %v1781 = vpop.f32.mrb[0].mxu0
      %1782 = vmatprep.mubr.bf16.mxu0 0
      %1783 = vmatmul.mubr.bf16.gmra.mrb[0].mxu0 %v1673
      %v1784 = vpop.f32.mrb[0].mxu0
      %v1785 = vadd.f32 0.0, %v1784
      %v1786 = vpop.f32.mrb[0].mxu0
      %v1787 = vpop.f32.mrb[0].mxu0
      %v1788 = vadd.f32 0.0, %v1787
      %v1789 = vpop.f32.mrb[0].mxu0
      %1790 = vdwg.mxu0
      %v1791 = vadd.f32 %v1617, %v1761
      %v1792 = vadd.f32 %v1618, %v1764
      %v1793 = vadd.f32 %v1619, %v1769
      %v1794 = vadd.f32 %v1620, %v1772
      %v1795 = vadd.f32 %v1621, %v1777
      %v1796 = vadd.f32 %v1622, %v1780
      %v1797 = vadd.f32 %v1623, %v1785
      %v1798 = vadd.f32 %v1624, %v1788
      %v1799 = vld [vmem:[%s1628] sm:$0xf]
      %v1800 = vld [vmem:[%s1628 + $0x4] sm:$0x1]
      %v1801 = vld [vmem:[%s1628 + $0x8] sm:$0xf]
      %v1802 = vld [vmem:[%s1628 + $0xc] sm:$0x1]
      %v1803 = vld [vmem:[%s1628 + $0x10] sm:$0xf]
      %v1804 = vld [vmem:[%s1628 + $0x14] sm:$0x1]
      %v1805 = vld [vmem:[%s1628 + $0x18] sm:$0xf]
      %v1806 = vld [vmem:[%s1628 + $0x1c] sm:$0x1]
      %v1807 = vld [vmem:[%s1628 + $0x20] sm:$0xf]
      %v1808 = vld [vmem:[%s1628 + $0x24] sm:$0x1]
      %v1809 = vld [vmem:[%s1628 + $0x28] sm:$0xf]
      %v1810 = vld [vmem:[%s1628 + $0x2c] sm:$0x1]
      %v1811 = vld [vmem:[%s1628 + $0x30] sm:$0xf]
      %v1812 = vld [vmem:[%s1628 + $0x34] sm:$0x1]
      %v1813 = vld [vmem:[%s1628 + $0x38] sm:$0xf]
      %v1814 = vld [vmem:[%s1628 + $0x3c] sm:$0x1]
      %v1816 = vshrl.u32 %v1799, 16
      %v1818 = vrot.slane %v1816, 4
      %v1819 = vshll.u32 %v1799, 16
      %v1821 = vrot.slane %v1819, 5
      %v1822 = vor.u32 %v1818, %v1821
      %v1823 = vrot.slane %v1822, 4
      %v1825 = vshll.u32 %v1800, 16
      %v1827 = vrot.slane %v1825, 5
      %v1828 = vsel %vm350, %v1823, %v1827
      %v1830 = vshrl.u32 %v1801, 16
      %v1832 = vrot.slane %v1830, 4
      %v1833 = vshll.u32 %v1801, 16
      %v1835 = vrot.slane %v1833, 5
      %v1836 = vor.u32 %v1832, %v1835
      %v1837 = vrot.slane %v1836, 4
      %v1839 = vshll.u32 %v1802, 16
      %v1841 = vrot.slane %v1839, 5
      %v1842 = vsel %vm350, %v1837, %v1841
      %v1844 = vshrl.u32 %v1803, 16
      %v1846 = vrot.slane %v1844, 4
      %v1847 = vshll.u32 %v1803, 16
      %v1849 = vrot.slane %v1847, 5
      %v1850 = vor.u32 %v1846, %v1849
      %v1851 = vrot.slane %v1850, 4
      %v1853 = vshll.u32 %v1804, 16
      %v1855 = vrot.slane %v1853, 5
      %v1856 = vsel %vm350, %v1851, %v1855
      %v1858 = vshrl.u32 %v1805, 16
      %v1860 = vrot.slane %v1858, 4
      %v1861 = vshll.u32 %v1805, 16
      %v1863 = vrot.slane %v1861, 5
      %v1864 = vor.u32 %v1860, %v1863
      %v1865 = vrot.slane %v1864, 4
      %v1867 = vshll.u32 %v1806, 16
      %v1869 = vrot.slane %v1867, 5
      %v1870 = vsel %vm350, %v1865, %v1869
      %v1872 = vshrl.u32 %v1807, 16
      %v1874 = vrot.slane %v1872, 4
      %v1875 = vshll.u32 %v1807, 16
      %v1877 = vrot.slane %v1875, 5
      %v1878 = vor.u32 %v1874, %v1877
      %v1879 = vrot.slane %v1878, 4
      %v1881 = vshll.u32 %v1808, 16
      %v1883 = vrot.slane %v1881, 5
      %v1884 = vsel %vm350, %v1879, %v1883
      %v1886 = vshrl.u32 %v1809, 16
      %v1888 = vrot.slane %v1886, 4
      %v1889 = vshll.u32 %v1809, 16
      %v1891 = vrot.slane %v1889, 5
      %v1892 = vor.u32 %v1888, %v1891
      %v1893 = vrot.slane %v1892, 4
      %v1895 = vshll.u32 %v1810, 16
      %v1897 = vrot.slane %v1895, 5
      %v1898 = vsel %vm350, %v1893, %v1897
      %v1900 = vshrl.u32 %v1811, 16
      %v1902 = vrot.slane %v1900, 4
      %v1903 = vshll.u32 %v1811, 16
      %v1905 = vrot.slane %v1903, 5
      %v1906 = vor.u32 %v1902, %v1905
      %v1907 = vrot.slane %v1906, 4
      %v1909 = vshll.u32 %v1812, 16
      %v1911 = vrot.slane %v1909, 5
      %v1912 = vsel %vm350, %v1907, %v1911
      %v1914 = vshrl.u32 %v1813, 16
      %v1916 = vrot.slane %v1914, 4
      %v1917 = vshll.u32 %v1813, 16
      %v1919 = vrot.slane %v1917, 5
      %v1920 = vor.u32 %v1916, %v1919
      %v1921 = vrot.slane %v1920, 4
      %v1923 = vshll.u32 %v1814, 16
      %v1925 = vrot.slane %v1923, 5
      %v1926 = vsel %vm350, %v1921, %v1925
      %s1927 = scalar_lea.vmem %s1, 448
      %v1928 = vld [vmem:[%s1927] sm:$0xf]
      %v1929 = vld [vmem:[%s1927 + $0x4] sm:$0xf]
      %v1930 = vld [vmem:[%s1927 + $0x8] sm:$0xf]
      %v1931 = vld [vmem:[%s1927 + $0xc] sm:$0xf]
      %v1932 = vld [vmem:[%s1927 + $0x10] sm:$0xf]
      %v1933 = vld [vmem:[%s1927 + $0x14] sm:$0xf]
      %v1934 = vld [vmem:[%s1927 + $0x18] sm:$0xf]
      %v1935 = vld [vmem:[%s1927 + $0x1c] sm:$0xf]
      %v1936 = vld [vmem:[%s1927 + $0x20] sm:$0xf]
      %v1937 = vld [vmem:[%s1927 + $0x24] sm:$0xf]
      %v1938 = vld [vmem:[%s1927 + $0x28] sm:$0xf]
      %v1939 = vld [vmem:[%s1927 + $0x2c] sm:$0xf]
      %v1940 = vld [vmem:[%s1927 + $0x30] sm:$0xf]
      %v1941 = vld [vmem:[%s1927 + $0x34] sm:$0xf]
      %v1942 = vld [vmem:[%s1927 + $0x38] sm:$0xf]
      %v1943 = vld [vmem:[%s1927 + $0x3c] sm:$0xf]
      %v1944 = vunpack.c.l.b16 %v1828
      %v1945 = vunpack.c.l.b16 %v1842
      %v1946 = vunpack.c.l.b16 %v1856
      %v1947 = vunpack.c.l.b16 %v1870
      %v1948 = vunpack.c.l.b16 %v1884
      %v1949 = vunpack.c.l.b16 %v1898
      %v1950 = vunpack.c.l.b16 %v1912
      %v1951 = vunpack.c.l.b16 %v1926
      %v1952 = vpack.c.b16 %v1945, %v1944
      %v1953 = vpack.c.b16 %v1947, %v1946
      %v1954 = vpack.c.b16 %v1949, %v1948
      %v1955 = vpack.c.b16 %v1951, %v1950
      %v1976 = vunpack.c.l.b16 %v1928
      %v1977 = vunpack.c.l.b16 %v1929
      %v1978 = vunpack.c.l.b16 %v1930
      %v1979 = vunpack.c.l.b16 %v1931
      %v1980 = vunpack.c.l.b16 %v1932
      %v1981 = vunpack.c.l.b16 %v1933
      %v1982 = vunpack.c.l.b16 %v1934
      %v1983 = vunpack.c.l.b16 %v1935
      %v1984 = vunpack.c.l.b16 %v1936
      %v1985 = vunpack.c.l.b16 %v1937
      %v1986 = vunpack.c.l.b16 %v1938
      %v1987 = vunpack.c.l.b16 %v1939
      %v1988 = vunpack.c.l.b16 %v1940
      %v1989 = vunpack.c.l.b16 %v1941
      %v1990 = vunpack.c.l.b16 %v1942
      %v1991 = vunpack.c.l.b16 %v1943
      %v1992 = vpack.c.b16 %v1977, %v1976
      %v1993 = vpack.c.b16 %v1979, %v1978
      %v1994 = vpack.c.b16 %v1981, %v1980
      %v1995 = vpack.c.b16 %v1983, %v1982
      %v1996 = vpack.c.b16 %v1985, %v1984
      %v1997 = vpack.c.b16 %v1987, %v1986
      %v1998 = vpack.c.b16 %v1989, %v1988
      %v1999 = vpack.c.b16 %v1991, %v1990
      %2008 = vmatprep.subr.bf16.mxu0 0
      %2009 = vmatpush1.bf16.msra.mxu0 %v1992
      %2010 = vmatprep.subr.bf16.mxu0 0
      %2011 = vmatpush1.bf16.msra.mxu0 %v1993
      %2012 = vmatprep.subr.bf16.mxu0 0
      %2013 = vmatpush1.bf16.msra.mxu0 %v1994
      %2014 = vmatprep.subr.bf16.mxu0 0
      %2015 = vmatpush1.bf16.msra.mxu0 %v1995
      %2016 = vmatprep.subr.bf16.mxu0 0
      %2017 = vmatpush1.bf16.msra.mxu0 %v1996
      %2018 = vmatprep.subr.bf16.mxu0 0
      %2019 = vmatpush1.bf16.msra.mxu0 %v1997
      %2020 = vmatprep.subr.bf16.mxu0 0
      %2021 = vmatpush1.bf16.msra.mxu0 %v1998
      %2022 = vmatprep.subr.bf16.mxu0 0
      %2023 = vmatpush1.bf16.msra.mxu0 %v1999
      %2024 = vmatprep.subr.bf16.mxu0 0
      %2025 = vmatpush1.bf16.msra.mxu0 0
      %2026 = vmatprep.subr.bf16.mxu0 0
      %2027 = vmatpush1.bf16.msra.mxu0 0
      %2028 = vmatprep.subr.bf16.mxu0 0
      %2029 = vmatpush1.bf16.msra.mxu0 0
      %2030 = vmatprep.subr.bf16.mxu0 0
      %2031 = vmatpush1.bf16.msra.mxu0 0
      %2032 = vmatprep.subr.bf16.mxu0 0
      %2033 = vmatpush1.bf16.msra.mxu0 0
      %2034 = vmatprep.subr.bf16.mxu0 0
      %2035 = vmatpush1.bf16.msra.mxu0 0
      %2036 = vmatprep.subr.bf16.mxu0 0
      %2037 = vmatpush1.bf16.msra.mxu0 0
      %2038 = vmatprep.subr.bf16.mxu0 0
      %2039 = vmatpush1.bf16.msra.mxu0 0
      %2040 = vmatprep.mubr.bf16.mxu0 0
      %2041 = vmatmul.mubr.bf16.gmra.mrb[0].mxu0 %v1952
      %v2042 = vpop.f32.mrb[0].mxu0
      %v2043 = vadd.f32 0.0, %v2042
      %v2044 = vpop.f32.mrb[0].mxu0
      %v2045 = vpop.f32.mrb[0].mxu0
      %v2046 = vadd.f32 0.0, %v2045
      %v2047 = vpop.f32.mrb[0].mxu0
      %2048 = vmatprep.mubr.bf16.mxu0 0
      %2049 = vmatmul.mubr.bf16.gmra.mrb[0].mxu0 %v1953
      %v2050 = vpop.f32.mrb[0].mxu0
      %v2051 = vadd.f32 0.0, %v2050
      %v2052 = vpop.f32.mrb[0].mxu0
      %v2053 = vpop.f32.mrb[0].mxu0
      %v2054 = vadd.f32 0.0, %v2053
      %v2055 = vpop.f32.mrb[0].mxu0
      %2056 = vmatprep.mubr.bf16.mxu0 0
      %2057 = vmatmul.mubr.bf16.gmra.mrb[0].mxu0 %v1954
      %v2058 = vpop.f32.mrb[0].mxu0
      %v2059 = vadd.f32 0.0, %v2058
      %v2060 = vpop.f32.mrb[0].mxu0
      %v2061 = vpop.f32.mrb[0].mxu0
      %v2062 = vadd.f32 0.0, %v2061
      %v2063 = vpop.f32.mrb[0].mxu0
      %2064 = vmatprep.mubr.bf16.mxu0 0
      %2065 = vmatmul.mubr.bf16.gmra.mrb[0].mxu0 %v1955
      %v2066 = vpop.f32.mrb[0].mxu0
      %v2067 = vadd.f32 0.0, %v2066
      %v2068 = vpop.f32.mrb[0].mxu0
      %v2069 = vpop.f32.mrb[0].mxu0
      %v2070 = vadd.f32 0.0, %v2069
      %v2071 = vpop.f32.mrb[0].mxu0
      %2072 = vdwg.mxu0
      %v2073 = vadd.f32 %v1791, %v2043
      %v2074 = vadd.f32 %v1792, %v2046
      %v2075 = vadd.f32 %v1793, %v2051
      %v2076 = vadd.f32 %v1794, %v2054
      %v2077 = vadd.f32 %v1795, %v2059
      %v2078 = vadd.f32 %v1796, %v2062
      %v2079 = vadd.f32 %v1797, %v2067
      %v2080 = vadd.f32 %v1798, %v2070
      %v2081 = vld [vmem:[%s1628] sm:$0xe]
      %v2082 = vld [vmem:[%s1628 + $0x8] sm:$0xe]
      %v2083 = vld [vmem:[%s1628 + $0x10] sm:$0xe]
      %v2084 = vld [vmem:[%s1628 + $0x18] sm:$0xe]
      %v2085 = vld [vmem:[%s1628 + $0x20] sm:$0xe]
      %v2086 = vld [vmem:[%s1628 + $0x28] sm:$0xe]
      %v2087 = vld [vmem:[%s1628 + $0x30] sm:$0xe]
      %v2088 = vld [vmem:[%s1628 + $0x38] sm:$0xe]
      %v2105 = vrot.slane %v2081, 5
      %v2106 = vrot.slane %v2105, 4
      %v2107 = vrot.slane %v1800, 5
      %v2108 = vsel %vm772, %v2106, %v2107
      %v2109 = vrot.slane %v2082, 5
      %v2110 = vrot.slane %v2109, 4
      %v2111 = vrot.slane %v1802, 5
      %v2112 = vsel %vm772, %v2110, %v2111
      %v2113 = vrot.slane %v2083, 5
      %v2114 = vrot.slane %v2113, 4
      %v2115 = vrot.slane %v1804, 5
      %v2116 = vsel %vm772, %v2114, %v2115
      %v2117 = vrot.slane %v2084, 5
      %v2118 = vrot.slane %v2117, 4
      %v2119 = vrot.slane %v1806, 5
      %v2120 = vsel %vm772, %v2118, %v2119
      %v2121 = vrot.slane %v2085, 5
      %v2122 = vrot.slane %v2121, 4
      %v2123 = vrot.slane %v1808, 5
      %v2124 = vsel %vm772, %v2122, %v2123
      %v2125 = vrot.slane %v2086, 5
      %v2126 = vrot.slane %v2125, 4
      %v2127 = vrot.slane %v1810, 5
      %v2128 = vsel %vm772, %v2126, %v2127
      %v2129 = vrot.slane %v2087, 5
      %v2130 = vrot.slane %v2129, 4
      %v2131 = vrot.slane %v1812, 5
      %v2132 = vsel %vm772, %v2130, %v2131
      %v2133 = vrot.slane %v2088, 5
      %v2134 = vrot.slane %v2133, 4
      %v2135 = vrot.slane %v1814, 5
      %v2136 = vsel %vm772, %v2134, %v2135
      %s2137 = scalar_lea.vmem %s1, 512
      %v2138 = vld [vmem:[%s2137] sm:$0xf]
      %v2139 = vld [vmem:[%s2137 + $0x4] sm:$0xf]
      %v2140 = vld [vmem:[%s2137 + $0x8] sm:$0xf]
      %v2141 = vld [vmem:[%s2137 + $0xc] sm:$0xf]
      %v2142 = vld [vmem:[%s2137 + $0x10] sm:$0xf]
      %v2143 = vld [vmem:[%s2137 + $0x14] sm:$0xf]
      %v2144 = vld [vmem:[%s2137 + $0x18] sm:$0xf]
      %v2145 = vld [vmem:[%s2137 + $0x1c] sm:$0xf]
      %v2146 = vld [vmem:[%s2137 + $0x20] sm:$0xf]
      %v2147 = vld [vmem:[%s2137 + $0x24] sm:$0xf]
      %v2148 = vld [vmem:[%s2137 + $0x28] sm:$0xf]
      %v2149 = vld [vmem:[%s2137 + $0x2c] sm:$0xf]
      %v2150 = vld [vmem:[%s2137 + $0x30] sm:$0xf]
      %v2151 = vld [vmem:[%s2137 + $0x34] sm:$0xf]
      %v2152 = vld [vmem:[%s2137 + $0x38] sm:$0xf]
      %v2153 = vld [vmem:[%s2137 + $0x3c] sm:$0xf]
      %v2154 = vunpack.c.l.b16 %v2108
      %v2155 = vunpack.c.l.b16 %v2112
      %v2156 = vunpack.c.l.b16 %v2116
      %v2157 = vunpack.c.l.b16 %v2120
      %v2158 = vunpack.c.l.b16 %v2124
      %v2159 = vunpack.c.l.b16 %v2128
      %v2160 = vunpack.c.l.b16 %v2132
      %v2161 = vunpack.c.l.b16 %v2136
      %v2162 = vpack.c.b16 %v2155, %v2154
      %v2163 = vpack.c.b16 %v2157, %v2156
      %v2164 = vpack.c.b16 %v2159, %v2158
      %v2165 = vpack.c.b16 %v2161, %v2160
      %v2186 = vunpack.c.l.b16 %v2138
      %v2187 = vunpack.c.l.b16 %v2139
      %v2188 = vunpack.c.l.b16 %v2140
      %v2189 = vunpack.c.l.b16 %v2141
      %v2190 = vunpack.c.l.b16 %v2142
      %v2191 = vunpack.c.l.b16 %v2143
      %v2192 = vunpack.c.l.b16 %v2144
      %v2193 = vunpack.c.l.b16 %v2145
      %v2194 = vunpack.c.l.b16 %v2146
      %v2195 = vunpack.c.l.b16 %v2147
      %v2196 = vunpack.c.l.b16 %v2148
      %v2197 = vunpack.c.l.b16 %v2149
      %v2198 = vunpack.c.l.b16 %v2150
      %v2199 = vunpack.c.l.b16 %v2151
      %v2200 = vunpack.c.l.b16 %v2152
      %v2201 = vunpack.c.l.b16 %v2153
      %v2202 = vpack.c.b16 %v2187, %v2186
      %v2203 = vpack.c.b16 %v2189, %v2188
      %v2204 = vpack.c.b16 %v2191, %v2190
      %v2205 = vpack.c.b16 %v2193, %v2192
      %v2206 = vpack.c.b16 %v2195, %v2194
      %v2207 = vpack.c.b16 %v2197, %v2196
      %v2208 = vpack.c.b16 %v2199, %v2198
      %v2209 = vpack.c.b16 %v2201, %v2200
      %2218 = vmatprep.subr.bf16.mxu0 0
      %2219 = vmatpush1.bf16.msra.mxu0 %v2202
      %2220 = vmatprep.subr.bf16.mxu0 0
      %2221 = vmatpush1.bf16.msra.mxu0 %v2203
      %2222 = vmatprep.subr.bf16.mxu0 0
      %2223 = vmatpush1.bf16.msra.mxu0 %v2204
      %2224 = vmatprep.subr.bf16.mxu0 0
      %2225 = vmatpush1.bf16.msra.mxu0 %v2205
      %2226 = vmatprep.subr.bf16.mxu0 0
      %2227 = vmatpush1.bf16.msra.mxu0 %v2206
      %2228 = vmatprep.subr.bf16.mxu0 0
      %2229 = vmatpush1.bf16.msra.mxu0 %v2207
      %2230 = vmatprep.subr.bf16.mxu0 0
      %2231 = vmatpush1.bf16.msra.mxu0 %v2208
      %2232 = vmatprep.subr.bf16.mxu0 0
      %2233 = vmatpush1.bf16.msra.mxu0 %v2209
      %2234 = vmatprep.subr.bf16.mxu0 0
      %2235 = vmatpush1.bf16.msra.mxu0 0
      %2236 = vmatprep.subr.bf16.mxu0 0
      %2237 = vmatpush1.bf16.msra.mxu0 0
      %2238 = vmatprep.subr.bf16.mxu0 0
      %2239 = vmatpush1.bf16.msra.mxu0 0
      %2240 = vmatprep.subr.bf16.mxu0 0
      %2241 = vmatpush1.bf16.msra.mxu0 0
      %2242 = vmatprep.subr.bf16.mxu0 0
      %2243 = vmatpush1.bf16.msra.mxu0 0
      %2244 = vmatprep.subr.bf16.mxu0 0
      %2245 = vmatpush1.bf16.msra.mxu0 0
      %2246 = vmatprep.subr.bf16.mxu0 0
      %2247 = vmatpush1.bf16.msra.mxu0 0
      %2248 = vmatprep.subr.bf16.mxu0 0
      %2249 = vmatpush1.bf16.msra.mxu0 0
      %2250 = vmatprep.mubr.bf16.mxu0 0
      %2251 = vmatmul.mubr.bf16.gmra.mrb[0].mxu0 %v2162
      %v2252 = vpop.f32.mrb[0].mxu0
      %v2253 = vadd.f32 0.0, %v2252
      %v2254 = vpop.f32.mrb[0].mxu0
      %v2255 = vpop.f32.mrb[0].mxu0
      %v2256 = vadd.f32 0.0, %v2255
      %v2257 = vpop.f32.mrb[0].mxu0
      %2258 = vmatprep.mubr.bf16.mxu0 0
      %2259 = vmatmul.mubr.bf16.gmra.mrb[0].mxu0 %v2163
      %v2260 = vpop.f32.mrb[0].mxu0
      %v2261 = vadd.f32 0.0, %v2260
      %v2262 = vpop.f32.mrb[0].mxu0
      %v2263 = vpop.f32.mrb[0].mxu0
      %v2264 = vadd.f32 0.0, %v2263
      %v2265 = vpop.f32.mrb[0].mxu0
      %2266 = vmatprep.mubr.bf16.mxu0 0
      %2267 = vmatmul.mubr.bf16.gmra.mrb[0].mxu0 %v2164
      %v2268 = vpop.f32.mrb[0].mxu0
      %v2269 = vadd.f32 0.0, %v2268
      %v2270 = vpop.f32.mrb[0].mxu0
      %v2271 = vpop.f32.mrb[0].mxu0
      %v2272 = vadd.f32 0.0, %v2271
      %v2273 = vpop.f32.mrb[0].mxu0
      %2274 = vmatprep.mubr.bf16.mxu0 0
      %2275 = vmatmul.mubr.bf16.gmra.mrb[0].mxu0 %v2165
      %v2276 = vpop.f32.mrb[0].mxu0
      %v2277 = vadd.f32 0.0, %v2276
      %v2278 = vpop.f32.mrb[0].mxu0
      %v2279 = vpop.f32.mrb[0].mxu0
      %v2280 = vadd.f32 0.0, %v2279
      %v2281 = vpop.f32.mrb[0].mxu0
      %2282 = vdwg.mxu0
      %v2283 = vadd.f32 %v2073, %v2253
      %v2284 = vadd.f32 %v2074, %v2256
      %v2285 = vadd.f32 %v2075, %v2261
      %v2286 = vadd.f32 %v2076, %v2264
      %v2287 = vadd.f32 %v2077, %v2269
      %v2288 = vadd.f32 %v2078, %v2272
      %v2289 = vadd.f32 %v2079, %v2277
      %v2290 = vadd.f32 %v2080, %v2280
      %v2291 = vld [vmem:[%s2] sm:$0x1]
      %v2293 = vlaneseq
      %v2294 = vshrl.u32 %v2293, 7
      %v2295 = vsub.s32 0, %v2294
      %v2296 = vrot.slane %v2291, %v2295
      %v2298 = vadd.f32 %v2283, %v2296
      %v2299 = vadd.f32 %v2284, %v2296
      %v2300 = vadd.f32 %v2285, %v2296
      %v2301 = vadd.f32 %v2286, %v2296
      %v2302 = vadd.f32 %v2287, %v2296
      %v2303 = vadd.f32 %v2288, %v2296
      %v2304 = vadd.f32 %v2289, %v2296
      %v2305 = vadd.f32 %v2290, %v2296
      %v2306 = vld [vmem:[%s299] sm:$0xf]
      %v2307 = vld [vmem:[%s299 + $0x4] sm:$0xf]
      %v2308 = vld [vmem:[%s299 + $0x8] sm:$0xf]
      %v2309 = vld [vmem:[%s299 + $0xc] sm:$0xf]
      %v2310 = vld [vmem:[%s299 + $0x10] sm:$0xf]
      %v2311 = vld [vmem:[%s299 + $0x14] sm:$0xf]
      %v2312 = vld [vmem:[%s299 + $0x18] sm:$0xf]
      %v2313 = vld [vmem:[%s299 + $0x1c] sm:$0xf]
      %v2314 = vld [vmem:[%s4] sm:$0xf]
      %v2315 = vld [vmem:[%s4 + $0x4] sm:$0xf]
      %v2316 = vld [vmem:[%s4 + $0x8] sm:$0xf]
      %v2317 = vld [vmem:[%s4 + $0xc] sm:$0xf]
      %v2318 = vld [vmem:[%s4 + $0x10] sm:$0xf]
      %v2319 = vld [vmem:[%s4 + $0x14] sm:$0xf]
      %v2320 = vld [vmem:[%s4 + $0x18] sm:$0xf]
      %v2321 = vld [vmem:[%s4 + $0x1c] sm:$0xf]
      %v2322 = vld [vmem:[%s4 + $0x20] sm:$0xf]
      %v2323 = vld [vmem:[%s4 + $0x24] sm:$0xf]
      %v2324 = vld [vmem:[%s4 + $0x28] sm:$0xf]
      %v2325 = vld [vmem:[%s4 + $0x2c] sm:$0xf]
      %v2326 = vld [vmem:[%s4 + $0x30] sm:$0xf]
      %v2327 = vld [vmem:[%s4 + $0x34] sm:$0xf]
      %v2328 = vld [vmem:[%s4 + $0x38] sm:$0xf]
      %v2329 = vld [vmem:[%s4 + $0x3c] sm:$0xf]
      %v2330 = vld [vmem:[%s5] sm:$0x1]
      %v2332 = vlaneseq
      %v2333 = vshrl.u32 %v2332, 7
      %v2334 = vsub.s32 0, %v2333
      %v2335 = vrot.slane %v2330, %v2334
      %v2345 = vunpack.c.l.b16 %v2306
      %v2346 = vunpack.c.l.b16 %v2307
      %v2347 = vunpack.c.l.b16 %v2308
      %v2348 = vunpack.c.l.b16 %v2309
      %v2349 = vunpack.c.l.b16 %v2310
      %v2350 = vunpack.c.l.b16 %v2311
      %v2351 = vunpack.c.l.b16 %v2312
      %v2352 = vunpack.c.l.b16 %v2313
      %v2353 = vpack.c.b16 %v2346, %v2345
      %v2354 = vpack.c.b16 %v2348, %v2347
      %v2355 = vpack.c.b16 %v2350, %v2349
      %v2356 = vpack.c.b16 %v2352, %v2351
      %v2377 = vunpack.c.l.b16 %v2314
      %v2378 = vunpack.c.l.b16 %v2315
      %v2379 = vunpack.c.l.b16 %v2316
      %v2380 = vunpack.c.l.b16 %v2317
      %v2381 = vunpack.c.l.b16 %v2318
      %v2382 = vunpack.c.l.b16 %v2319
      %v2383 = vunpack.c.l.b16 %v2320
      %v2384 = vunpack.c.l.b16 %v2321
      %v2385 = vunpack.c.l.b16 %v2322
      %v2386 = vunpack.c.l.b16 %v2323
      %v2387 = vunpack.c.l.b16 %v2324
      %v2388 = vunpack.c.l.b16 %v2325
      %v2389 = vunpack.c.l.b16 %v2326
      %v2390 = vunpack.c.l.b16 %v2327
      %v2391 = vunpack.c.l.b16 %v2328
      %v2392 = vunpack.c.l.b16 %v2329
      %v2393 = vpack.c.b16 %v2378, %v2377
      %v2394 = vpack.c.b16 %v2380, %v2379
      %v2395 = vpack.c.b16 %v2382, %v2381
      %v2396 = vpack.c.b16 %v2384, %v2383
      %v2397 = vpack.c.b16 %v2386, %v2385
      %v2398 = vpack.c.b16 %v2388, %v2387
      %v2399 = vpack.c.b16 %v2390, %v2389
      %v2400 = vpack.c.b16 %v2392, %v2391
      %2409 = vmatprep.subr.bf16.mxu0 0
      %2410 = vmatpush1.bf16.msra.mxu0 %v2393
      %2411 = vmatprep.subr.bf16.mxu0 0
      %2412 = vmatpush1.bf16.msra.mxu0 %v2394
      %2413 = vmatprep.subr.bf16.mxu0 0
      %2414 = vmatpush1.bf16.msra.mxu0 %v2395
      %2415 = vmatprep.subr.bf16.mxu0 0
      %2416 = vmatpush1.bf16.msra.mxu0 %v2396
      %2417 = vmatprep.subr.bf16.mxu0 0
      %2418 = vmatpush1.bf16.msra.mxu0 %v2397
      %2419 = vmatprep.subr.bf16.mxu0 0
      %2420 = vmatpush1.bf16.msra.mxu0 %v2398
      %2421 = vmatprep.subr.bf16.mxu0 0
      %2422 = vmatpush1.bf16.msra.mxu0 %v2399
      %2423 = vmatprep.subr.bf16.mxu0 0
      %2424 = vmatpush1.bf16.msra.mxu0 %v2400
      %2425 = vmatprep.subr.bf16.mxu0 0
      %2426 = vmatpush1.bf16.msra.mxu0 0
      %2427 = vmatprep.subr.bf16.mxu0 0
      %2428 = vmatpush1.bf16.msra.mxu0 0
      %2429 = vmatprep.subr.bf16.mxu0 0
      %2430 = vmatpush1.bf16.msra.mxu0 0
      %2431 = vmatprep.subr.bf16.mxu0 0
      %2432 = vmatpush1.bf16.msra.mxu0 0
      %2433 = vmatprep.subr.bf16.mxu0 0
      %2434 = vmatpush1.bf16.msra.mxu0 0
      %2435 = vmatprep.subr.bf16.mxu0 0
      %2436 = vmatpush1.bf16.msra.mxu0 0
      %2437 = vmatprep.subr.bf16.mxu0 0
      %2438 = vmatpush1.bf16.msra.mxu0 0
      %2439 = vmatprep.subr.bf16.mxu0 0
      %2440 = vmatpush1.bf16.msra.mxu0 0
      %2441 = vmatprep.mubr.bf16.mxu0 0
      %2442 = vmatmul.mubr.bf16.gmra.mrb[0].mxu0 %v2353
      %v2443 = vpop.f32.mrb[0].mxu0
      %v2444 = vadd.f32 %v2335, %v2443
      %v2445 = vpop.f32.mrb[0].mxu0
      %v2446 = vpop.f32.mrb[0].mxu0
      %v2447 = vadd.f32 %v2335, %v2446
      %v2448 = vpop.f32.mrb[0].mxu0
      %2449 = vmatprep.mubr.bf16.mxu0 0
      %2450 = vmatmul.mubr.bf16.gmra.mrb[0].mxu0 %v2354
      %v2451 = vpop.f32.mrb[0].mxu0
      %v2452 = vadd.f32 %v2335, %v2451
      %v2453 = vpop.f32.mrb[0].mxu0
      %v2454 = vpop.f32.mrb[0].mxu0
      %v2455 = vadd.f32 %v2335, %v2454
      %v2456 = vpop.f32.mrb[0].mxu0
      %2457 = vmatprep.mubr.bf16.mxu0 0
      %2458 = vmatmul.mubr.bf16.gmra.mrb[0].mxu0 %v2355
      %v2459 = vpop.f32.mrb[0].mxu0
      %v2460 = vadd.f32 %v2335, %v2459
      %v2461 = vpop.f32.mrb[0].mxu0
      %v2462 = vpop.f32.mrb[0].mxu0
      %v2463 = vadd.f32 %v2335, %v2462
      %v2464 = vpop.f32.mrb[0].mxu0
      %2465 = vmatprep.mubr.bf16.mxu0 0
      %2466 = vmatmul.mubr.bf16.gmra.mrb[0].mxu0 %v2356
      %v2467 = vpop.f32.mrb[0].mxu0
      %v2468 = vadd.f32 %v2335, %v2467
      %v2469 = vpop.f32.mrb[0].mxu0
      %v2470 = vpop.f32.mrb[0].mxu0
      %v2471 = vadd.f32 %v2335, %v2470
      %v2472 = vpop.f32.mrb[0].mxu0
      %2473 = vdwg.mxu0
      %v2474 = vadd.f32 %v2298, %v2444
      %v2475 = vadd.f32 %v2299, %v2447
      %v2476 = vadd.f32 %v2300, %v2452
      %v2477 = vadd.f32 %v2301, %v2455
      %v2478 = vadd.f32 %v2302, %v2460
      %v2479 = vadd.f32 %v2303, %v2463
      %v2480 = vadd.f32 %v2304, %v2468
      %v2481 = vadd.f32 %v2305, %v2471
      %v2482 = vmax.f32 %v2474, 0.0
      %v2483 = vmax.f32 %v2475, 0.0
      %v2484 = vmax.f32 %v2476, 0.0
      %v2485 = vmax.f32 %v2477, 0.0
      %v2486 = vmax.f32 %v2478, 0.0
      %v2487 = vmax.f32 %v2479, 0.0
      %v2488 = vmax.f32 %v2480, 0.0
      %v2489 = vmax.f32 %v2481, 0.0
      %v2490 = vpack.c.bf16 %v2482, %v2482
      %v2491 = vpack.c.bf16 %v2483, %v2483
      %v2492 = vpack.c.bf16 %v2484, %v2484
      %v2493 = vpack.c.bf16 %v2485, %v2485
      %v2494 = vpack.c.bf16 %v2486, %v2486
      %v2495 = vpack.c.bf16 %v2487, %v2487
      %v2496 = vpack.c.bf16 %v2488, %v2488
      %v2497 = vpack.c.bf16 %v2489, %v2489
      %2498 = vst [vmem:[%s309] sm:$0xf] %v2490
      %2499 = vst [vmem:[%s309 + $0x4] sm:$0xf] %v2491
      %2500 = vst [vmem:[%s309 + $0x8] sm:$0xf] %v2492
      %2501 = vst [vmem:[%s309 + $0xc] sm:$0xf] %v2493
      %2502 = vst [vmem:[%s309 + $0x10] sm:$0xf] %v2494
      %2503 = vst [vmem:[%s309 + $0x14] sm:$0xf] %v2495
      %2504 = vst [vmem:[%s309 + $0x18] sm:$0xf] %v2496
      %2505 = vst [vmem:[%s309 + $0x1c] sm:$0xf] %v2497
      %s2506 = smul.u32 8, %s22
      %p2507 = scmp.lt.s32.totalorder %s21, 1
      %s2508 = scalar_select %p2507, %s21, 1
      %p2509 = scmp.lt.s32.totalorder %s2506, 7
      %s2510 = scalar_select %p2509, %s2506, 7
      %s2511 = smul.addr %s2508, 8
      %s2512 = sadd.s32 %s2510, %s2511
      %s2513 = smul.addr %s2512, 4
      %s2514 = scalar_lea.vmem %s6, %s2513
      // Predicated region
      $region45: #{basic_block_forward.3} parent=43 // pred_check
        %p2515 = pneg %p187
      $region46: #{basic_block_forward.3} parent=43 // pred_check_branch
        %2517 = sbr.rel (%p2515) target = $region48
      $region47: #{basic_block_forward.3} parent=43 // pred_region
        %s2518 = smul.u32 8, %s22
      $region48: #{basic_block_forward.3} parent=43 // pred_fallthru
        _
    $region44: #{basic_block_forward.3} parent=5 // pred_fallthru
      _
    %p2519 = scmp.le.s32.totalorder 2, %s12
    // Predicated region
    $region49: #{basic_block_forward.3} parent=5 // pred_check
      %p2520 = pneg %p2519
    $region50: #{basic_block_forward.3} parent=5 // pred_check_branch
      %2522 = sbr.rel (%p2520) target = $region52
    $region51: #{basic_block_forward.3} parent=5 // pred_region
      %s2523 = ssub.s32 %s12, 2
      // Predicated region
      $region53: #{basic_block_forward.3} parent=51 // pred_check
        %p2524 = pneg %p193
      $region54: #{basic_block_forward.3} parent=51 // pred_check_branch
        %2526 = sbr.rel (%p2524) target = $region56
      $region55: #{basic_block_forward.3} parent=51 // pred_region
        %s2527 = smul.u32 8, %s24
        %p2528 = scmp.lt.s32.totalorder %s23, 1
        %s2529 = scalar_select %p2528, %s23, 1
        %p2530 = scmp.lt.s32.totalorder %s2527, 7
        %s2531 = scalar_select %p2530, %s2527, 7
        %s2532 = smul.addr %s2529, 8
        %s2533 = sadd.s32 %s2531, %s2532
        %s2534 = smul.addr %s2533, 4
        %s2535 = scalar_lea.vmem %s6, %s2534
      $region56: #{basic_block_forward.3} parent=51 // pred_fallthru
        _
    $region52: #{basic_block_forward.3} parent=5 // pred_fallthru
      _
  $region6: #{basic_block_forward.3} parent=0 // loop_footer
    %s16 = sadd.s32 1, %s12
  $region7: #{basic_block_forward.3} parent=0 // loop_footer_branch
    %11 = sbr.rel target = $region3
  $region8: #{basic_block_forward.3} parent=0 // loop_exit
    _

</llo_original>
